<compile_context>
chip_gen: v6e
topology: v6e:2x2x1
jax: 0.10.0
libtpu: 0.0.40
codegen_flags: <defaults>
</compile_context>

<pallas_src>
import functools

import jax
import jax.numpy as jnp
from jax.experimental import pallas as pl
from jax.experimental.pallas import tpu as pltpu


def _round_up(x, m):
    return (x + m - 1) // m * m


def _layernorm(v, gamma, beta, eps=1e-5):
    mu = jnp.mean(v, axis=-1, keepdims=True)
    var = jnp.mean(jnp.square(v - mu), axis=-1, keepdims=True)
    return (v - mu) * jax.lax.rsqrt(var + eps) * gamma + beta


# ---------------------------------------------------------------------------
# Fused ViT kernel: patch embed (layer 0) -> n_layers transformer blocks
# (activation resident in VMEM scratch) -> classifier head (last layer).
# ---------------------------------------------------------------------------
def vit_kernel(
    patches_ref, w_patch_ref, base_ref,
    ln1_g_ref, ln1_b_ref, wqkv_ref, bqkv_ref, wo_ref, bo_ref,
    ln2_g_ref, ln2_b_ref, w1_ref, b1_ref, w2_ref, b2_ref,
    head_g_ref, head_b_ref, head_w_ref, head_bias_ref,
    logits_ref,
    x_ref,                      # VMEM scratch (S_pad, D) f32 residual stream
    *, num_heads, seq_len,
):
    layer = pl.program_id(1)
    s_pad, d = x_ref.shape
    dh = d // num_heads
    scale = 1.0 / (dh ** 0.5)

    # ---- layer 0: patch embedding + CLS token + positional embedding -------
    # `patches` has a zero row 0 (CLS slot) and zero alignment-padding rows, so
    # the matmul contributes nothing there; `base` carries cls+pos (row 0),
    # pos + patch-embed bias (rows 1..N) and zeros for padding rows.
    @pl.when(layer == 0)
    def _():
        x_ref[...] = (
            jnp.dot(patches_ref[0], w_patch_ref[...],
                    preferred_element_type=jnp.float32)
            + base_ref[...]
        )

    x = x_ref[...]                                    # (S_pad, D) f32

    # ---- multi-head self-attention (pre-norm), fused QKV matmul ------------
    h = _layernorm(x, ln1_g_ref[0], ln1_b_ref[0])
    qkv = jnp.dot(h.astype(jnp.bfloat16), wqkv_ref[0],
                  preferred_element_type=jnp.float32) + bqkv_ref[0]

    def heads(t):                                     # (S_pad, D) -> (H, S_pad, dh)
        return jnp.swapaxes(t.reshape(s_pad, num_heads, dh), 0, 1)

    q = heads(qkv[:, 0 * d:1 * d]).astype(jnp.bfloat16)
    k = heads(qkv[:, 1 * d:2 * d]).astype(jnp.bfloat16)
    v = heads(qkv[:, 2 * d:3 * d]).astype(jnp.bfloat16)

    scores = jnp.einsum("hqd,hkd->hqk", q, k,
                        preferred_element_type=jnp.float32) * scale
    if seq_len < s_pad:                               # mask padded key positions
        kmask = jax.lax.broadcasted_iota(jnp.int32, (1, 1, s_pad), 2) < seq_len
        scores = jnp.where(kmask, scores, -1e30)
    scores = scores - jnp.max(scores, axis=-1, keepdims=True)
    p = jnp.exp(scores)
    p = p * pl.reciprocal(jnp.sum(p, axis=-1, keepdims=True), approx=True)
    ctx = jnp.einsum("hqk,hkd->hqd", p.astype(jnp.bfloat16), v,
                     preferred_element_type=jnp.float32)
    attn = jnp.swapaxes(ctx, 0, 1).reshape(s_pad, d)
    attn = jnp.dot(attn.astype(jnp.bfloat16), wo_ref[0],
                   preferred_element_type=jnp.float32) + bo_ref[0]
    x = x + attn

    # ---- MLP (pre-norm) with GELU ------------------------------------------
    h2 = _layernorm(x, ln2_g_ref[0], ln2_b_ref[0])
    m = jnp.dot(h2.astype(jnp.bfloat16), w1_ref[0],
                preferred_element_type=jnp.float32) + b1_ref[0]
    # TODO(synk): torch nn.GELU defaults to exact erf; tanh approximation used here.
    m = jax.nn.gelu(m, approximate=True)
    m = jnp.dot(m.astype(jnp.bfloat16), w2_ref[0],
                preferred_element_type=jnp.float32) + b2_ref[0]
    x = x + m
    x_ref[...] = x

    # ---- classification head (LayerNorm + Linear) on CLS token, last layer --
    @pl.when(layer == pl.num_programs(1) - 1)
    def _():
        cls_tok = x[0:1, :]
        hh = _layernorm(cls_tok, head_g_ref[...], head_b_ref[...])
        logits_ref[0] = (
            jnp.dot(hh.astype(jnp.bfloat16), head_w_ref[...],
                    preferred_element_type=jnp.float32)
            + head_bias_ref[...]
        ).astype(logits_ref.dtype)


# ---------------------------------------------------------------------------
# pallas_call wrapper
# ---------------------------------------------------------------------------
def vit_pallas(patches, base, params, *, num_heads, seq_len):
    B, s_pad, pdim = patches.shape
    d = base.shape[1]
    lp = params["layers"]
    hp = params["head"]
    n_layers = lp["wqkv"].shape[0]
    c_pad = hp["w"].shape[1]

    layer_arrays = [lp[k] for k in (
        "ln1_g", "ln1_b", "wqkv", "bqkv", "wo", "bo",
        "ln2_g", "ln2_b", "w1", "b1", "w2", "b2")]
    head_arrays = [hp["g"], hp["b"], hp["w"], hp["bias"]]

    def per_layer_spec(a):      # stacked per-layer params: stream one layer/step
        return pl.BlockSpec((1,) + a.shape[1:],
                            lambda b, l, _nd=a.ndim - 1: (l,) + (0,) * _nd)

    def shared_spec(a):         # small shared params: resident across the grid
        return pl.BlockSpec(a.shape, lambda b, l, _nd=a.ndim: (0,) * _nd)

    in_specs = (
        [pl.BlockSpec((1, s_pad, pdim), lambda b, l: (b, 0, 0)),
         shared_spec(params["w_patch"]),
         shared_spec(base)]
        + [per_layer_spec(a) for a in layer_arrays]
        + [shared_spec(a) for a in head_arrays]
    )

    kernel = functools.partial(vit_kernel, num_heads=num_heads, seq_len=seq_len)

    return pl.pallas_call(
        kernel,
        out_shape=jax.ShapeDtypeStruct((B, 1, c_pad), jnp.float32),
        grid_spec=pltpu.PrefetchScalarGridSpec(
            num_scalar_prefetch=0,
            grid=(B, n_layers),                 # batch outer, layers inner
            in_specs=in_specs,
            out_specs=pl.BlockSpec((1, 1, c_pad), lambda b, l: (b, 0, 0)),
            scratch_shapes=[pltpu.VMEM((s_pad, d), jnp.float32)],
        ),
        compiler_params=pltpu.CompilerParams(
            dimension_semantics=("parallel", "arbitrary"),
            vmem_limit_bytes=32 * 1024 * 1024,
        ),
    )(patches, params["w_patch"], base, *layer_arrays, *head_arrays)


# ---------------------------------------------------------------------------
# Parameter init (deterministic, synthetic; bf16 weights, f32 biases/LN)
# ---------------------------------------------------------------------------
def init_params(key, *, in_ch, img, patch, emb, heads, mlp, n_layers, n_classes):
    assert emb % heads == 0 and emb % 128 == 0 and mlp % 128 == 0
    n_patches = (img // patch) ** 2
    pdim = in_ch * patch * patch
    c_pad = _round_up(n_classes, 128)
    ks = iter(jax.random.split(key, 8))

    def w(shape):
        return 0.02 * jax.random.normal(next(ks), shape, dtype=jnp.float32)

    return {
        "patch": patch,
        "heads": heads,
        "num_classes": n_classes,
        "w_patch": w((pdim, emb)).astype(jnp.bfloat16),
        "b_patch": jnp.zeros((1, emb), jnp.float32),
        "cls": w((1, emb)),
        "pos": w((n_patches + 1, emb)),
        "layers": {
            "ln1_g": jnp.ones((n_layers, 1, emb), jnp.float32),
            "ln1_b": jnp.zeros((n_layers, 1, emb), jnp.float32),
            "wqkv": w((n_layers, emb, 3 * emb)).astype(jnp.bfloat16),
            "bqkv": jnp.zeros((n_layers, 1, 3 * emb), jnp.float32),
            "wo": w((n_layers, emb, emb)).astype(jnp.bfloat16),
            "bo": jnp.zeros((n_layers, 1, emb), jnp.float32),
            "ln2_g": jnp.ones((n_layers, 1, emb), jnp.float32),
            "ln2_b": jnp.zeros((n_layers, 1, emb), jnp.float32),
            "w1": w((n_layers, emb, mlp)).astype(jnp.bfloat16),
            "b1": jnp.zeros((n_layers, 1, mlp), jnp.float32),
            "w2": w((n_layers, mlp, emb)).astype(jnp.bfloat16),
            "b2": jnp.zeros((n_layers, 1, emb), jnp.float32),
        },
        "head": {
            "g": jnp.ones((1, emb), jnp.float32),
            "b": jnp.zeros((1, emb), jnp.float32),
            # classifier weight/bias zero-padded to 128 lanes (lane-dense output)
            "w": jnp.zeros((emb, c_pad), jnp.float32)
                 .at[:, :n_classes].set(w((emb, n_classes))).astype(jnp.bfloat16),
            "bias": jnp.zeros((1, c_pad), jnp.float32),
        },
    }


# ---------------------------------------------------------------------------
# Forward pass (layout plumbing in plain JAX, everything else in one kernel)
# ---------------------------------------------------------------------------
def vit_forward(params, x):
    B, C, H, W = x.shape
    p = params["patch"]
    nh, nw = H // p, W // p
    n = nh * nw
    d = params["pos"].shape[1]
    s = n + 1
    s_pad = _round_up(s, 8)

    # Conv2d(kernel=stride=patch) expressed as patch extraction + matmul.
    patches = (
        x.reshape(B, C, nh, p, nw, p)
        .transpose(0, 2, 4, 1, 3, 5)
        .reshape(B, n, C * p * p)
    )
    # Row 0 reserved for the CLS token, trailing rows are alignment padding
    # (masked as attention keys inside the kernel).
    patches = jnp.pad(patches, ((0, 0), (1, s_pad - s), (0, 0))).astype(jnp.bfloat16)

    # Token "base": row 0 = cls + pos[0]; rows 1..N = pos + patch-embed bias;
    # padding rows = 0.  Added to the patch-embed matmul inside the kernel.
    pos = params["pos"]
    base = jnp.concatenate(
        [params["cls"] + pos[0:1],
         pos[1:] + params["b_patch"],
         jnp.zeros((s_pad - s, d), jnp.float32)],
        axis=0,
    )

    logits = vit_pallas(patches, base, params,
                        num_heads=params["heads"], seq_len=s)
    # dense head was applied to the CLS token only -> equivalent to x[:, 0].
    return logits[:, 0, :params["num_classes"]]


# ---------------------------------------------------------------------------
if __name__ == "__main__":
    # Small shapes, aligned to TPU tiles (D multiple of 128, seq padded to 8).
    B, C, IMG, PATCH = 2, 3, 16, 4
    EMB, HEADS, MLP, LAYERS, CLASSES = 128, 4, 256, 2, 10

    key = jax.random.PRNGKey(0)
    k_param, k_x = jax.random.split(key)
    params = init_params(
        k_param, in_ch=C, img=IMG, patch=PATCH, emb=EMB, heads=HEADS,
        mlp=MLP, n_layers=LAYERS, n_classes=CLASSES,
    )
    x = jax.random.normal(k_x, (B, C, IMG, IMG), dtype=jnp.float32)

    logits = vit_forward(params, x)
    logits = jax.block_until_ready(logits)
    assert logits.shape == (B, CLASSES)
    print("KERNEL_OK")
</pallas_src>

<mosaic_0001>
module attributes {stable_mosaic.version = 11 : i64} {
  func.func @vit_kernel(%arg0: i32, %arg1: i32, %arg2: memref<1x24x48xbf16, #tpu.memory_space<vmem>>, %arg3: memref<48x128xbf16, #tpu.memory_space<vmem>>, %arg4: memref<24x128xf32, #tpu.memory_space<vmem>>, %arg5: memref<1x1x128xf32, #tpu.memory_space<vmem>>, %arg6: memref<1x1x128xf32, #tpu.memory_space<vmem>>, %arg7: memref<1x128x384xbf16, #tpu.memory_space<vmem>>, %arg8: memref<1x1x384xf32, #tpu.memory_space<vmem>>, %arg9: memref<1x128x128xbf16, #tpu.memory_space<vmem>>, %arg10: memref<1x1x128xf32, #tpu.memory_space<vmem>>, %arg11: memref<1x1x128xf32, #tpu.memory_space<vmem>>, %arg12: memref<1x1x128xf32, #tpu.memory_space<vmem>>, %arg13: memref<1x128x256xbf16, #tpu.memory_space<vmem>>, %arg14: memref<1x1x256xf32, #tpu.memory_space<vmem>>, %arg15: memref<1x256x128xbf16, #tpu.memory_space<vmem>>, %arg16: memref<1x1x128xf32, #tpu.memory_space<vmem>>, %arg17: memref<1x128xf32, #tpu.memory_space<vmem>>, %arg18: memref<1x128xf32, #tpu.memory_space<vmem>>, %arg19: memref<128x128xbf16, #tpu.memory_space<vmem>>, %arg20: memref<1x128xf32, #tpu.memory_space<vmem>>, %arg21: memref<1x1x128xf32, #tpu.memory_space<vmem>>, %arg22: memref<24x128xf32, #tpu.memory_space<vmem>>) attributes {dimension_semantics = [#tpu.dimension_semantics<parallel>, #tpu.dimension_semantics<arbitrary>], iteration_bounds = array<i64: 2, 2>, scalar_prefetch = 0 : i64, scratch_operands = 1 : i64, tpu.core_type = #tpu.core_type<tc>, window_params = [{transform_indices = @transform_0, window_bounds = array<i64: 1, 24, 48>}, {pipeline_mode = #tpu.pipeline_mode<synchronous>, transform_indices = @transform_1, window_bounds = array<i64: 48, 128>}, {pipeline_mode = #tpu.pipeline_mode<synchronous>, transform_indices = @transform_2, window_bounds = array<i64: 24, 128>}, {transform_indices = @transform_3, window_bounds = array<i64: 1, 1, 128>}, {transform_indices = @transform_4, window_bounds = array<i64: 1, 1, 128>}, {transform_indices = @transform_5, window_bounds = array<i64: 1, 128, 384>}, {transform_indices = @transform_6, window_bounds = array<i64: 1, 1, 384>}, {transform_indices = @transform_7, window_bounds = array<i64: 1, 128, 128>}, {transform_indices = @transform_8, window_bounds = array<i64: 1, 1, 128>}, {transform_indices = @transform_9, window_bounds = array<i64: 1, 1, 128>}, {transform_indices = @transform_10, window_bounds = array<i64: 1, 1, 128>}, {transform_indices = @transform_11, window_bounds = array<i64: 1, 128, 256>}, {transform_indices = @transform_12, window_bounds = array<i64: 1, 1, 256>}, {transform_indices = @transform_13, window_bounds = array<i64: 1, 256, 128>}, {transform_indices = @transform_14, window_bounds = array<i64: 1, 1, 128>}, {pipeline_mode = #tpu.pipeline_mode<synchronous>, transform_indices = @transform_15, window_bounds = array<i64: 1, 128>}, {pipeline_mode = #tpu.pipeline_mode<synchronous>, transform_indices = @transform_16, window_bounds = array<i64: 1, 128>}, {pipeline_mode = #tpu.pipeline_mode<synchronous>, transform_indices = @transform_17, window_bounds = array<i64: 128, 128>}, {pipeline_mode = #tpu.pipeline_mode<synchronous>, transform_indices = @transform_18, window_bounds = array<i64: 1, 128>}, {transform_indices = @transform_19, window_bounds = array<i64: 1, 1, 128>}]} {
    %c0_i32 = arith.constant 0 : i32
    %0 = arith.cmpi eq, %arg1, %c0_i32 : i32
    %1 = arith.extui %0 : i1 to i32
    %c0_i32_0 = arith.constant 0 : i32
    %2 = arith.cmpi ne, %1, %c0_i32_0 : i32
    scf.if %2 {
      %c0_64 = arith.constant 0 : index
      %c0_65 = arith.constant 0 : index
      %c0_66 = arith.constant 0 : index
      %143 = vector.load %arg2[%c0_64, %c0_65, %c0_66] : memref<1x24x48xbf16, #tpu.memory_space<vmem>>, vector<1x24x48xbf16>
      %144 = vector.shape_cast %143 : vector<1x24x48xbf16> to vector<24x48xbf16>
      %c0_67 = arith.constant 0 : index
      %c0_68 = arith.constant 0 : index
      %145 = vector.load %arg3[%c0_67, %c0_68] : memref<48x128xbf16, #tpu.memory_space<vmem>>, vector<48x128xbf16>
      %cst_69 = arith.constant dense<0.000000e+00> : vector<24x128xf32>
      %146 = tpu.matmul %144, %145, %cst_69 {dimension_numbers = #tpu.dot_dimension_numbers<[1], [0], [0], [1], [0, 0, 1, 1], [], []>} : vector<24x48xbf16>, vector<48x128xbf16>, vector<24x128xf32> -> vector<24x128xf32>
      %c0_70 = arith.constant 0 : index
      %c0_71 = arith.constant 0 : index
      %147 = vector.load %arg4[%c0_70, %c0_71] : memref<24x128xf32, #tpu.memory_space<vmem>>, vector<24x128xf32>
      %148 = arith.addf %146, %147 : vector<24x128xf32>
      %c0_72 = arith.constant 0 : index
      %c0_73 = arith.constant 0 : index
      %149 = vector.load %arg22[%c0_72, %c0_73] : memref<24x128xf32, #tpu.memory_space<vmem>>, vector<24x128xf32>
      tpu.vector_store %arg22[%c0_72, %c0_73], %148 {strides = array<i32>} : memref<24x128xf32, #tpu.memory_space<vmem>>, vector<24x128xf32>,
    } else {
    }
    %c0 = arith.constant 0 : index
    %c0_1 = arith.constant 0 : index
    %3 = vector.load %arg22[%c0, %c0_1] : memref<24x128xf32, #tpu.memory_space<vmem>>, vector<24x128xf32>
    %c0_2 = arith.constant 0 : index
    %c0_3 = arith.constant 0 : index
    %c0_4 = arith.constant 0 : index
    %4 = vector.load %arg5[%c0_2, %c0_3, %c0_4] : memref<1x1x128xf32, #tpu.memory_space<vmem>>, vector<1x1x128xf32>
    %5 = vector.shape_cast %4 : vector<1x1x128xf32> to vector<1x128xf32>
    %c0_5 = arith.constant 0 : index
    %c0_6 = arith.constant 0 : index
    %c0_7 = arith.constant 0 : index
    %6 = vector.load %arg6[%c0_5, %c0_6, %c0_7] : memref<1x1x128xf32, #tpu.memory_space<vmem>>, vector<1x1x128xf32>
    %7 = vector.shape_cast %6 : vector<1x1x128xf32> to vector<1x128xf32>
    %cst = arith.constant dense<0.000000e+00> : vector<24xf32>
    %8 = vector.multi_reduction <add>, %3, %cst [1] : vector<24x128xf32> to vector<24xf32>
    %9 = vector.shape_cast %8 : vector<24xf32> to vector<24x1xf32>
    %cst_8 = arith.constant 1.280000e+02 : f32
    %10 = vector.broadcast %cst_8 : f32 to vector<24x1xf32>
    %11 = arith.divf %9, %10 : vector<24x1xf32>
    %12 = vector.broadcast %11 : vector<24x1xf32> to vector<24x128xf32>
    %13 = arith.subf %3, %12 : vector<24x128xf32>
    %14 = arith.mulf %13, %13 : vector<24x128xf32>
    %cst_9 = arith.constant dense<0.000000e+00> : vector<24xf32>
    %15 = vector.multi_reduction <add>, %14, %cst_9 [1] : vector<24x128xf32> to vector<24xf32>
    %16 = vector.shape_cast %15 : vector<24xf32> to vector<24x1xf32>
    %cst_10 = arith.constant 1.280000e+02 : f32
    %17 = vector.broadcast %cst_10 : f32 to vector<24x1xf32>
    %18 = arith.divf %16, %17 : vector<24x1xf32>
    %19 = vector.broadcast %11 : vector<24x1xf32> to vector<24x128xf32>
    %20 = arith.subf %3, %19 : vector<24x128xf32>
    %cst_11 = arith.constant 9.99999974E-6 : f32
    %21 = vector.broadcast %cst_11 : f32 to vector<24x1xf32>
    %22 = arith.addf %18, %21 : vector<24x1xf32>
    %23 = math.rsqrt %22 : vector<24x1xf32>
    %24 = vector.broadcast %23 : vector<24x1xf32> to vector<24x128xf32>
    %25 = arith.mulf %20, %24 : vector<24x128xf32>
    %26 = vector.broadcast %5 : vector<1x128xf32> to vector<24x128xf32>
    %27 = arith.mulf %25, %26 : vector<24x128xf32>
    %28 = vector.broadcast %7 : vector<1x128xf32> to vector<24x128xf32>
    %29 = arith.addf %27, %28 : vector<24x128xf32>
    %30 = arith.truncf %29 : vector<24x128xf32> to vector<24x128xbf16>
    %c0_12 = arith.constant 0 : index
    %c0_13 = arith.constant 0 : index
    %c0_14 = arith.constant 0 : index
    %31 = vector.load %arg7[%c0_12, %c0_13, %c0_14] : memref<1x128x384xbf16, #tpu.memory_space<vmem>>, vector<1x128x384xbf16>
    %32 = vector.shape_cast %31 : vector<1x128x384xbf16> to vector<128x384xbf16>
    %cst_15 = arith.constant dense<0.000000e+00> : vector<24x384xf32>
    %33 = tpu.matmul %30, %32, %cst_15 {dimension_numbers = #tpu.dot_dimension_numbers<[1], [0], [0], [1], [0, 0, 1, 1], [], []>} : vector<24x128xbf16>, vector<128x384xbf16>, vector<24x384xf32> -> vector<24x384xf32>
    %c0_16 = arith.constant 0 : index
    %c0_17 = arith.constant 0 : index
    %c0_18 = arith.constant 0 : index
    %34 = vector.load %arg8[%c0_16, %c0_17, %c0_18] : memref<1x1x384xf32, #tpu.memory_space<vmem>>, vector<1x1x384xf32>
    %35 = vector.shape_cast %34 : vector<1x1x384xf32> to vector<1x384xf32>
    %36 = vector.broadcast %35 : vector<1x384xf32> to vector<24x384xf32>
    %37 = arith.addf %33, %36 : vector<24x384xf32>
    %38 = vector.extract_strided_slice %37 {offsets = [0, 0], sizes = [24, 128], strides = [1, 1]} : vector<24x384xf32> to vector<24x128xf32>
    %39 = vector.shape_cast %38 : vector<24x128xf32> to vector<24x4x32xf32>
    %40 = tpu.transpose %39, [1, 0, 2] : vector<24x4x32xf32> -> vector<4x24x32xf32>
    %41 = arith.truncf %40 : vector<4x24x32xf32> to vector<4x24x32xbf16>
    %42 = vector.extract_strided_slice %37 {offsets = [0, 128], sizes = [24, 128], strides = [1, 1]} : vector<24x384xf32> to vector<24x128xf32>
    %43 = vector.shape_cast %42 : vector<24x128xf32> to vector<24x4x32xf32>
    %44 = tpu.transpose %43, [1, 0, 2] : vector<24x4x32xf32> -> vector<4x24x32xf32>
    %45 = arith.truncf %44 : vector<4x24x32xf32> to vector<4x24x32xbf16>
    %46 = vector.extract_strided_slice %37 {offsets = [0, 256], sizes = [24, 128], strides = [1, 1]} : vector<24x384xf32> to vector<24x128xf32>
    %47 = vector.shape_cast %46 : vector<24x128xf32> to vector<24x4x32xf32>
    %48 = tpu.transpose %47, [1, 0, 2] : vector<24x4x32xf32> -> vector<4x24x32xf32>
    %49 = arith.truncf %48 : vector<4x24x32xf32> to vector<4x24x32xbf16>
    "tpu.trace_start"() <{level = 10 : i32, message = "hqd,hkd->hqk"}> : () -> ()
    %cst_19 = arith.constant dense<0.000000e+00> : vector<4x24x24xf32>
    %50 = tpu.matmul %41, %45, %cst_19 {dimension_numbers = #tpu.dot_dimension_numbers<[2], [2], [1], [1], [0, 0, 0, 1, 1, 1], [0], [0]>} : vector<4x24x32xbf16>, vector<4x24x32xbf16>, vector<4x24x24xf32> -> vector<4x24x24xf32>
    "tpu.trace_stop"() : () -> ()
    %cst_20 = arith.constant 0.176776692 : f32
    %51 = vector.broadcast %cst_20 : f32 to vector<4x24x24xf32>
    %52 = arith.mulf %50, %51 : vector<4x24x24xf32>
    %53 = tpu.iota {dimensions = array<i32: 2>} : vector<1x1x24xi32>
    %c17_i32 = arith.constant 17 : i32
    %54 = vector.broadcast %c17_i32 : i32 to vector<1x1x24xi32>
    %55 = arith.cmpi slt, %53, %54 : vector<1x1x24xi32>
    %cst_21 = arith.constant -1.000000e+30 : f32
    %56 = vector.shape_cast %55 : vector<1x1x24xi1> to vector<1x1x24xi1>
    %57 = vector.broadcast %56 : vector<1x1x24xi1> to vector<4x24x24xi1>
    %58 = vector.broadcast %cst_21 : f32 to vector<4x24x24xf32>
    %59 = arith.select %57, %52, %58 : vector<4x24x24xi1>, vector<4x24x24xf32>
    %cst_22 = arith.constant dense<0xFF800000> : vector<4x24xf32>
    %60 = vector.multi_reduction <maximumf>, %59, %cst_22 [2] : vector<4x24x24xf32> to vector<4x24xf32>
    %61 = vector.shape_cast %60 : vector<4x24xf32> to vector<4x24x1xf32>
    %62 = vector.broadcast %61 : vector<4x24x1xf32> to vector<4x24x24xf32>
    %63 = arith.subf %59, %62 : vector<4x24x24xf32>
    %64 = math.exp %63 : vector<4x24x24xf32>
    %cst_23 = arith.constant dense<0.000000e+00> : vector<4x24xf32>
    %65 = vector.multi_reduction <add>, %64, %cst_23 [2] : vector<4x24x24xf32> to vector<4x24xf32>
    %66 = vector.shape_cast %65 : vector<4x24xf32> to vector<4x24x1xf32>
    %67 = tpu.reciprocal %66 {approx = true} : vector<4x24x1xf32> -> vector<4x24x1xf32>
    %68 = vector.broadcast %67 : vector<4x24x1xf32> to vector<4x24x24xf32>
    %69 = arith.mulf %64, %68 : vector<4x24x24xf32>
    %70 = arith.truncf %69 : vector<4x24x24xf32> to vector<4x24x24xbf16>
    "tpu.trace_start"() <{level = 10 : i32, message = "hqk,hkd->hqd"}> : () -> ()
    %cst_24 = arith.constant dense<0.000000e+00> : vector<4x24x32xf32>
    %71 = tpu.matmul %70, %49, %cst_24 {dimension_numbers = #tpu.dot_dimension_numbers<[2], [1], [1], [2], [0, 0, 0, 1, 1, 2], [0], [0]>} : vector<4x24x24xbf16>, vector<4x24x32xbf16>, vector<4x24x32xf32> -> vector<4x24x32xf32>
    "tpu.trace_stop"() : () -> ()
    %72 = tpu.transpose %71, [1, 0, 2] : vector<4x24x32xf32> -> vector<24x4x32xf32>
    %73 = vector.shape_cast %72 : vector<24x4x32xf32> to vector<24x128xf32>
    %74 = arith.truncf %73 : vector<24x128xf32> to vector<24x128xbf16>
    %c0_25 = arith.constant 0 : index
    %c0_26 = arith.constant 0 : index
    %c0_27 = arith.constant 0 : index
    %75 = vector.load %arg9[%c0_25, %c0_26, %c0_27] : memref<1x128x128xbf16, #tpu.memory_space<vmem>>, vector<1x128x128xbf16>
    %76 = vector.shape_cast %75 : vector<1x128x128xbf16> to vector<128x128xbf16>
    %cst_28 = arith.constant dense<0.000000e+00> : vector<24x128xf32>
    %77 = tpu.matmul %74, %76, %cst_28 {dimension_numbers = #tpu.dot_dimension_numbers<[1], [0], [0], [1], [0, 0, 1, 1], [], []>} : vector<24x128xbf16>, vector<128x128xbf16>, vector<24x128xf32> -> vector<24x128xf32>
    %c0_29 = arith.constant 0 : index
    %c0_30 = arith.constant 0 : index
    %c0_31 = arith.constant 0 : index
    %78 = vector.load %arg10[%c0_29, %c0_30, %c0_31] : memref<1x1x128xf32, #tpu.memory_space<vmem>>, vector<1x1x128xf32>
    %79 = vector.shape_cast %78 : vector<1x1x128xf32> to vector<1x128xf32>
    %80 = vector.broadcast %79 : vector<1x128xf32> to vector<24x128xf32>
    %81 = arith.addf %77, %80 : vector<24x128xf32>
    %82 = arith.addf %3, %81 : vector<24x128xf32>
    %c0_32 = arith.constant 0 : index
    %c0_33 = arith.constant 0 : index
    %c0_34 = arith.constant 0 : index
    %83 = vector.load %arg11[%c0_32, %c0_33, %c0_34] : memref<1x1x128xf32, #tpu.memory_space<vmem>>, vector<1x1x128xf32>
    %84 = vector.shape_cast %83 : vector<1x1x128xf32> to vector<1x128xf32>
    %c0_35 = arith.constant 0 : index
    %c0_36 = arith.constant 0 : index
    %c0_37 = arith.constant 0 : index
    %85 = vector.load %arg12[%c0_35, %c0_36, %c0_37] : memref<1x1x128xf32, #tpu.memory_space<vmem>>, vector<1x1x128xf32>
    %86 = vector.shape_cast %85 : vector<1x1x128xf32> to vector<1x128xf32>
    %cst_38 = arith.constant dense<0.000000e+00> : vector<24xf32>
    %87 = vector.multi_reduction <add>, %82, %cst_38 [1] : vector<24x128xf32> to vector<24xf32>
    %88 = vector.shape_cast %87 : vector<24xf32> to vector<24x1xf32>
    %cst_39 = arith.constant 1.280000e+02 : f32
    %89 = vector.broadcast %cst_39 : f32 to vector<24x1xf32>
    %90 = arith.divf %88, %89 : vector<24x1xf32>
    %91 = vector.broadcast %90 : vector<24x1xf32> to vector<24x128xf32>
    %92 = arith.subf %82, %91 : vector<24x128xf32>
    %93 = arith.mulf %92, %92 : vector<24x128xf32>
    %cst_40 = arith.constant dense<0.000000e+00> : vector<24xf32>
    %94 = vector.multi_reduction <add>, %93, %cst_40 [1] : vector<24x128xf32> to vector<24xf32>
    %95 = vector.shape_cast %94 : vector<24xf32> to vector<24x1xf32>
    %cst_41 = arith.constant 1.280000e+02 : f32
    %96 = vector.broadcast %cst_41 : f32 to vector<24x1xf32>
    %97 = arith.divf %95, %96 : vector<24x1xf32>
    %98 = vector.broadcast %90 : vector<24x1xf32> to vector<24x128xf32>
    %99 = arith.subf %82, %98 : vector<24x128xf32>
    %cst_42 = arith.constant 9.99999974E-6 : f32
    %100 = vector.broadcast %cst_42 : f32 to vector<24x1xf32>
    %101 = arith.addf %97, %100 : vector<24x1xf32>
    %102 = math.rsqrt %101 : vector<24x1xf32>
    %103 = vector.broadcast %102 : vector<24x1xf32> to vector<24x128xf32>
    %104 = arith.mulf %99, %103 : vector<24x128xf32>
    %105 = vector.broadcast %84 : vector<1x128xf32> to vector<24x128xf32>
    %106 = arith.mulf %104, %105 : vector<24x128xf32>
    %107 = vector.broadcast %86 : vector<1x128xf32> to vector<24x128xf32>
    %108 = arith.addf %106, %107 : vector<24x128xf32>
    %109 = arith.truncf %108 : vector<24x128xf32> to vector<24x128xbf16>
    %c0_43 = arith.constant 0 : index
    %c0_44 = arith.constant 0 : index
    %c0_45 = arith.constant 0 : index
    %110 = vector.load %arg13[%c0_43, %c0_44, %c0_45] : memref<1x128x256xbf16, #tpu.memory_space<vmem>>, vector<1x128x256xbf16>
    %111 = vector.shape_cast %110 : vector<1x128x256xbf16> to vector<128x256xbf16>
    %cst_46 = arith.constant dense<0.000000e+00> : vector<24x256xf32>
    %112 = tpu.matmul %109, %111, %cst_46 {dimension_numbers = #tpu.dot_dimension_numbers<[1], [0], [0], [1], [0, 0, 1, 1], [], []>} : vector<24x128xbf16>, vector<128x256xbf16>, vector<24x256xf32> -> vector<24x256xf32>
    %c0_47 = arith.constant 0 : index
    %c0_48 = arith.constant 0 : index
    %c0_49 = arith.constant 0 : index
    %113 = vector.load %arg14[%c0_47, %c0_48, %c0_49] : memref<1x1x256xf32, #tpu.memory_space<vmem>>, vector<1x1x256xf32>
    %114 = vector.shape_cast %113 : vector<1x1x256xf32> to vector<1x256xf32>
    %115 = vector.broadcast %114 : vector<1x256xf32> to vector<24x256xf32>
    %116 = arith.addf %112, %115 : vector<24x256xf32>
    %117 = arith.mulf %116, %116 : vector<24x256xf32>
    %118 = arith.mulf %116, %117 : vector<24x256xf32>
    %cst_50 = arith.constant 4.471500e-02 : f32
    %119 = vector.broadcast %cst_50 : f32 to vector<24x256xf32>
    %120 = arith.mulf %119, %118 : vector<24x256xf32>
    %121 = arith.addf %116, %120 : vector<24x256xf32>
    %cst_51 = arith.constant 0.797884583 : f32
    %122 = vector.broadcast %cst_51 : f32 to vector<24x256xf32>
    %123 = arith.mulf %122, %121 : vector<24x256xf32>
    %124 = math.tanh %123 : vector<24x256xf32>
    %cst_52 = arith.constant 1.000000e+00 : f32
    %125 = vector.broadcast %cst_52 : f32 to vector<24x256xf32>
    %126 = arith.addf %125, %124 : vector<24x256xf32>
    %cst_53 = arith.constant 5.000000e-01 : f32
    %127 = vector.broadcast %cst_53 : f32 to vector<24x256xf32>
    %128 = arith.mulf %127, %126 : vector<24x256xf32>
    %129 = arith.mulf %116, %128 : vector<24x256xf32>
    %130 = arith.truncf %129 : vector<24x256xf32> to vector<24x256xbf16>
    %c0_54 = arith.constant 0 : index
    %c0_55 = arith.constant 0 : index
    %c0_56 = arith.constant 0 : index
    %131 = vector.load %arg15[%c0_54, %c0_55, %c0_56] : memref<1x256x128xbf16, #tpu.memory_space<vmem>>, vector<1x256x128xbf16>
    %132 = vector.shape_cast %131 : vector<1x256x128xbf16> to vector<256x128xbf16>
    %cst_57 = arith.constant dense<0.000000e+00> : vector<24x128xf32>
    %133 = tpu.matmul %130, %132, %cst_57 {dimension_numbers = #tpu.dot_dimension_numbers<[1], [0], [0], [1], [0, 0, 1, 1], [], []>} : vector<24x256xbf16>, vector<256x128xbf16>, vector<24x128xf32> -> vector<24x128xf32>
    %c0_58 = arith.constant 0 : index
    %c0_59 = arith.constant 0 : index
    %c0_60 = arith.constant 0 : index
    %134 = vector.load %arg16[%c0_58, %c0_59, %c0_60] : memref<1x1x128xf32, #tpu.memory_space<vmem>>, vector<1x1x128xf32>
    %135 = vector.shape_cast %134 : vector<1x1x128xf32> to vector<1x128xf32>
    %136 = vector.broadcast %135 : vector<1x128xf32> to vector<24x128xf32>
    %137 = arith.addf %133, %136 : vector<24x128xf32>
    %138 = arith.addf %82, %137 : vector<24x128xf32>
    %c0_61 = arith.constant 0 : index
    %c0_62 = arith.constant 0 : index
    %139 = vector.load %arg22[%c0_61, %c0_62] : memref<24x128xf32, #tpu.memory_space<vmem>>, vector<24x128xf32>
    tpu.vector_store %arg22[%c0_61, %c0_62], %138 {strides = array<i32>} : memref<24x128xf32, #tpu.memory_space<vmem>>, vector<24x128xf32>,
    %c1_i32 = arith.constant 1 : i32
    %140 = arith.cmpi eq, %arg1, %c1_i32 : i32
    %141 = arith.extui %140 : i1 to i32
    %c0_i32_63 = arith.constant 0 : i32
    %142 = arith.cmpi ne, %141, %c0_i32_63 : i32
    scf.if %142 {
      %143 = vector.extract_strided_slice %138 {offsets = [0, 0], sizes = [1, 128], strides = [1, 1]} : vector<24x128xf32> to vector<1x128xf32>
      %c0_64 = arith.constant 0 : index
      %c0_65 = arith.constant 0 : index
      %144 = vector.load %arg17[%c0_64, %c0_65] : memref<1x128xf32, #tpu.memory_space<vmem>>, vector<1x128xf32>
      %c0_66 = arith.constant 0 : index
      %c0_67 = arith.constant 0 : index
      %145 = vector.load %arg18[%c0_66, %c0_67] : memref<1x128xf32, #tpu.memory_space<vmem>>, vector<1x128xf32>
      %cst_68 = arith.constant dense<0.000000e+00> : vector<1xf32>
      %146 = vector.multi_reduction <add>, %143, %cst_68 [1] : vector<1x128xf32> to vector<1xf32>
      %147 = vector.shape_cast %146 : vector<1xf32> to vector<1x1xf32>
      %cst_69 = arith.constant 1.280000e+02 : f32
      %148 = vector.broadcast %cst_69 : f32 to vector<1x1xf32>
      %149 = arith.divf %147, %148 : vector<1x1xf32>
      %150 = vector.broadcast %149 : vector<1x1xf32> to vector<1x128xf32>
      %151 = arith.subf %143, %150 : vector<1x128xf32>
      %152 = arith.mulf %151, %151 : vector<1x128xf32>
      %cst_70 = arith.constant dense<0.000000e+00> : vector<1xf32>
      %153 = vector.multi_reduction <add>, %152, %cst_70 [1] : vector<1x128xf32> to vector<1xf32>
      %154 = vector.shape_cast %153 : vector<1xf32> to vector<1x1xf32>
      %cst_71 = arith.constant 1.280000e+02 : f32
      %155 = vector.broadcast %cst_71 : f32 to vector<1x1xf32>
      %156 = arith.divf %154, %155 : vector<1x1xf32>
      %157 = vector.broadcast %149 : vector<1x1xf32> to vector<1x128xf32>
      %158 = arith.subf %143, %157 : vector<1x128xf32>
      %cst_72 = arith.constant 9.99999974E-6 : f32
      %159 = vector.broadcast %cst_72 : f32 to vector<1x1xf32>
      %160 = arith.addf %156, %159 : vector<1x1xf32>
      %161 = math.rsqrt %160 : vector<1x1xf32>
      %162 = vector.broadcast %161 : vector<1x1xf32> to vector<1x128xf32>
      %163 = arith.mulf %158, %162 : vector<1x128xf32>
      %164 = arith.mulf %163, %144 : vector<1x128xf32>
      %165 = arith.addf %164, %145 : vector<1x128xf32>
      %166 = arith.truncf %165 : vector<1x128xf32> to vector<1x128xbf16>
      %c0_73 = arith.constant 0 : index
      %c0_74 = arith.constant 0 : index
      %167 = vector.load %arg19[%c0_73, %c0_74] : memref<128x128xbf16, #tpu.memory_space<vmem>>, vector<128x128xbf16>
      %cst_75 = arith.constant dense<0.000000e+00> : vector<1x128xf32>
      %168 = tpu.matmul %166, %167, %cst_75 {dimension_numbers = #tpu.dot_dimension_numbers<[1], [0], [0], [1], [0, 0, 1, 1], [], []>} : vector<1x128xbf16>, vector<128x128xbf16>, vector<1x128xf32> -> vector<1x128xf32>
      %c0_76 = arith.constant 0 : index
      %c0_77 = arith.constant 0 : index
      %169 = vector.load %arg20[%c0_76, %c0_77] : memref<1x128xf32, #tpu.memory_space<vmem>>, vector<1x128xf32>
      %170 = arith.addf %168, %169 : vector<1x128xf32>
      %c0_78 = arith.constant 0 : index
      %c0_79 = arith.constant 0 : index
      %c0_80 = arith.constant 0 : index
      %171 = vector.load %arg21[%c0_78, %c0_79, %c0_80] : memref<1x1x128xf32, #tpu.memory_space<vmem>>, vector<1x1x128xf32>
      %172 = vector.shape_cast %171 : vector<1x1x128xf32> to vector<1x128xf32>
      %173 = vector.shape_cast %170 : vector<1x128xf32> to vector<1x1x128xf32>
      tpu.vector_store %arg21[%c0_78, %c0_79, %c0_80], %173 {strides = array<i32>} : memref<1x1x128xf32, #tpu.memory_space<vmem>>, vector<1x1x128xf32>,
    } else {
    }
    return
  }
  func.func @transform_0(%arg0: i32, %arg1: i32) -> (i32, i32, i32) {
    %c0_i32 = arith.constant 0 : i32
    %c0_i32_0 = arith.constant 0 : i32
    %c0_i32_1 = arith.constant 0 : i32
    return %arg0, %c0_i32, %c0_i32_0 : i32, i32, i32
  }
  func.func @transform_1(%arg0: i32, %arg1: i32) -> (i32, i32) {
    %c0_i32 = arith.constant 0 : i32
    %c0_i32_0 = arith.constant 0 : i32
    %c0_i32_1 = arith.constant 0 : i32
    return %c0_i32, %c0_i32_0 : i32, i32
  }
  func.func @transform_2(%arg0: i32, %arg1: i32) -> (i32, i32) {
    %c0_i32 = arith.constant 0 : i32
    %c0_i32_0 = arith.constant 0 : i32
    %c0_i32_1 = arith.constant 0 : i32
    return %c0_i32, %c0_i32_0 : i32, i32
  }
  func.func @transform_3(%arg0: i32, %arg1: i32) -> (i32, i32, i32) {
    %c0_i32 = arith.constant 0 : i32
    %c0_i32_0 = arith.constant 0 : i32
    %c0_i32_1 = arith.constant 0 : i32
    return %arg1, %c0_i32, %c0_i32_0 : i32, i32, i32
  }
  func.func @transform_4(%arg0: i32, %arg1: i32) -> (i32, i32, i32) {
    %c0_i32 = arith.constant 0 : i32
    %c0_i32_0 = arith.constant 0 : i32
    %c0_i32_1 = arith.constant 0 : i32
    return %arg1, %c0_i32, %c0_i32_0 : i32, i32, i32
  }
  func.func @transform_5(%arg0: i32, %arg1: i32) -> (i32, i32, i32) {
    %c0_i32 = arith.constant 0 : i32
    %c0_i32_0 = arith.constant 0 : i32
    %c0_i32_1 = arith.constant 0 : i32
    return %arg1, %c0_i32, %c0_i32_0 : i32, i32, i32
  }
  func.func @transform_6(%arg0: i32, %arg1: i32) -> (i32, i32, i32) {
    %c0_i32 = arith.constant 0 : i32
    %c0_i32_0 = arith.constant 0 : i32
    %c0_i32_1 = arith.constant 0 : i32
    return %arg1, %c0_i32, %c0_i32_0 : i32, i32, i32
  }
  func.func @transform_7(%arg0: i32, %arg1: i32) -> (i32, i32, i32) {
    %c0_i32 = arith.constant 0 : i32
    %c0_i32_0 = arith.constant 0 : i32
    %c0_i32_1 = arith.constant 0 : i32
    return %arg1, %c0_i32, %c0_i32_0 : i32, i32, i32
  }
  func.func @transform_8(%arg0: i32, %arg1: i32) -> (i32, i32, i32) {
    %c0_i32 = arith.constant 0 : i32
    %c0_i32_0 = arith.constant 0 : i32
    %c0_i32_1 = arith.constant 0 : i32
    return %arg1, %c0_i32, %c0_i32_0 : i32, i32, i32
  }
  func.func @transform_9(%arg0: i32, %arg1: i32) -> (i32, i32, i32) {
    %c0_i32 = arith.constant 0 : i32
    %c0_i32_0 = arith.constant 0 : i32
    %c0_i32_1 = arith.constant 0 : i32
    return %arg1, %c0_i32, %c0_i32_0 : i32, i32, i32
  }
  func.func @transform_10(%arg0: i32, %arg1: i32) -> (i32, i32, i32) {
    %c0_i32 = arith.constant 0 : i32
    %c0_i32_0 = arith.constant 0 : i32
    %c0_i32_1 = arith.constant 0 : i32
    return %arg1, %c0_i32, %c0_i32_0 : i32, i32, i32
  }
  func.func @transform_11(%arg0: i32, %arg1: i32) -> (i32, i32, i32) {
    %c0_i32 = arith.constant 0 : i32
    %c0_i32_0 = arith.constant 0 : i32
    %c0_i32_1 = arith.constant 0 : i32
    return %arg1, %c0_i32, %c0_i32_0 : i32, i32, i32
  }
  func.func @transform_12(%arg0: i32, %arg1: i32) -> (i32, i32, i32) {
    %c0_i32 = arith.constant 0 : i32
    %c0_i32_0 = arith.constant 0 : i32
    %c0_i32_1 = arith.constant 0 : i32
    return %arg1, %c0_i32, %c0_i32_0 : i32, i32, i32
  }
  func.func @transform_13(%arg0: i32, %arg1: i32) -> (i32, i32, i32) {
    %c0_i32 = arith.constant 0 : i32
    %c0_i32_0 = arith.constant 0 : i32
    %c0_i32_1 = arith.constant 0 : i32
    return %arg1, %c0_i32, %c0_i32_0 : i32, i32, i32
  }
  func.func @transform_14(%arg0: i32, %arg1: i32) -> (i32, i32, i32) {
    %c0_i32 = arith.constant 0 : i32
    %c0_i32_0 = arith.constant 0 : i32
    %c0_i32_1 = arith.constant 0 : i32
    return %arg1, %c0_i32, %c0_i32_0 : i32, i32, i32
  }
  func.func @transform_15(%arg0: i32, %arg1: i32) -> (i32, i32) {
    %c0_i32 = arith.constant 0 : i32
    %c0_i32_0 = arith.constant 0 : i32
    %c0_i32_1 = arith.constant 0 : i32
    return %c0_i32, %c0_i32_0 : i32, i32
  }
  func.func @transform_16(%arg0: i32, %arg1: i32) -> (i32, i32) {
    %c0_i32 = arith.constant 0 : i32
    %c0_i32_0 = arith.constant 0 : i32
    %c0_i32_1 = arith.constant 0 : i32
    return %c0_i32, %c0_i32_0 : i32, i32
  }
  func.func @transform_17(%arg0: i32, %arg1: i32) -> (i32, i32) {
    %c0_i32 = arith.constant 0 : i32
    %c0_i32_0 = arith.constant 0 : i32
    %c0_i32_1 = arith.constant 0 : i32
    return %c0_i32, %c0_i32_0 : i32, i32
  }
  func.func @transform_18(%arg0: i32, %arg1: i32) -> (i32, i32) {
    %c0_i32 = arith.constant 0 : i32
    %c0_i32_0 = arith.constant 0 : i32
    %c0_i32_1 = arith.constant 0 : i32
    return %c0_i32, %c0_i32_0 : i32, i32
  }
  func.func @transform_19(%arg0: i32, %arg1: i32) -> (i32, i32, i32) {
    %c0_i32 = arith.constant 0 : i32
    %c0_i32_0 = arith.constant 0 : i32
    %c0_i32_1 = arith.constant 0 : i32
    return %arg0, %c0_i32, %c0_i32_0 : i32, i32, i32
  }
}

</mosaic_0001>

<llo_original>
// kernel: tpu_custom_call.1
$region0: #{tpu_custom_call.1}
  #allocation0 [shape = 'u32[]', space=smem, size = 0x4, offset = 0x4, fixed_abs, tag = 'smem constant byte address 0x4 - core index']
  #allocation1 [shape = 'u32[144,128]{1,0:T(1,128)}', space=vmem, size = 0x12000, scoped, tag = 'internal scratch']
  #allocation2 [shape = 'f32[24,128]{1,0:T(8,128)}', space=vmem, size = 0x3000, scoped, tag = 'scratch operand']
  %s0 = inlined_call_operand.hbm [shape: bf16[2,24,48], index: 0, kind: input, shape index: {}]
  %s1 = inlined_call_operand.hbm [shape: bf16[48,128], index: 1, kind: input, shape index: {}]
  %s2 = inlined_call_operand.hbm [shape: f32[24,128], index: 2, kind: input, shape index: {}]
  %s3 = inlined_call_operand.hbm [shape: f32[2,1,128], index: 3, kind: input, shape index: {}]
  %s4 = inlined_call_operand.hbm [shape: f32[2,1,128], index: 4, kind: input, shape index: {}]
  %s5 = inlined_call_operand.hbm [shape: bf16[2,128,384], index: 5, kind: input, shape index: {}]
  %s6 = inlined_call_operand.vmem [shape: f32[2,1,384], index: 6, kind: input, shape index: {}]
  %s7 = inlined_call_operand.hbm [shape: bf16[2,128,128], index: 7, kind: input, shape index: {}]
  %s8 = inlined_call_operand.vmem [shape: f32[2,1,128], index: 8, kind: input, shape index: {}]
  %s9 = inlined_call_operand.vmem [shape: f32[2,1,128], index: 9, kind: input, shape index: {}]
  %s10 = inlined_call_operand.vmem [shape: f32[2,1,128], index: 10, kind: input, shape index: {}]
  %s11 = inlined_call_operand.hbm [shape: bf16[2,128,256], index: 11, kind: input, shape index: {}]
  %s12 = inlined_call_operand.vmem [shape: f32[2,1,256], index: 12, kind: input, shape index: {}]
  %s13 = inlined_call_operand.hbm [shape: bf16[2,256,128], index: 13, kind: input, shape index: {}]
  %s14 = inlined_call_operand.vmem [shape: f32[2,1,128], index: 14, kind: input, shape index: {}]
  %s15 = inlined_call_operand.vmem [shape: f32[1,128], index: 15, kind: input, shape index: {}]
  %s16 = inlined_call_operand.vmem [shape: f32[1,128], index: 16, kind: input, shape index: {}]
  %s17 = inlined_call_operand.hbm [shape: bf16[128,128], index: 17, kind: input, shape index: {}]
  %s18 = inlined_call_operand.vmem [shape: f32[1,128], index: 18, kind: input, shape index: {}]
  %s19 = inlined_call_operand.hbm [shape: f32[2,1,128], index: 19, kind: output, shape index: {}]
  %s20 = sld [smem:[#allocation0]]
  $region157: #{tpu_custom_call.1} parent=0
    _
  %s22 = ssub.s32 1, %s20
  %s23 = scalar_select 0, %s22, %s20
  $region1: #{tpu_custom_call.1} parent=0
    #allocation3 [shape = 'u8[12288]{0}', space=vmem, size = 0x3000, scoped, tag = 'input window, operand 0']
    #allocation4 [shape = 's32[2]{0}', space=sflag, size = 0x8, scoped, tag = 'scoped memory for tpu_custom_call.1']
    #allocation5 [shape = 's32[2]{0}', space=sflag, size = 0x8, scoped, tag = 'scoped memory for tpu_custom_call.1']
    #allocation6 [shape = 'u8[12288]{0}', space=vmem, size = 0x3000, scoped, tag = 'input window, operand 1, single buffered']
    #allocation7 [shape = 's32[1]{0}', space=sflag, size = 0x4, scoped, tag = 'scoped memory for tpu_custom_call.1']
    #allocation8 [shape = 'u8[12288]{0}', space=vmem, size = 0x3000, scoped, tag = 'input window, operand 2, single buffered']
    #allocation9 [shape = 'u8[1024]{0}', space=vmem, size = 0x400, scoped, tag = 'input window, operand 3']
    #allocation10 [shape = 's32[2]{0}', space=sflag, size = 0x8, scoped, tag = 'scoped memory for tpu_custom_call.1']
    #allocation11 [shape = 'u8[1024]{0}', space=vmem, size = 0x400, scoped, tag = 'input window, operand 4']
    #allocation12 [shape = 'u8[196608]{0}', space=vmem, size = 0x30000, scoped, tag = 'input window, operand 5']
    #allocation13 [shape = 's32[2]{0}', space=sflag, size = 0x8, scoped, tag = 'scoped memory for tpu_custom_call.1']
    #allocation14 [shape = 'u8[65536]{0}', space=vmem, size = 0x10000, scoped, tag = 'input window, operand 7']
    #allocation15 [shape = 'u8[131072]{0}', space=vmem, size = 0x20000, scoped, tag = 'input window, operand 11']
    #allocation16 [shape = 's32[2]{0}', space=sflag, size = 0x8, scoped, tag = 'scoped memory for tpu_custom_call.1']
    #allocation17 [shape = 'u8[131072]{0}', space=vmem, size = 0x20000, scoped, tag = 'input window, operand 13']
    #allocation18 [shape = 'u8[32768]{0}', space=vmem, size = 0x8000, scoped, tag = 'input window, operand 17, single buffered']
    #allocation19 [shape = 's32[1]{0}', space=sflag, size = 0x4, scoped, tag = 'scoped memory for tpu_custom_call.1']
    #allocation20 [shape = 'u8[1024]{0}', space=vmem, size = 0x400, scoped, tag = 'output window, operand 0']
    %24 = vsyncpa [#allocation4], 0
    %s25 = scalar_lea.sflag [#allocation4], 1
    %26 = vsyncpa %s25, 0
    %27 = vsyncpa [#allocation7], 0
    %28 = vsyncpa [#allocation10], 0
    %s29 = scalar_lea.sflag [#allocation10], 1
    %30 = vsyncpa %s29, 0
    %31 = vsyncpa [#allocation13], 0
    %s32 = scalar_lea.sflag [#allocation13], 1
    %33 = vsyncpa %s32, 0
    %34 = vsyncpa [#allocation16], 0
    %s35 = scalar_lea.sflag [#allocation16], 1
    %36 = vsyncpa %s35, 0
    %37 = vsyncpa [#allocation19], 0
    %38 = vsyncpa [#allocation5], 0
    %s39 = scalar_lea.sflag [#allocation5], 1
    %40 = vsyncpa %s39, 0
    loop: start=0, step=1, limit=6
    $region2: #{tpu_custom_call.1} parent=1 // loop_pre_header
      _
    $region3: #{tpu_custom_call.1} parent=1 // loop_header
      %s42 = sphi 0, %s46
      %p43 = scmp.ge.s32.totalorder %s42, 6
      %s49 = sphi 0, %s61
      %s50 = sphi 0, %s57
      %s51 = sphi 0, %s49
      %s52 = sphi 0, %s50
      %s53 = sphi 0, %s51
      %s54 = sphi 0, %s52
      %s64 = sphi 0, %s66
      %s67 = sphi 0, %s64
      %s68 = sphi 0, %s67
      %s84 = sphi 0, %s68
      %s88 = sphi 0, %s88
      %s90 = sphi 0, %s88
      %s91 = sphi 0, %s90
      %s105 = sphi 0, %s91
      %s109 = sphi 0, %s109
      %s111 = sphi 0, %s109
      %s112 = sphi 0, %s111
      %s126 = sphi 0, %s112
      %s132 = sphi 0, %s134
      %s135 = sphi 0, %s132
      %s136 = sphi 0, %s135
      %s152 = sphi 0, %s136
      %s158 = sphi 0, %s160
      %s161 = sphi 0, %s158
      %s162 = sphi 0, %s161
      %s178 = sphi 0, %s162
      %s184 = sphi 0, %s186
      %s187 = sphi 0, %s184
      %s188 = sphi 0, %s187
      %s204 = sphi 0, %s188
      %s210 = sphi 0, %s212
      %s213 = sphi 0, %s210
      %s214 = sphi 0, %s213
      %s230 = sphi 0, %s214
      %s236 = sphi 0, %s238
      %s239 = sphi 0, %s236
      %s240 = sphi 0, %s239
      %s256 = sphi 0, %s240
      %s262 = sphi 0, %s264
      %s265 = sphi 0, %s262
      %s266 = sphi 0, %s265
      %s282 = sphi 0, %s266
      %s288 = sphi 0, %s290
      %s291 = sphi 0, %s288
      %s292 = sphi 0, %s291
      %s308 = sphi 0, %s292
      %s314 = sphi 0, %s316
      %s317 = sphi 0, %s314
      %s318 = sphi 0, %s317
      %s334 = sphi 0, %s318
      %s340 = sphi 0, %s342
      %s343 = sphi 0, %s340
      %s344 = sphi 0, %s343
      %s360 = sphi 0, %s344
      %s366 = sphi 0, %s368
      %s369 = sphi 0, %s366
      %s370 = sphi 0, %s369
      %s386 = sphi 0, %s370
      %s392 = sphi 0, %s394
      %s395 = sphi 0, %s392
      %s396 = sphi 0, %s395
      %s412 = sphi 0, %s396
      %s418 = sphi 0, %s420
      %s421 = sphi 0, %s418
      %s422 = sphi 0, %s421
      %s438 = sphi 0, %s422
      %s442 = sphi 0, %s442
      %s444 = sphi 0, %s442
      %s445 = sphi 0, %s444
      %s459 = sphi 0, %s445
      %s463 = sphi 0, %s463
      %s465 = sphi 0, %s463
      %s466 = sphi 0, %s465
      %s480 = sphi 0, %s466
      %s484 = sphi 0, %s484
      %s486 = sphi 0, %s484
      %s487 = sphi 0, %s486
      %s501 = sphi 0, %s487
      %s505 = sphi 0, %s505
      %s507 = sphi 0, %s505
      %s508 = sphi 0, %s507
      %s522 = sphi 0, %s508
      %s528 = sphi 0, %s530
      %s531 = sphi 0, %s528
      %s532 = sphi 0, %s531
      %s548 = sphi 0, %s532
    $region4: #{tpu_custom_call.1} parent=1 // loop_header_branch
      %45 = sbr.rel (%p43) target = $region8
    $region5: #{tpu_custom_call.1} parent=1 // loop_body
      %s47 = ssub.s32 %s42, 1
      %s48 = ssub.s32 %s42, 2
      %s55 = sadd.s32 1, %s50
      %p56 = scmp.ge.s32.totalorder %s55, 2
      %s57 = scalar_select %p56, 0, %s55
      %s58 = sadd.s32 1, %s49
      %s59 = scalar_select %p56, %s58, %s49
      %p60 = scmp.ge.s32.totalorder %s59, 2
      %s61 = scalar_select %p60, 0, %s59
      %s62 = ssub.s32 %s49, %s61
      %p63 = scmp.eq.s32.totalorder %s62, 0
      %s65 = sadd.s32 %s64, 1
      %s66 = scalar_select %p63, %s64, %s65
      %p69 = pneg %p63
      %p70 = scmp.eq.s32.totalorder %s42, 3
      %p71 = por %p69, %p70
      %p72 = scmp.ne.s32.totalorder %s64, %s67
      %p73 = scmp.eq.s32.totalorder %s42, 0
      %p74 = por %p72, %p73
      %p75 = scmp.ne.s32.totalorder %s64, %s67
      %p76 = scmp.eq.s32.totalorder %s47, 3
      %p77 = por %p75, %p76
      %p78 = scmp.ne.s32.totalorder %s67, %s68
      %p79 = scmp.eq.s32.totalorder %s47, 0
      %p80 = por %p78, %p79
      %p81 = scmp.ne.s32.totalorder %s67, %s68
      %p82 = scmp.eq.s32.totalorder %s48, 3
      %p83 = por %p81, %p82
      %p85 = scmp.ne.s32.totalorder %s68, %s84
      %p86 = scmp.eq.s32.totalorder %s48, 0
      %p87 = por %p85, %p86
      %s89 = sadd.s32 %s88, 1
      %p92 = scmp.eq.s32.totalorder %s42, 3
      %p93 = scmp.ne.s32.totalorder %s88, %s90
      %p94 = scmp.eq.s32.totalorder %s42, 0
      %p95 = por %p93, %p94
      %p96 = scmp.ne.s32.totalorder %s88, %s90
      %p97 = scmp.eq.s32.totalorder %s47, 3
      %p98 = por %p96, %p97
      %p99 = scmp.ne.s32.totalorder %s90, %s91
      %p100 = scmp.eq.s32.totalorder %s47, 0
      %p101 = por %p99, %p100
      %p102 = scmp.ne.s32.totalorder %s90, %s91
      %p103 = scmp.eq.s32.totalorder %s48, 3
      %p104 = por %p102, %p103
      %p106 = scmp.ne.s32.totalorder %s91, %s105
      %p107 = scmp.eq.s32.totalorder %s48, 0
      %p108 = por %p106, %p107
      %s110 = sadd.s32 %s109, 1
      %p113 = scmp.eq.s32.totalorder %s42, 3
      %p114 = scmp.ne.s32.totalorder %s109, %s111
      %p115 = scmp.eq.s32.totalorder %s42, 0
      %p116 = por %p114, %p115
      %p117 = scmp.ne.s32.totalorder %s109, %s111
      %p118 = scmp.eq.s32.totalorder %s47, 3
      %p119 = por %p117, %p118
      %p120 = scmp.ne.s32.totalorder %s111, %s112
      %p121 = scmp.eq.s32.totalorder %s47, 0
      %p122 = por %p120, %p121
      %p123 = scmp.ne.s32.totalorder %s111, %s112
      %p124 = scmp.eq.s32.totalorder %s48, 3
      %p125 = por %p123, %p124
      %p127 = scmp.ne.s32.totalorder %s112, %s126
      %p128 = scmp.eq.s32.totalorder %s48, 0
      %p129 = por %p127, %p128
      %s130 = ssub.s32 %s50, %s57
      %p131 = scmp.eq.s32.totalorder %s130, 0
      %s133 = sadd.s32 %s132, 1
      %s134 = scalar_select %p131, %s132, %s133
      %p137 = pneg %p131
      %p138 = scmp.eq.s32.totalorder %s42, 3
      %p139 = por %p137, %p138
      %p140 = scmp.ne.s32.totalorder %s132, %s135
      %p141 = scmp.eq.s32.totalorder %s42, 0
      %p142 = por %p140, %p141
      %p143 = scmp.ne.s32.totalorder %s132, %s135
      %p144 = scmp.eq.s32.totalorder %s47, 3
      %p145 = por %p143, %p144
      %p146 = scmp.ne.s32.totalorder %s135, %s136
      %p147 = scmp.eq.s32.totalorder %s47, 0
      %p148 = por %p146, %p147
      %p149 = scmp.ne.s32.totalorder %s135, %s136
      %p150 = scmp.eq.s32.totalorder %s48, 3
      %p151 = por %p149, %p150
      %p153 = scmp.ne.s32.totalorder %s136, %s152
      %p154 = scmp.eq.s32.totalorder %s48, 0
      %p155 = por %p153, %p154
      %s156 = ssub.s32 %s50, %s57
      %p157 = scmp.eq.s32.totalorder %s156, 0
      %s159 = sadd.s32 %s158, 1
      %s160 = scalar_select %p157, %s158, %s159
      %p163 = pneg %p157
      %p164 = scmp.eq.s32.totalorder %s42, 3
      %p165 = por %p163, %p164
      %p166 = scmp.ne.s32.totalorder %s158, %s161
      %p167 = scmp.eq.s32.totalorder %s42, 0
      %p168 = por %p166, %p167
      %p169 = scmp.ne.s32.totalorder %s158, %s161
      %p170 = scmp.eq.s32.totalorder %s47, 3
      %p171 = por %p169, %p170
      %p172 = scmp.ne.s32.totalorder %s161, %s162
      %p173 = scmp.eq.s32.totalorder %s47, 0
      %p174 = por %p172, %p173
      %p175 = scmp.ne.s32.totalorder %s161, %s162
      %p176 = scmp.eq.s32.totalorder %s48, 3
      %p177 = por %p175, %p176
      %p179 = scmp.ne.s32.totalorder %s162, %s178
      %p180 = scmp.eq.s32.totalorder %s48, 0
      %p181 = por %p179, %p180
      %s182 = ssub.s32 %s50, %s57
      %p183 = scmp.eq.s32.totalorder %s182, 0
      %s185 = sadd.s32 %s184, 1
      %s186 = scalar_select %p183, %s184, %s185
      %p189 = pneg %p183
      %p190 = scmp.eq.s32.totalorder %s42, 3
      %p191 = por %p189, %p190
      %p192 = scmp.ne.s32.totalorder %s184, %s187
      %p193 = scmp.eq.s32.totalorder %s42, 0
      %p194 = por %p192, %p193
      %p195 = scmp.ne.s32.totalorder %s184, %s187
      %p196 = scmp.eq.s32.totalorder %s47, 3
      %p197 = por %p195, %p196
      %p198 = scmp.ne.s32.totalorder %s187, %s188
      %p199 = scmp.eq.s32.totalorder %s47, 0
      %p200 = por %p198, %p199
      %p201 = scmp.ne.s32.totalorder %s187, %s188
      %p202 = scmp.eq.s32.totalorder %s48, 3
      %p203 = por %p201, %p202
      %p205 = scmp.ne.s32.totalorder %s188, %s204
      %p206 = scmp.eq.s32.totalorder %s48, 0
      %p207 = por %p205, %p206
      %s208 = ssub.s32 %s50, %s57
      %p209 = scmp.eq.s32.totalorder %s208, 0
      %s211 = sadd.s32 %s210, 1
      %s212 = scalar_select %p209, %s210, %s211
      %p215 = pneg %p209
      %p216 = scmp.eq.s32.totalorder %s42, 3
      %p217 = por %p215, %p216
      %p218 = scmp.ne.s32.totalorder %s210, %s213
      %p219 = scmp.eq.s32.totalorder %s42, 0
      %p220 = por %p218, %p219
      %p221 = scmp.ne.s32.totalorder %s210, %s213
      %p222 = scmp.eq.s32.totalorder %s47, 3
      %p223 = por %p221, %p222
      %p224 = scmp.ne.s32.totalorder %s213, %s214
      %p225 = scmp.eq.s32.totalorder %s47, 0
      %p226 = por %p224, %p225
      %p227 = scmp.ne.s32.totalorder %s213, %s214
      %p228 = scmp.eq.s32.totalorder %s48, 3
      %p229 = por %p227, %p228
      %p231 = scmp.ne.s32.totalorder %s214, %s230
      %p232 = scmp.eq.s32.totalorder %s48, 0
      %p233 = por %p231, %p232
      %s234 = ssub.s32 %s50, %s57
      %p235 = scmp.eq.s32.totalorder %s234, 0
      %s237 = sadd.s32 %s236, 1
      %s238 = scalar_select %p235, %s236, %s237
      %p241 = pneg %p235
      %p242 = scmp.eq.s32.totalorder %s42, 3
      %p243 = por %p241, %p242
      %p244 = scmp.ne.s32.totalorder %s236, %s239
      %p245 = scmp.eq.s32.totalorder %s42, 0
      %p246 = por %p244, %p245
      %p247 = scmp.ne.s32.totalorder %s236, %s239
      %p248 = scmp.eq.s32.totalorder %s47, 3
      %p249 = por %p247, %p248
      %p250 = scmp.ne.s32.totalorder %s239, %s240
      %p251 = scmp.eq.s32.totalorder %s47, 0
      %p252 = por %p250, %p251
      %p253 = scmp.ne.s32.totalorder %s239, %s240
      %p254 = scmp.eq.s32.totalorder %s48, 3
      %p255 = por %p253, %p254
      %p257 = scmp.ne.s32.totalorder %s240, %s256
      %p258 = scmp.eq.s32.totalorder %s48, 0
      %p259 = por %p257, %p258
      %s260 = ssub.s32 %s50, %s57
      %p261 = scmp.eq.s32.totalorder %s260, 0
      %s263 = sadd.s32 %s262, 1
      %s264 = scalar_select %p261, %s262, %s263
      %p267 = pneg %p261
      %p268 = scmp.eq.s32.totalorder %s42, 3
      %p269 = por %p267, %p268
      %p270 = scmp.ne.s32.totalorder %s262, %s265
      %p271 = scmp.eq.s32.totalorder %s42, 0
      %p272 = por %p270, %p271
      %p273 = scmp.ne.s32.totalorder %s262, %s265
      %p274 = scmp.eq.s32.totalorder %s47, 3
      %p275 = por %p273, %p274
      %p276 = scmp.ne.s32.totalorder %s265, %s266
      %p277 = scmp.eq.s32.totalorder %s47, 0
      %p278 = por %p276, %p277
      %p279 = scmp.ne.s32.totalorder %s265, %s266
      %p280 = scmp.eq.s32.totalorder %s48, 3
      %p281 = por %p279, %p280
      %p283 = scmp.ne.s32.totalorder %s266, %s282
      %p284 = scmp.eq.s32.totalorder %s48, 0
      %p285 = por %p283, %p284
      %s286 = ssub.s32 %s50, %s57
      %p287 = scmp.eq.s32.totalorder %s286, 0
      %s289 = sadd.s32 %s288, 1
      %s290 = scalar_select %p287, %s288, %s289
      %p293 = pneg %p287
      %p294 = scmp.eq.s32.totalorder %s42, 3
      %p295 = por %p293, %p294
      %p296 = scmp.ne.s32.totalorder %s288, %s291
      %p297 = scmp.eq.s32.totalorder %s42, 0
      %p298 = por %p296, %p297
      %p299 = scmp.ne.s32.totalorder %s288, %s291
      %p300 = scmp.eq.s32.totalorder %s47, 3
      %p301 = por %p299, %p300
      %p302 = scmp.ne.s32.totalorder %s291, %s292
      %p303 = scmp.eq.s32.totalorder %s47, 0
      %p304 = por %p302, %p303
      %p305 = scmp.ne.s32.totalorder %s291, %s292
      %p306 = scmp.eq.s32.totalorder %s48, 3
      %p307 = por %p305, %p306
      %p309 = scmp.ne.s32.totalorder %s292, %s308
      %p310 = scmp.eq.s32.totalorder %s48, 0
      %p311 = por %p309, %p310
      %s312 = ssub.s32 %s50, %s57
      %p313 = scmp.eq.s32.totalorder %s312, 0
      %s315 = sadd.s32 %s314, 1
      %s316 = scalar_select %p313, %s314, %s315
      %p319 = pneg %p313
      %p320 = scmp.eq.s32.totalorder %s42, 3
      %p321 = por %p319, %p320
      %p322 = scmp.ne.s32.totalorder %s314, %s317
      %p323 = scmp.eq.s32.totalorder %s42, 0
      %p324 = por %p322, %p323
      %p325 = scmp.ne.s32.totalorder %s314, %s317
      %p326 = scmp.eq.s32.totalorder %s47, 3
      %p327 = por %p325, %p326
      %p328 = scmp.ne.s32.totalorder %s317, %s318
      %p329 = scmp.eq.s32.totalorder %s47, 0
      %p330 = por %p328, %p329
      %p331 = scmp.ne.s32.totalorder %s317, %s318
      %p332 = scmp.eq.s32.totalorder %s48, 3
      %p333 = por %p331, %p332
      %p335 = scmp.ne.s32.totalorder %s318, %s334
      %p336 = scmp.eq.s32.totalorder %s48, 0
      %p337 = por %p335, %p336
      %s338 = ssub.s32 %s50, %s57
      %p339 = scmp.eq.s32.totalorder %s338, 0
      %s341 = sadd.s32 %s340, 1
      %s342 = scalar_select %p339, %s340, %s341
      %p345 = pneg %p339
      %p346 = scmp.eq.s32.totalorder %s42, 3
      %p347 = por %p345, %p346
      %p348 = scmp.ne.s32.totalorder %s340, %s343
      %p349 = scmp.eq.s32.totalorder %s42, 0
      %p350 = por %p348, %p349
      %p351 = scmp.ne.s32.totalorder %s340, %s343
      %p352 = scmp.eq.s32.totalorder %s47, 3
      %p353 = por %p351, %p352
      %p354 = scmp.ne.s32.totalorder %s343, %s344
      %p355 = scmp.eq.s32.totalorder %s47, 0
      %p356 = por %p354, %p355
      %p357 = scmp.ne.s32.totalorder %s343, %s344
      %p358 = scmp.eq.s32.totalorder %s48, 3
      %p359 = por %p357, %p358
      %p361 = scmp.ne.s32.totalorder %s344, %s360
      %p362 = scmp.eq.s32.totalorder %s48, 0
      %p363 = por %p361, %p362
      %s364 = ssub.s32 %s50, %s57
      %p365 = scmp.eq.s32.totalorder %s364, 0
      %s367 = sadd.s32 %s366, 1
      %s368 = scalar_select %p365, %s366, %s367
      %p371 = pneg %p365
      %p372 = scmp.eq.s32.totalorder %s42, 3
      %p373 = por %p371, %p372
      %p374 = scmp.ne.s32.totalorder %s366, %s369
      %p375 = scmp.eq.s32.totalorder %s42, 0
      %p376 = por %p374, %p375
      %p377 = scmp.ne.s32.totalorder %s366, %s369
      %p378 = scmp.eq.s32.totalorder %s47, 3
      %p379 = por %p377, %p378
      %p380 = scmp.ne.s32.totalorder %s369, %s370
      %p381 = scmp.eq.s32.totalorder %s47, 0
      %p382 = por %p380, %p381
      %p383 = scmp.ne.s32.totalorder %s369, %s370
      %p384 = scmp.eq.s32.totalorder %s48, 3
      %p385 = por %p383, %p384
      %p387 = scmp.ne.s32.totalorder %s370, %s386
      %p388 = scmp.eq.s32.totalorder %s48, 0
      %p389 = por %p387, %p388
      %s390 = ssub.s32 %s50, %s57
      %p391 = scmp.eq.s32.totalorder %s390, 0
      %s393 = sadd.s32 %s392, 1
      %s394 = scalar_select %p391, %s392, %s393
      %p397 = pneg %p391
      %p398 = scmp.eq.s32.totalorder %s42, 3
      %p399 = por %p397, %p398
      %p400 = scmp.ne.s32.totalorder %s392, %s395
      %p401 = scmp.eq.s32.totalorder %s42, 0
      %p402 = por %p400, %p401
      %p403 = scmp.ne.s32.totalorder %s392, %s395
      %p404 = scmp.eq.s32.totalorder %s47, 3
      %p405 = por %p403, %p404
      %p406 = scmp.ne.s32.totalorder %s395, %s396
      %p407 = scmp.eq.s32.totalorder %s47, 0
      %p408 = por %p406, %p407
      %p409 = scmp.ne.s32.totalorder %s395, %s396
      %p410 = scmp.eq.s32.totalorder %s48, 3
      %p411 = por %p409, %p410
      %p413 = scmp.ne.s32.totalorder %s396, %s412
      %p414 = scmp.eq.s32.totalorder %s48, 0
      %p415 = por %p413, %p414
      %s416 = ssub.s32 %s50, %s57
      %p417 = scmp.eq.s32.totalorder %s416, 0
      %s419 = sadd.s32 %s418, 1
      %s420 = scalar_select %p417, %s418, %s419
      %p423 = pneg %p417
      %p424 = scmp.eq.s32.totalorder %s42, 3
      %p425 = por %p423, %p424
      %p426 = scmp.ne.s32.totalorder %s418, %s421
      %p427 = scmp.eq.s32.totalorder %s42, 0
      %p428 = por %p426, %p427
      %p429 = scmp.ne.s32.totalorder %s418, %s421
      %p430 = scmp.eq.s32.totalorder %s47, 3
      %p431 = por %p429, %p430
      %p432 = scmp.ne.s32.totalorder %s421, %s422
      %p433 = scmp.eq.s32.totalorder %s47, 0
      %p434 = por %p432, %p433
      %p435 = scmp.ne.s32.totalorder %s421, %s422
      %p436 = scmp.eq.s32.totalorder %s48, 3
      %p437 = por %p435, %p436
      %p439 = scmp.ne.s32.totalorder %s422, %s438
      %p440 = scmp.eq.s32.totalorder %s48, 0
      %p441 = por %p439, %p440
      %s443 = sadd.s32 %s442, 1
      %p446 = scmp.eq.s32.totalorder %s42, 3
      %p447 = scmp.ne.s32.totalorder %s442, %s444
      %p448 = scmp.eq.s32.totalorder %s42, 0
      %p449 = por %p447, %p448
      %p450 = scmp.ne.s32.totalorder %s442, %s444
      %p451 = scmp.eq.s32.totalorder %s47, 3
      %p452 = por %p450, %p451
      %p453 = scmp.ne.s32.totalorder %s444, %s445
      %p454 = scmp.eq.s32.totalorder %s47, 0
      %p455 = por %p453, %p454
      %p456 = scmp.ne.s32.totalorder %s444, %s445
      %p457 = scmp.eq.s32.totalorder %s48, 3
      %p458 = por %p456, %p457
      %p460 = scmp.ne.s32.totalorder %s445, %s459
      %p461 = scmp.eq.s32.totalorder %s48, 0
      %p462 = por %p460, %p461
      %s464 = sadd.s32 %s463, 1
      %p467 = scmp.eq.s32.totalorder %s42, 3
      %p468 = scmp.ne.s32.totalorder %s463, %s465
      %p469 = scmp.eq.s32.totalorder %s42, 0
      %p470 = por %p468, %p469
      %p471 = scmp.ne.s32.totalorder %s463, %s465
      %p472 = scmp.eq.s32.totalorder %s47, 3
      %p473 = por %p471, %p472
      %p474 = scmp.ne.s32.totalorder %s465, %s466
      %p475 = scmp.eq.s32.totalorder %s47, 0
      %p476 = por %p474, %p475
      %p477 = scmp.ne.s32.totalorder %s465, %s466
      %p478 = scmp.eq.s32.totalorder %s48, 3
      %p479 = por %p477, %p478
      %p481 = scmp.ne.s32.totalorder %s466, %s480
      %p482 = scmp.eq.s32.totalorder %s48, 0
      %p483 = por %p481, %p482
      %s485 = sadd.s32 %s484, 1
      %p488 = scmp.eq.s32.totalorder %s42, 3
      %p489 = scmp.ne.s32.totalorder %s484, %s486
      %p490 = scmp.eq.s32.totalorder %s42, 0
      %p491 = por %p489, %p490
      %p492 = scmp.ne.s32.totalorder %s484, %s486
      %p493 = scmp.eq.s32.totalorder %s47, 3
      %p494 = por %p492, %p493
      %p495 = scmp.ne.s32.totalorder %s486, %s487
      %p496 = scmp.eq.s32.totalorder %s47, 0
      %p497 = por %p495, %p496
      %p498 = scmp.ne.s32.totalorder %s486, %s487
      %p499 = scmp.eq.s32.totalorder %s48, 3
      %p500 = por %p498, %p499
      %p502 = scmp.ne.s32.totalorder %s487, %s501
      %p503 = scmp.eq.s32.totalorder %s48, 0
      %p504 = por %p502, %p503
      %s506 = sadd.s32 %s505, 1
      %p509 = scmp.eq.s32.totalorder %s42, 3
      %p510 = scmp.ne.s32.totalorder %s505, %s507
      %p511 = scmp.eq.s32.totalorder %s42, 0
      %p512 = por %p510, %p511
      %p513 = scmp.ne.s32.totalorder %s505, %s507
      %p514 = scmp.eq.s32.totalorder %s47, 3
      %p515 = por %p513, %p514
      %p516 = scmp.ne.s32.totalorder %s507, %s508
      %p517 = scmp.eq.s32.totalorder %s47, 0
      %p518 = por %p516, %p517
      %p519 = scmp.ne.s32.totalorder %s507, %s508
      %p520 = scmp.eq.s32.totalorder %s48, 3
      %p521 = por %p519, %p520
      %p523 = scmp.ne.s32.totalorder %s508, %s522
      %p524 = scmp.eq.s32.totalorder %s48, 0
      %p525 = por %p523, %p524
      %s526 = ssub.s32 %s49, %s61
      %p527 = scmp.eq.s32.totalorder %s526, 0
      %s529 = sadd.s32 %s528, 1
      %s530 = scalar_select %p527, %s528, %s529
      %p533 = pneg %p527
      %p534 = scmp.eq.s32.totalorder %s42, 3
      %p535 = por %p533, %p534
      %p536 = scmp.ne.s32.totalorder %s528, %s531
      %p537 = scmp.eq.s32.totalorder %s42, 0
      %p538 = por %p536, %p537
      %p539 = scmp.ne.s32.totalorder %s528, %s531
      %p540 = scmp.eq.s32.totalorder %s47, 3
      %p541 = por %p539, %p540
      %p542 = scmp.ne.s32.totalorder %s531, %s532
      %p543 = scmp.eq.s32.totalorder %s47, 0
      %p544 = por %p542, %p543
      %p545 = scmp.ne.s32.totalorder %s531, %s532
      %p546 = scmp.eq.s32.totalorder %s48, 3
      %p547 = por %p545, %p546
      %p549 = scmp.ne.s32.totalorder %s532, %s548
      %p550 = scmp.eq.s32.totalorder %s48, 0
      %p551 = por %p549, %p550
      %p552 = scmp.le.s32.totalorder 1, %s42
      %p553 = scmp.lt.s32.totalorder %s42, 5
      %p554 = pnand %p552, %p553
      %p555 = pneg %p554
      // Predicated region
      $region9: #{tpu_custom_call.1} parent=5 // pred_check
        _
      $region10: #{tpu_custom_call.1} parent=5 // pred_check_branch
        %557 = sbr.rel (%p554) target = $region12
      $region11: #{tpu_custom_call.1} parent=5 // pred_region
        %s558 = ssub.s32 %s42, 1
        // Predicated region
        $region13: #{tpu_custom_call.1} parent=11 // pred_check
          %p559 = pneg %p101
        $region14: #{tpu_custom_call.1} parent=11 // pred_check_branch
          %561 = sbr.rel (%p559) target = $region16
        $region15: #{tpu_custom_call.1} parent=11 // pred_region
          %s563 = ssub.s32 384, 384
          %564 = vsyncadd [#allocation7], %s563
          %s565 = sshll.u32 [#allocation6], 4
          %s566 = int_to_ptr.vmem [resolvable:$true] %s565
          %571 = dma.hbm_to_vmem [thread:$0]  %s1, 384, %s566, [#allocation7], 64, 64, 4
        $region16: #{tpu_custom_call.1} parent=11 // pred_fallthru
          _
        // Predicated region
        $region17: #{tpu_custom_call.1} parent=11 // pred_check
          %p572 = pneg %p122
        $region18: #{tpu_custom_call.1} parent=11 // pred_check_branch
          %574 = sbr.rel (%p572) target = $region20
        $region19: #{tpu_custom_call.1} parent=11 // pred_region
          %s576 = ssub.s32 384, 384
          %577 = vsyncadd [#allocation7], %s576
          %s578 = sshll.u32 [#allocation8], 4
          %s579 = int_to_ptr.vmem [resolvable:$true] %s578
          %584 = dma.hbm_to_vmem [thread:$0]  %s2, 384, %s579, [#allocation7], 128, 128, 8
        $region20: #{tpu_custom_call.1} parent=11 // pred_fallthru
          _
        // Predicated region
        $region21: #{tpu_custom_call.1} parent=11 // pred_check
          %p585 = pneg %p455
        $region22: #{tpu_custom_call.1} parent=11 // pred_check_branch
          %587 = sbr.rel (%p585) target = $region24
        $region23: #{tpu_custom_call.1} parent=11 // pred_region
          _
        $region24: #{tpu_custom_call.1} parent=11 // pred_fallthru
          _
        // Predicated region
        $region25: #{tpu_custom_call.1} parent=11 // pred_check
          %p588 = pneg %p476
        $region26: #{tpu_custom_call.1} parent=11 // pred_check_branch
          %590 = sbr.rel (%p588) target = $region28
        $region27: #{tpu_custom_call.1} parent=11 // pred_region
          _
        $region28: #{tpu_custom_call.1} parent=11 // pred_fallthru
          _
        // Predicated region
        $region29: #{tpu_custom_call.1} parent=11 // pred_check
          %p591 = pneg %p497
        $region30: #{tpu_custom_call.1} parent=11 // pred_check_branch
          %593 = sbr.rel (%p591) target = $region32
        $region31: #{tpu_custom_call.1} parent=11 // pred_region
          %s595 = ssub.s32 1024, 1024
          %596 = vsyncadd [#allocation19], %s595
          %s597 = sshll.u32 [#allocation18], 4
          %s598 = int_to_ptr.vmem [resolvable:$true] %s597
          %603 = dma.hbm_to_vmem [thread:$0]  %s17, 1024, %s598, [#allocation19], 64, 64, 4
        $region32: #{tpu_custom_call.1} parent=11 // pred_fallthru
          _
        // Predicated region
        $region33: #{tpu_custom_call.1} parent=11 // pred_check
          %p604 = pneg %p518
        $region34: #{tpu_custom_call.1} parent=11 // pred_check_branch
          %606 = sbr.rel (%p604) target = $region36
        $region35: #{tpu_custom_call.1} parent=11 // pred_region
          _
        $region36: #{tpu_custom_call.1} parent=11 // pred_fallthru
          _
      $region12: #{tpu_custom_call.1} parent=5 // pred_fallthru
        _
      %p607 = scmp.lt.s32.totalorder %s42, 4
      // Predicated region
      $region37: #{tpu_custom_call.1} parent=5 // pred_check
        %p608 = pneg %p607
      $region38: #{tpu_custom_call.1} parent=5 // pred_check_branch
        %610 = sbr.rel (%p608) target = $region40
      $region39: #{tpu_custom_call.1} parent=5 // pred_region
        // Predicated region
        $region41: #{tpu_custom_call.1} parent=39 // pred_check
          %p611 = pneg %p74
        $region42: #{tpu_custom_call.1} parent=39 // pred_check_branch
          %613 = sbr.rel (%p611) target = $region44
        $region43: #{tpu_custom_call.1} parent=39 // pred_region
          %s614 = sand.u32 %s64, 1
          %s615 = scalar_lea.sflag [#allocation4], %s614
          %s616 = sand.u32 %s64, 1
          %s617 = smul.addr %s616, 12
          %s618 = scalar_lea.vmem [#allocation3], %s617
          %s620 = ssub.s32 192, 192
          %621 = vsyncadd %s615, %s620
          %s622 = smul.addr %s49, 3
          %s623 = smul.addr %s622, 64
          %s624 = scalar_lea.hbm %s0, %s623
          %s625 = sshll.u32 %s618, 4
          %s626 = int_to_ptr.vmem [resolvable:$true] %s625
          %631 = dma.hbm_to_vmem [thread:$0]  %s624, 192, %s626, %s615, 64, 64, 4
        $region44: #{tpu_custom_call.1} parent=39 // pred_fallthru
          _
        // Predicated region
        $region45: #{tpu_custom_call.1} parent=39 // pred_check
          %p632 = pneg %p142
        $region46: #{tpu_custom_call.1} parent=39 // pred_check_branch
          %634 = sbr.rel (%p632) target = $region48
        $region47: #{tpu_custom_call.1} parent=39 // pred_region
          %s635 = sand.u32 %s42, 1
          %s636 = scalar_lea.sflag [#allocation10], %s635
          %s637 = sand.u32 %s132, 1
          %s638 = scalar_lea.vmem [#allocation9], %s637
          %s640 = ssub.s32 16, 16
          %641 = vsyncadd %s636, %s640
          %s642 = smul.addr %s50, 16
          %s643 = scalar_lea.hbm %s3, %s642
          %s645 = sshll.u32 %s638, 4
          %s646 = int_to_ptr.vmem [resolvable:$true] %s645
          %648 = dma.hbm_to_vmem [thread:$0]  %s643, 16, %s646, %s636
        $region48: #{tpu_custom_call.1} parent=39 // pred_fallthru
          _
        // Predicated region
        $region49: #{tpu_custom_call.1} parent=39 // pred_check
          %p649 = pneg %p168
        $region50: #{tpu_custom_call.1} parent=39 // pred_check_branch
          %651 = sbr.rel (%p649) target = $region52
        $region51: #{tpu_custom_call.1} parent=39 // pred_region
          %s652 = sand.u32 %s42, 1
          %s653 = scalar_lea.sflag [#allocation10], %s652
          %s654 = sand.u32 %s158, 1
          %s655 = scalar_lea.vmem [#allocation11], %s654
          %s657 = ssub.s32 16, 16
          %658 = vsyncadd %s653, %s657
          %s659 = smul.addr %s50, 16
          %s660 = scalar_lea.hbm %s4, %s659
          %s662 = sshll.u32 %s655, 4
          %s663 = int_to_ptr.vmem [resolvable:$true] %s662
          %665 = dma.hbm_to_vmem [thread:$0]  %s660, 16, %s663, %s653
        $region52: #{tpu_custom_call.1} parent=39 // pred_fallthru
          _
        // Predicated region
        $region53: #{tpu_custom_call.1} parent=39 // pred_check
          %p666 = pneg %p194
        $region54: #{tpu_custom_call.1} parent=39 // pred_check_branch
          %668 = sbr.rel (%p666) target = $region56
        $region55: #{tpu_custom_call.1} parent=39 // pred_region
          %s669 = sand.u32 %s42, 1
          %s670 = scalar_lea.sflag [#allocation13], %s669
          %s671 = sand.u32 %s184, 1
          %s672 = smul.addr %s671, 192
          %s673 = scalar_lea.vmem [#allocation12], %s672
          %s675 = ssub.s32 3072, 3072
          %676 = vsyncadd %s670, %s675
          %s677 = smul.addr %s50, 48
          %s678 = smul.addr %s677, 64
          %s679 = scalar_lea.hbm %s5, %s678
          %s680 = sshll.u32 %s673, 4
          %s681 = int_to_ptr.vmem [resolvable:$true] %s680
          %686 = dma.hbm_to_vmem [thread:$0]  %s679, 3072, %s681, %s670, 192, 192, 12
        $region56: #{tpu_custom_call.1} parent=39 // pred_fallthru
          _
        // Predicated region
        $region57: #{tpu_custom_call.1} parent=39 // pred_check
          %p687 = pneg %p220
        $region58: #{tpu_custom_call.1} parent=39 // pred_check_branch
          %689 = sbr.rel (%p687) target = $region60
        $region59: #{tpu_custom_call.1} parent=39 // pred_region
          %p690 = scmp.lt.s32.totalorder %s50, 1
          %s691 = scalar_select %p690, %s50, 1
          %s692 = smul.addr %s691, 3
          %s693 = scalar_lea.vmem %s6, %s692
        $region60: #{tpu_custom_call.1} parent=39 // pred_fallthru
          _
        // Predicated region
        $region61: #{tpu_custom_call.1} parent=39 // pred_check
          %p694 = pneg %p246
        $region62: #{tpu_custom_call.1} parent=39 // pred_check_branch
          %696 = sbr.rel (%p694) target = $region64
        $region63: #{tpu_custom_call.1} parent=39 // pred_region
          %s697 = sand.u32 %s42, 1
          %s698 = scalar_lea.sflag [#allocation13], %s697
          %s699 = sand.u32 %s236, 1
          %s700 = smul.addr %s699, 64
          %s701 = scalar_lea.vmem [#allocation14], %s700
          %s703 = ssub.s32 1024, 1024
          %704 = vsyncadd %s698, %s703
          %s705 = smul.addr %s50, 16
          %s706 = smul.addr %s705, 64
          %s707 = scalar_lea.hbm %s7, %s706
          %s708 = sshll.u32 %s701, 4
          %s709 = int_to_ptr.vmem [resolvable:$true] %s708
          %714 = dma.hbm_to_vmem [thread:$0]  %s707, 1024, %s709, %s698, 64, 64, 4
        $region64: #{tpu_custom_call.1} parent=39 // pred_fallthru
          _
        // Predicated region
        $region65: #{tpu_custom_call.1} parent=39 // pred_check
          %p715 = pneg %p272
        $region66: #{tpu_custom_call.1} parent=39 // pred_check_branch
          %717 = sbr.rel (%p715) target = $region68
        $region67: #{tpu_custom_call.1} parent=39 // pred_region
          %p718 = scmp.lt.s32.totalorder %s50, 1
          %s719 = scalar_select %p718, %s50, 1
          %s720 = scalar_lea.vmem %s8, %s719
        $region68: #{tpu_custom_call.1} parent=39 // pred_fallthru
          _
        // Predicated region
        $region69: #{tpu_custom_call.1} parent=39 // pred_check
          %p721 = pneg %p298
        $region70: #{tpu_custom_call.1} parent=39 // pred_check_branch
          %723 = sbr.rel (%p721) target = $region72
        $region71: #{tpu_custom_call.1} parent=39 // pred_region
          %p724 = scmp.lt.s32.totalorder %s50, 1
          %s725 = scalar_select %p724, %s50, 1
          %s726 = scalar_lea.vmem %s9, %s725
        $region72: #{tpu_custom_call.1} parent=39 // pred_fallthru
          _
        // Predicated region
        $region73: #{tpu_custom_call.1} parent=39 // pred_check
          %p727 = pneg %p324
        $region74: #{tpu_custom_call.1} parent=39 // pred_check_branch
          %729 = sbr.rel (%p727) target = $region76
        $region75: #{tpu_custom_call.1} parent=39 // pred_region
          %p730 = scmp.lt.s32.totalorder %s50, 1
          %s731 = scalar_select %p730, %s50, 1
          %s732 = scalar_lea.vmem %s10, %s731
        $region76: #{tpu_custom_call.1} parent=39 // pred_fallthru
          _
        // Predicated region
        $region77: #{tpu_custom_call.1} parent=39 // pred_check
          %p733 = pneg %p350
        $region78: #{tpu_custom_call.1} parent=39 // pred_check_branch
          %735 = sbr.rel (%p733) target = $region80
        $region79: #{tpu_custom_call.1} parent=39 // pred_region
          %s736 = sand.u32 %s42, 1
          %s737 = scalar_lea.sflag [#allocation16], %s736
          %s738 = sand.u32 %s340, 1
          %s739 = smul.addr %s738, 128
          %s740 = scalar_lea.vmem [#allocation15], %s739
          %s742 = ssub.s32 2048, 2048
          %743 = vsyncadd %s737, %s742
          %s744 = smul.addr %s50, 32
          %s745 = smul.addr %s744, 64
          %s746 = scalar_lea.hbm %s11, %s745
          %s747 = sshll.u32 %s740, 4
          %s748 = int_to_ptr.vmem [resolvable:$true] %s747
          %753 = dma.hbm_to_vmem [thread:$0]  %s746, 2048, %s748, %s737, 128, 128, 8
        $region80: #{tpu_custom_call.1} parent=39 // pred_fallthru
          _
        // Predicated region
        $region81: #{tpu_custom_call.1} parent=39 // pred_check
          %p754 = pneg %p376
        $region82: #{tpu_custom_call.1} parent=39 // pred_check_branch
          %756 = sbr.rel (%p754) target = $region84
        $region83: #{tpu_custom_call.1} parent=39 // pred_region
          %p757 = scmp.lt.s32.totalorder %s50, 1
          %s758 = scalar_select %p757, %s50, 1
          %s759 = smul.addr %s758, 2
          %s760 = scalar_lea.vmem %s12, %s759
        $region84: #{tpu_custom_call.1} parent=39 // pred_fallthru
          _
        // Predicated region
        $region85: #{tpu_custom_call.1} parent=39 // pred_check
          %p761 = pneg %p402
        $region86: #{tpu_custom_call.1} parent=39 // pred_check_branch
          %763 = sbr.rel (%p761) target = $region88
        $region87: #{tpu_custom_call.1} parent=39 // pred_region
          %s764 = sand.u32 %s42, 1
          %s765 = scalar_lea.sflag [#allocation16], %s764
          %s766 = sand.u32 %s392, 1
          %s767 = smul.addr %s766, 128
          %s768 = scalar_lea.vmem [#allocation17], %s767
          %s770 = ssub.s32 2048, 2048
          %771 = vsyncadd %s765, %s770
          %s772 = smul.addr %s50, 32
          %s773 = smul.addr %s772, 64
          %s774 = scalar_lea.hbm %s13, %s773
          %s775 = sshll.u32 %s768, 4
          %s776 = int_to_ptr.vmem [resolvable:$true] %s775
          %781 = dma.hbm_to_vmem [thread:$0]  %s774, 2048, %s776, %s765, 64, 64, 4
        $region88: #{tpu_custom_call.1} parent=39 // pred_fallthru
          _
        // Predicated region
        $region89: #{tpu_custom_call.1} parent=39 // pred_check
          %p782 = pneg %p428
        $region90: #{tpu_custom_call.1} parent=39 // pred_check_branch
          %784 = sbr.rel (%p782) target = $region92
        $region91: #{tpu_custom_call.1} parent=39 // pred_region
          %p785 = scmp.lt.s32.totalorder %s50, 1
          %s786 = scalar_select %p785, %s50, 1
          %s787 = scalar_lea.vmem %s14, %s786
        $region92: #{tpu_custom_call.1} parent=39 // pred_fallthru
          _
      $region40: #{tpu_custom_call.1} parent=5 // pred_fallthru
        _
      %p788 = scmp.le.s32.totalorder 1, %s42
      %p789 = scmp.lt.s32.totalorder %s42, 5
      %p790 = pnand %p788, %p789
      %p791 = pneg %p790
      // Predicated region
      $region93: #{tpu_custom_call.1} parent=5 // pred_check
        _
      $region94: #{tpu_custom_call.1} parent=5 // pred_check_branch
        %793 = sbr.rel (%p790) target = $region96
      $region95: #{tpu_custom_call.1} parent=5 // pred_region
        %s794 = ssub.s32 %s42, 1
        %s795 = sand.u32 %s67, 1
        %s796 = scalar_lea.sflag [#allocation4], %s795
        %s797 = sand.u32 %s67, 1
        %s798 = smul.addr %s797, 12
        %s799 = scalar_lea.vmem [#allocation3], %s798
        // Predicated region
        $region97: #{tpu_custom_call.1} parent=95 // pred_check
          %p800 = pneg %p80
        $region98: #{tpu_custom_call.1} parent=95 // pred_check_branch
          %802 = sbr.rel (%p800) target = $region100
        $region99: #{tpu_custom_call.1} parent=95 // pred_region
          %803 = dma.done %s796, 192
        $region100: #{tpu_custom_call.1} parent=95 // pred_fallthru
          _
        // Predicated region
        $region101: #{tpu_custom_call.1} parent=95 // pred_check
          %p804 = pneg %p101
        $region102: #{tpu_custom_call.1} parent=95 // pred_check_branch
          %806 = sbr.rel (%p804) target = $region104
        $region103: #{tpu_custom_call.1} parent=95 // pred_region
          %807 = dma.done [#allocation7], 384
        $region104: #{tpu_custom_call.1} parent=95 // pred_fallthru
          _
        // Predicated region
        $region105: #{tpu_custom_call.1} parent=95 // pred_check
          %p808 = pneg %p122
        $region106: #{tpu_custom_call.1} parent=95 // pred_check_branch
          %810 = sbr.rel (%p808) target = $region108
        $region107: #{tpu_custom_call.1} parent=95 // pred_region
          %811 = dma.done [#allocation7], 384
        $region108: #{tpu_custom_call.1} parent=95 // pred_fallthru
          _
        %s812 = sand.u32 %s47, 1
        %s813 = scalar_lea.sflag [#allocation10], %s812
        %s814 = sand.u32 %s135, 1
        %s815 = scalar_lea.vmem [#allocation9], %s814
        // Predicated region
        $region109: #{tpu_custom_call.1} parent=95 // pred_check
          %p816 = pneg %p148
        $region110: #{tpu_custom_call.1} parent=95 // pred_check_branch
          %818 = sbr.rel (%p816) target = $region112
        $region111: #{tpu_custom_call.1} parent=95 // pred_region
          %819 = dma.done %s813, 16
        $region112: #{tpu_custom_call.1} parent=95 // pred_fallthru
          _
        %s820 = sand.u32 %s47, 1
        %s821 = scalar_lea.sflag [#allocation10], %s820
        %s822 = sand.u32 %s161, 1
        %s823 = scalar_lea.vmem [#allocation11], %s822
        // Predicated region
        $region113: #{tpu_custom_call.1} parent=95 // pred_check
          %p824 = pneg %p174
        $region114: #{tpu_custom_call.1} parent=95 // pred_check_branch
          %826 = sbr.rel (%p824) target = $region116
        $region115: #{tpu_custom_call.1} parent=95 // pred_region
          %827 = dma.done %s821, 16
        $region116: #{tpu_custom_call.1} parent=95 // pred_fallthru
          _
        %s828 = sand.u32 %s47, 1
        %s829 = scalar_lea.sflag [#allocation13], %s828
        %s830 = sand.u32 %s187, 1
        %s831 = smul.addr %s830, 192
        %s832 = scalar_lea.vmem [#allocation12], %s831
        // Predicated region
        $region117: #{tpu_custom_call.1} parent=95 // pred_check
          %p833 = pneg %p200
        $region118: #{tpu_custom_call.1} parent=95 // pred_check_branch
          %835 = sbr.rel (%p833) target = $region120
        $region119: #{tpu_custom_call.1} parent=95 // pred_region
          %836 = dma.done %s829, 3072
        $region120: #{tpu_custom_call.1} parent=95 // pred_fallthru
          _
        %s837 = sand.u32 %s47, 1
        %s838 = scalar_lea.sflag [#allocation13], %s837
        %s839 = sand.u32 %s239, 1
        %s840 = smul.addr %s839, 64
        %s841 = scalar_lea.vmem [#allocation14], %s840
        // Predicated region
        $region121: #{tpu_custom_call.1} parent=95 // pred_check
          %p842 = pneg %p252
        $region122: #{tpu_custom_call.1} parent=95 // pred_check_branch
          %844 = sbr.rel (%p842) target = $region124
        $region123: #{tpu_custom_call.1} parent=95 // pred_region
          %845 = dma.done %s838, 1024
        $region124: #{tpu_custom_call.1} parent=95 // pred_fallthru
          _
        %s846 = sand.u32 %s47, 1
        %s847 = scalar_lea.sflag [#allocation16], %s846
        %s848 = sand.u32 %s343, 1
        %s849 = smul.addr %s848, 128
        %s850 = scalar_lea.vmem [#allocation15], %s849
        // Predicated region
        $region125: #{tpu_custom_call.1} parent=95 // pred_check
          %p851 = pneg %p356
        $region126: #{tpu_custom_call.1} parent=95 // pred_check_branch
          %853 = sbr.rel (%p851) target = $region128
        $region127: #{tpu_custom_call.1} parent=95 // pred_region
          %854 = dma.done %s847, 2048
        $region128: #{tpu_custom_call.1} parent=95 // pred_fallthru
          _
        %s855 = sand.u32 %s47, 1
        %s856 = scalar_lea.sflag [#allocation16], %s855
        %s857 = sand.u32 %s395, 1
        %s858 = smul.addr %s857, 128
        %s859 = scalar_lea.vmem [#allocation17], %s858
        // Predicated region
        $region129: #{tpu_custom_call.1} parent=95 // pred_check
          %p860 = pneg %p408
        $region130: #{tpu_custom_call.1} parent=95 // pred_check_branch
          %862 = sbr.rel (%p860) target = $region132
        $region131: #{tpu_custom_call.1} parent=95 // pred_region
          %863 = dma.done %s856, 2048
        $region132: #{tpu_custom_call.1} parent=95 // pred_fallthru
          _
        // Predicated region
        $region133: #{tpu_custom_call.1} parent=95 // pred_check
          %p864 = pneg %p497
        $region134: #{tpu_custom_call.1} parent=95 // pred_check_branch
          %866 = sbr.rel (%p864) target = $region136
        $region135: #{tpu_custom_call.1} parent=95 // pred_region
          %867 = dma.done [#allocation19], 1024
        $region136: #{tpu_custom_call.1} parent=95 // pred_fallthru
          _
        %s868 = sand.u32 %s67, 1
        %s869 = scalar_lea.sflag [#allocation4], %s868
        %s870 = sand.u32 %s67, 1
        %s871 = smul.addr %s870, 12
        %s872 = scalar_lea.vmem [#allocation3], %s871
        %p873 = pneg %p80
        %p874 = pneg %p77
        %p875 = pneg %p101
        %p876 = pneg %p98
        %p877 = pneg %p122
        %p878 = pneg %p119
        %s879 = sand.u32 %s47, 1
        %s880 = scalar_lea.sflag [#allocation10], %s879
        %s881 = sand.u32 %s135, 1
        %s882 = scalar_lea.vmem [#allocation9], %s881
        %p883 = pneg %p148
        %p884 = pneg %p145
        %s885 = sand.u32 %s47, 1
        %s886 = scalar_lea.sflag [#allocation10], %s885
        %s887 = sand.u32 %s161, 1
        %s888 = scalar_lea.vmem [#allocation11], %s887
        %p889 = pneg %p174
        %p890 = pneg %p171
        %s891 = sand.u32 %s47, 1
        %s892 = scalar_lea.sflag [#allocation13], %s891
        %s893 = sand.u32 %s187, 1
        %s894 = smul.addr %s893, 192
        %s895 = scalar_lea.vmem [#allocation12], %s894
        %p896 = pneg %p200
        %p897 = pneg %p197
        %p898 = scmp.lt.s32.totalorder %s52, 1
        %s899 = scalar_select %p898, %s52, 1
        %s900 = smul.addr %s899, 3
        %s901 = scalar_lea.vmem %s6, %s900
        %p902 = pneg %p226
        %p903 = pneg %p223
        %s904 = sand.u32 %s47, 1
        %s905 = scalar_lea.sflag [#allocation13], %s904
        %s906 = sand.u32 %s239, 1
        %s907 = smul.addr %s906, 64
        %s908 = scalar_lea.vmem [#allocation14], %s907
        %p909 = pneg %p252
        %p910 = pneg %p249
        %p911 = scmp.lt.s32.totalorder %s52, 1
        %s912 = scalar_select %p911, %s52, 1
        %s913 = scalar_lea.vmem %s8, %s912
        %p914 = pneg %p278
        %p915 = pneg %p275
        %p916 = scmp.lt.s32.totalorder %s52, 1
        %s917 = scalar_select %p916, %s52, 1
        %s918 = scalar_lea.vmem %s9, %s917
        %p919 = pneg %p304
        %p920 = pneg %p301
        %p921 = scmp.lt.s32.totalorder %s52, 1
        %s922 = scalar_select %p921, %s52, 1
        %s923 = scalar_lea.vmem %s10, %s922
        %p924 = pneg %p330
        %p925 = pneg %p327
        %s926 = sand.u32 %s47, 1
        %s927 = scalar_lea.sflag [#allocation16], %s926
        %s928 = sand.u32 %s343, 1
        %s929 = smul.addr %s928, 128
        %s930 = scalar_lea.vmem [#allocation15], %s929
        %p931 = pneg %p356
        %p932 = pneg %p353
        %p933 = scmp.lt.s32.totalorder %s52, 1
        %s934 = scalar_select %p933, %s52, 1
        %s935 = smul.addr %s934, 2
        %s936 = scalar_lea.vmem %s12, %s935
        %p937 = pneg %p382
        %p938 = pneg %p379
        %s939 = sand.u32 %s47, 1
        %s940 = scalar_lea.sflag [#allocation16], %s939
        %s941 = sand.u32 %s395, 1
        %s942 = smul.addr %s941, 128
        %s943 = scalar_lea.vmem [#allocation17], %s942
        %p944 = pneg %p408
        %p945 = pneg %p405
        %p946 = scmp.lt.s32.totalorder %s52, 1
        %s947 = scalar_select %p946, %s52, 1
        %s948 = scalar_lea.vmem %s14, %s947
        %p949 = pneg %p434
        %p950 = pneg %p431
        %p951 = pneg %p455
        %p952 = pneg %p452
        %p953 = pneg %p476
        %p954 = pneg %p473
        %p955 = pneg %p497
        %p956 = pneg %p494
        %p957 = pneg %p518
        %p958 = pneg %p515
        %p959 = pneg %p544
        %p960 = pneg %p541
        %s961 = sand.u32 %s531, 1
        %s962 = scalar_lea.sflag [#allocation5], %s961
        %s963 = sand.u32 %s531, 1
        %s964 = scalar_lea.vmem [#allocation20], %s963
        %p965 = scmp.lt.s32.totalorder %s52, 1
        %s966 = scalar_select %p965, %s52, 1
        %s967 = smul.addr %s966, 3
        %s968 = scalar_lea.vmem %s6, %s967
        %p969 = scmp.lt.s32.totalorder %s52, 1
        %s970 = scalar_select %p969, %s52, 1
        %s971 = scalar_lea.vmem %s8, %s970
        %p972 = scmp.lt.s32.totalorder %s52, 1
        %s973 = scalar_select %p972, %s52, 1
        %s974 = scalar_lea.vmem %s9, %s973
        %p975 = scmp.lt.s32.totalorder %s52, 1
        %s976 = scalar_select %p975, %s52, 1
        %s977 = scalar_lea.vmem %s10, %s976
        %p978 = scmp.lt.s32.totalorder %s52, 1
        %s979 = scalar_select %p978, %s52, 1
        %s980 = smul.addr %s979, 2
        %s981 = scalar_lea.vmem %s12, %s980
        %p982 = scmp.lt.s32.totalorder %s52, 1
        %s983 = scalar_select %p982, %s52, 1
        %s984 = scalar_lea.vmem %s14, %s983
        %p986 = scmp.eq.s32.totalorder %s52, 0
        // Predicated region
        $region137: #{tpu_custom_call.1} parent=95 // pred_check
          %p987 = pneg %p986
        $region138: #{tpu_custom_call.1} parent=95 // pred_check_branch
          %989 = sbr.rel (%p987) target = $region140
        $region139: #{tpu_custom_call.1} parent=95 // pred_region
          %v990 = vld [vmem:[%s799] sm:$0xf]
          %v991 = vld [vmem:[%s799 + $0x4] sm:$0xf]
          %v992 = vld [vmem:[%s799 + $0x8] sm:$0xf]
          %v993 = vld [vmem:[#allocation6] sm:$0xf]
          %v994 = vld [vmem:[#allocation6 + $0x4] sm:$0xf]
          %v995 = vld [vmem:[#allocation6 + $0x8] sm:$0xf]
          %v996 = vld [vmem:[#allocation6 + $0xc] sm:$0xf]
          %v997 = vld [vmem:[#allocation6 + $0x10] sm:$0xf]
          %v998 = vld [vmem:[#allocation6 + $0x14] sm:$0xf]
          %v999 = vld [vmem:[#allocation8] sm:$0xff]
          %v1000 = vld [vmem:[#allocation8 + $0x8] sm:$0xff]
          %v1001 = vld [vmem:[#allocation8 + $0x10] sm:$0xff]
          %v1005 = vunpack.c.l.b16 %v990
          %v1006 = vunpack.c.l.b16 %v991
          %v1007 = vunpack.c.l.b16 %v992
          %v1008 = vpack.c.b16 %v1006, %v1005
          %v1009 = vpack.c.b16 %v1007, %v1007
          %v1016 = vunpack.c.l.b16 %v993
          %v1017 = vunpack.c.l.b16 %v994
          %v1018 = vunpack.c.l.b16 %v995
          %v1019 = vunpack.c.l.b16 %v996
          %v1020 = vunpack.c.l.b16 %v997
          %v1021 = vunpack.c.l.b16 %v998
          %v1022 = vpack.c.b16 %v1017, %v1016
          %v1023 = vpack.c.b16 %v1019, %v1018
          %v1024 = vpack.c.b16 %v1021, %v1020
          %vm1028 = vcmask 392192
          %v1030 = vsel %vm1028, %v1008, 0
          %v1033 = vsel %vm1028, %v1009, 0
          %1035 = vmatprep.subr.bf16.mxu0 0
          %1036 = vmatpush1.bf16.msra.mxu0 0
          %1037 = vmatprep.subr.bf16.mxu0 0
          %1038 = vmatpush1.bf16.msra.mxu0 0
          %1039 = vmatprep.subr.bf16.mxu0 0
          %1040 = vmatpush1.bf16.msra.mxu0 0
          %1041 = vmatprep.subr.bf16.mxu0 0
          %1042 = vmatpush1.bf16.msra.mxu0 0
          %1043 = vmatprep.subr.bf16.mxu0 0
          %1044 = vmatpush1.bf16.msra.mxu0 0
          %1045 = vmatprep.subr.bf16.mxu0 0
          %1046 = vmatpush1.bf16.msra.mxu0 %v1024
          %1047 = vmatprep.subr.bf16.mxu0 0
          %1048 = vmatpush1.bf16.msra.mxu0 %v1023
          %1049 = vmatprep.subr.bf16.mxu0 0
          %1050 = vmatpush1.bf16.msra.mxu0 %v1022
          %1051 = vmatprep.subr.bf16.mxu0 0
          %1052 = vmatpush2.bf16.msra.mxu0 0
          %1053 = vmatprep.subr.bf16.mxu0 0
          %1054 = vmatpush2.bf16.msra.mxu0 0
          %1055 = vmatprep.subr.bf16.mxu0 0
          %1056 = vmatpush2.bf16.msra.mxu0 0
          %1057 = vmatprep.subr.bf16.mxu0 0
          %1058 = vmatpush2.bf16.msra.mxu0 0
          %1059 = vmatprep.subr.bf16.mxu0 0
          %1060 = vmatpush2.bf16.msra.mxu0 0
          %1061 = vmatprep.subr.bf16.mxu0 0
          %1062 = vmatpush2.bf16.msra.mxu0 0
          %1063 = vmatprep.subr.bf16.mxu0 0
          %1064 = vmatpush2.bf16.msra.mxu0 0
          %1065 = vmatprep.subr.bf16.mxu0 0
          %1066 = vmatpush2.bf16.msra.mxu0 0
          %1067 = vmatprep.mubr.bf16.mxu0 0
          %1068 = vmatmul.mubr.bf16.gmra.mxu0 %v1030
          %v1069 = vpop.f32.mrf.mxu0
          %v1070 = vadd.f32 %v999, %v1069
          %v1071 = vpop.f32.mrf.mxu0
          %v1072 = vpop.f32.mrf.mxu0
          %v1073 = vadd.f32 %v1000, %v1072
          %v1074 = vpop.f32.mrf.mxu0
          %1075 = vmatprep.mubr.bf16.mxu0 0
          %1076 = vmatmul.mubr.bf16.gmra.mxu0 %v1033
          %v1077 = vpop.f32.mrf.mxu0
          %v1078 = vadd.f32 %v1001, %v1077
          %v1079 = vpop.f32.mrf.mxu0
          %v1080 = vpop.f32.mrf.mxu0
          %v1081 = vpop.f32.mrf.mxu0
          %1082 = vdwg.mxu0
          %1083 = vst [vmem:[#allocation2] sm:$0xff] %v1070
          %1084 = vst [vmem:[#allocation2 + $0x8] sm:$0xff] %v1073
          %1085 = vst [vmem:[#allocation2 + $0x10] sm:$0xff] %v1078
        $region140: #{tpu_custom_call.1} parent=95 // pred_fallthru
          _
        %v1086 = vld [vmem:[#allocation2] sm:$0xff]
        %v1087 = vld [vmem:[#allocation2 + $0x8] sm:$0xff]
        %v1088 = vld [vmem:[#allocation2 + $0x10] sm:$0xff]
        %v1089 = vld [vmem:[%s815] sm:$0x1]
        %v1090 = vld [vmem:[%s823] sm:$0x1]
        %1091 = vadd.xlane.f32.xlu0 %v1086
        %v1092 = vpop.xlane.xlu0 %1091
        %1093 = vadd.xlane.f32.xlu0 %v1087
        %v1094 = vpop.xlane.xlu0 %1093
        %1095 = vadd.xlane.f32.xlu0 %v1088
        %v1096 = vpop.xlane.xlu0 %1095
        %v1097 = vrcp.pop 128.0
        %v1098 = vmul.f32 %v1092, %v1097
        %v1099 = vmul.f32 %v1094, %v1097
        %v1100 = vmul.f32 %v1096, %v1097
        %v1101 = vsub.f32 %v1086, %v1098
        %v1102 = vsub.f32 %v1087, %v1099
        %v1103 = vsub.f32 %v1088, %v1100
        %v1104 = vmul.f32 %v1101, %v1101
        %v1105 = vmul.f32 %v1102, %v1102
        %v1106 = vmul.f32 %v1103, %v1103
        %1107 = vadd.xlane.f32.xlu0 %v1104
        %v1108 = vpop.xlane.xlu0 %1107
        %1109 = vadd.xlane.f32.xlu0 %v1105
        %v1110 = vpop.xlane.xlu0 %1109
        %1111 = vadd.xlane.f32.xlu0 %v1106
        %v1112 = vpop.xlane.xlu0 %1111
        %v1113 = vmul.f32 %v1108, %v1097
        %v1114 = vmul.f32 %v1110, %v1097
        %v1115 = vmul.f32 %v1112, %v1097
        %v1116 = vadd.f32 %v1113, 1e-05
        %v1117 = vadd.f32 %v1114, 1e-05
        %v1118 = vadd.f32 %v1115, 1e-05
        %v1119 = vrsqrt.pop %v1116
        %v1120 = vrsqrt.pop %v1117
        %v1121 = vrsqrt.pop %v1118
        %v1122 = vmul.f32 %v1101, %v1119
        %v1123 = vmul.f32 %v1102, %v1120
        %v1124 = vmul.f32 %v1103, %v1121
        %v1126 = vlaneseq
        %v1127 = vshrl.u32 %v1126, 7
        %v1128 = vsub.s32 0, %v1127
        %v1129 = vrot.slane %v1089, %v1128
        %v1131 = vmul.f32 %v1122, %v1129
        %v1132 = vmul.f32 %v1123, %v1129
        %v1133 = vmul.f32 %v1124, %v1129
        %v1135 = vlaneseq
        %v1136 = vshrl.u32 %v1135, 7
        %v1137 = vsub.s32 0, %v1136
        %v1138 = vrot.slane %v1090, %v1137
        %v1140 = vadd.f32 %v1131, %v1138
        %v1141 = vadd.f32 %v1132, %v1138
        %v1142 = vadd.f32 %v1133, %v1138
        %v1143 = vpack.c.bf16 %v1141, %v1140
        %v1144 = vpack.c.bf16 %v1142, %v1142
        %v1145 = vld [vmem:[%s832] sm:$0xff]
        %v1146 = vld [vmem:[%s832 + $0x8] sm:$0xf]
        %v1147 = vld [vmem:[%s832 + $0xc] sm:$0xff]
        %v1148 = vld [vmem:[%s832 + $0x14] sm:$0xf]
        %v1149 = vld [vmem:[%s832 + $0x18] sm:$0xff]
        %v1150 = vld [vmem:[%s832 + $0x20] sm:$0xf]
        %v1151 = vld [vmem:[%s832 + $0x24] sm:$0xff]
        %v1152 = vld [vmem:[%s832 + $0x2c] sm:$0xf]
        %v1153 = vld [vmem:[%s832 + $0x30] sm:$0xff]
        %v1154 = vld [vmem:[%s832 + $0x38] sm:$0xf]
        %v1155 = vld [vmem:[%s832 + $0x3c] sm:$0xff]
        %v1156 = vld [vmem:[%s832 + $0x44] sm:$0xf]
        %v1157 = vld [vmem:[%s832 + $0x48] sm:$0xff]
        %v1158 = vld [vmem:[%s832 + $0x50] sm:$0xf]
        %v1159 = vld [vmem:[%s832 + $0x54] sm:$0xff]
        %v1160 = vld [vmem:[%s832 + $0x5c] sm:$0xf]
        %v1161 = vld [vmem:[%s832 + $0x60] sm:$0xff]
        %v1162 = vld [vmem:[%s832 + $0x68] sm:$0xf]
        %v1163 = vld [vmem:[%s832 + $0x6c] sm:$0xff]
        %v1164 = vld [vmem:[%s832 + $0x74] sm:$0xf]
        %v1165 = vld [vmem:[%s832 + $0x78] sm:$0xff]
        %v1166 = vld [vmem:[%s832 + $0x80] sm:$0xf]
        %v1167 = vld [vmem:[%s832 + $0x84] sm:$0xff]
        %v1168 = vld [vmem:[%s832 + $0x8c] sm:$0xf]
        %v1169 = vld [vmem:[%s832 + $0x90] sm:$0xff]
        %v1170 = vld [vmem:[%s832 + $0x98] sm:$0xf]
        %v1171 = vld [vmem:[%s832 + $0x9c] sm:$0xff]
        %v1172 = vld [vmem:[%s832 + $0xa4] sm:$0xf]
        %v1173 = vld [vmem:[%s832 + $0xa8] sm:$0xff]
        %v1174 = vld [vmem:[%s832 + $0xb0] sm:$0xf]
        %v1175 = vld [vmem:[%s832 + $0xb4] sm:$0xff]
        %v1176 = vld [vmem:[%s832 + $0xbc] sm:$0xf]
        %v1177 = vld [vmem:[%s968] sm:$0x7]
        %v1179 = vlaneseq
        %v1180 = vshrl.u32 %v1179, 7
        %v1181 = vsub.s32 0, %v1180
        %v1182 = vrot.slane %v1177, %v1181
        %v1183 = vlaneseq
        %v1184 = vshrl.u32 %v1183, 7
        %v1185 = vsub.s32 1, %v1184
        %v1186 = vrot.slane %v1177, %v1185
        %v1187 = vlaneseq
        %v1188 = vshrl.u32 %v1187, 7
        %v1189 = vsub.s32 2, %v1188
        %v1190 = vrot.slane %v1177, %v1189
        %v1226 = vunpack.c.l.b16 %v1145
        %v1227 = vunpack.c.h.b16 %v1145
        %v1228 = vunpack.c.l.b16 %v1146
        %v1229 = vunpack.c.l.b16 %v1147
        %v1230 = vunpack.c.h.b16 %v1147
        %v1231 = vunpack.c.l.b16 %v1148
        %v1232 = vunpack.c.l.b16 %v1149
        %v1233 = vunpack.c.h.b16 %v1149
        %v1234 = vunpack.c.l.b16 %v1150
        %v1235 = vunpack.c.l.b16 %v1151
        %v1236 = vunpack.c.h.b16 %v1151
        %v1237 = vunpack.c.l.b16 %v1152
        %v1238 = vunpack.c.l.b16 %v1153
        %v1239 = vunpack.c.h.b16 %v1153
        %v1240 = vunpack.c.l.b16 %v1154
        %v1241 = vunpack.c.l.b16 %v1155
        %v1242 = vunpack.c.h.b16 %v1155
        %v1243 = vunpack.c.l.b16 %v1156
        %v1244 = vunpack.c.l.b16 %v1157
        %v1245 = vunpack.c.h.b16 %v1157
        %v1246 = vunpack.c.l.b16 %v1158
        %v1247 = vunpack.c.l.b16 %v1159
        %v1248 = vunpack.c.h.b16 %v1159
        %v1249 = vunpack.c.l.b16 %v1160
        %v1250 = vunpack.c.l.b16 %v1161
        %v1251 = vunpack.c.h.b16 %v1161
        %v1252 = vunpack.c.l.b16 %v1162
        %v1253 = vunpack.c.l.b16 %v1163
        %v1254 = vunpack.c.h.b16 %v1163
        %v1255 = vunpack.c.l.b16 %v1164
        %v1256 = vunpack.c.l.b16 %v1165
        %v1257 = vunpack.c.h.b16 %v1165
        %v1258 = vunpack.c.l.b16 %v1166
        %v1259 = vunpack.c.l.b16 %v1167
        %v1260 = vunpack.c.h.b16 %v1167
        %v1261 = vunpack.c.l.b16 %v1168
        %v1262 = vunpack.c.l.b16 %v1169
        %v1263 = vunpack.c.h.b16 %v1169
        %v1264 = vunpack.c.l.b16 %v1170
        %v1265 = vunpack.c.l.b16 %v1171
        %v1266 = vunpack.c.h.b16 %v1171
        %v1267 = vunpack.c.l.b16 %v1172
        %v1268 = vunpack.c.l.b16 %v1173
        %v1269 = vunpack.c.h.b16 %v1173
        %v1270 = vunpack.c.l.b16 %v1174
        %v1271 = vunpack.c.l.b16 %v1175
        %v1272 = vunpack.c.h.b16 %v1175
        %v1273 = vunpack.c.l.b16 %v1176
        %v1274 = vpack.c.b16 %v1229, %v1226
        %v1275 = vpack.c.b16 %v1230, %v1227
        %v1276 = vpack.c.b16 %v1231, %v1228
        %v1277 = vpack.c.b16 %v1235, %v1232
        %v1278 = vpack.c.b16 %v1236, %v1233
        %v1279 = vpack.c.b16 %v1237, %v1234
        %v1280 = vpack.c.b16 %v1241, %v1238
        %v1281 = vpack.c.b16 %v1242, %v1239
        %v1282 = vpack.c.b16 %v1243, %v1240
        %v1283 = vpack.c.b16 %v1247, %v1244
        %v1284 = vpack.c.b16 %v1248, %v1245
        %v1285 = vpack.c.b16 %v1249, %v1246
        %v1286 = vpack.c.b16 %v1253, %v1250
        %v1287 = vpack.c.b16 %v1254, %v1251
        %v1288 = vpack.c.b16 %v1255, %v1252
        %v1289 = vpack.c.b16 %v1259, %v1256
        %v1290 = vpack.c.b16 %v1260, %v1257
        %v1291 = vpack.c.b16 %v1261, %v1258
        %v1292 = vpack.c.b16 %v1265, %v1262
        %v1293 = vpack.c.b16 %v1266, %v1263
        %v1294 = vpack.c.b16 %v1267, %v1264
        %v1295 = vpack.c.b16 %v1271, %v1268
        %v1296 = vpack.c.b16 %v1272, %v1269
        %v1297 = vpack.c.b16 %v1273, %v1270
        %1322 = vmatprep.subr.bf16.mxu0 %v1296
        %1323 = vmatpush1.bf16.msra.mxu0 %v1295
        %1324 = vmatprep.subr.bf16.mxu0 %v1293
        %1325 = vmatpush1.bf16.msra.mxu0 %v1292
        %1326 = vmatprep.subr.bf16.mxu0 %v1290
        %1327 = vmatpush1.bf16.msra.mxu0 %v1289
        %1328 = vmatprep.subr.bf16.mxu0 %v1287
        %1329 = vmatpush1.bf16.msra.mxu0 %v1286
        %1330 = vmatprep.subr.bf16.mxu0 %v1284
        %1331 = vmatpush1.bf16.msra.mxu0 %v1283
        %1332 = vmatprep.subr.bf16.mxu0 %v1281
        %1333 = vmatpush1.bf16.msra.mxu0 %v1280
        %1334 = vmatprep.subr.bf16.mxu0 %v1278
        %1335 = vmatpush1.bf16.msra.mxu0 %v1277
        %1336 = vmatprep.subr.bf16.mxu0 %v1275
        %1337 = vmatpush1.bf16.msra.mxu0 %v1274
        %1338 = vmatprep.subr.bf16.mxu0 0
        %1339 = vmatpush2.bf16.msra.mxu0 0
        %1340 = vmatprep.subr.bf16.mxu0 0
        %1341 = vmatpush2.bf16.msra.mxu0 0
        %1342 = vmatprep.subr.bf16.mxu0 0
        %1343 = vmatpush2.bf16.msra.mxu0 0
        %1344 = vmatprep.subr.bf16.mxu0 0
        %1345 = vmatpush2.bf16.msra.mxu0 0
        %1346 = vmatprep.subr.bf16.mxu0 0
        %1347 = vmatpush2.bf16.msra.mxu0 0
        %1348 = vmatprep.subr.bf16.mxu0 0
        %1349 = vmatpush2.bf16.msra.mxu0 0
        %1350 = vmatprep.subr.bf16.mxu0 0
        %1351 = vmatpush2.bf16.msra.mxu0 0
        %1352 = vmatprep.subr.bf16.mxu0 0
        %1353 = vmatpush2.bf16.msra.mxu0 0
        %1354 = vmatprep.mubr.bf16.mxu0 0
        %1355 = vmatmul.mubr.bf16.gmra.mxu0 %v1143
        %v1356 = vpop.f32.mrf.mxu0
        %v1357 = vadd.f32 %v1182, %v1356
        %v1358 = vpop.f32.mrf.mxu0
        %v1359 = vadd.f32 %v1186, %v1358
        %v1360 = vpop.f32.mrf.mxu0
        %v1361 = vadd.f32 %v1182, %v1360
        %v1362 = vpop.f32.mrf.mxu0
        %v1363 = vadd.f32 %v1186, %v1362
        %1364 = vmatprep.mubr.bf16.mxu0 0
        %1365 = vmatmul.mubr.bf16.gmra.mxu0 %v1144
        %v1366 = vpop.f32.mrf.mxu0
        %v1367 = vadd.f32 %v1182, %v1366
        %v1368 = vpop.f32.mrf.mxu0
        %v1369 = vadd.f32 %v1186, %v1368
        %v1370 = vpop.f32.mrf.mxu0
        %v1371 = vpop.f32.mrf.mxu0
        %1372 = vdwg.mxu0
        %1373 = vmatprep.subr.bf16.mxu0 0
        %1374 = vmatpush1.bf16.msra.mxu0 %v1297
        %1375 = vmatprep.subr.bf16.mxu0 0
        %1376 = vmatpush1.bf16.msra.mxu0 %v1294
        %1377 = vmatprep.subr.bf16.mxu0 0
        %1378 = vmatpush1.bf16.msra.mxu0 %v1291
        %1379 = vmatprep.subr.bf16.mxu0 0
        %1380 = vmatpush1.bf16.msra.mxu0 %v1288
        %1381 = vmatprep.subr.bf16.mxu0 0
        %1382 = vmatpush1.bf16.msra.mxu0 %v1285
        %1383 = vmatprep.subr.bf16.mxu0 0
        %1384 = vmatpush1.bf16.msra.mxu0 %v1282
        %1385 = vmatprep.subr.bf16.mxu0 0
        %1386 = vmatpush1.bf16.msra.mxu0 %v1279
        %1387 = vmatprep.subr.bf16.mxu0 0
        %1388 = vmatpush1.bf16.msra.mxu0 %v1276
        %1389 = vmatprep.subr.bf16.mxu0 0
        %1390 = vmatpush2.bf16.msra.mxu0 0
        %1391 = vmatprep.subr.bf16.mxu0 0
        %1392 = vmatpush2.bf16.msra.mxu0 0
        %1393 = vmatprep.subr.bf16.mxu0 0
        %1394 = vmatpush2.bf16.msra.mxu0 0
        %1395 = vmatprep.subr.bf16.mxu0 0
        %1396 = vmatpush2.bf16.msra.mxu0 0
        %1397 = vmatprep.subr.bf16.mxu0 0
        %1398 = vmatpush2.bf16.msra.mxu0 0
        %1399 = vmatprep.subr.bf16.mxu0 0
        %1400 = vmatpush2.bf16.msra.mxu0 0
        %1401 = vmatprep.subr.bf16.mxu0 0
        %1402 = vmatpush2.bf16.msra.mxu0 0
        %1403 = vmatprep.subr.bf16.mxu0 0
        %1404 = vmatpush2.bf16.msra.mxu0 0
        %1405 = vmatprep.mubr.bf16.mxu0 0
        %1406 = vmatmul.mubr.bf16.gmra.mxu0 %v1143
        %v1407 = vpop.f32.mrf.mxu0
        %v1408 = vadd.f32 %v1190, %v1407
        %v1409 = vpop.f32.mrf.mxu0
        %v1410 = vpop.f32.mrf.mxu0
        %v1411 = vadd.f32 %v1190, %v1410
        %v1412 = vpop.f32.mrf.mxu0
        %1413 = vmatprep.mubr.bf16.mxu0 0
        %1414 = vmatmul.mubr.bf16.gmra.mxu0 %v1144
        %v1415 = vpop.f32.mrf.mxu0
        %v1416 = vadd.f32 %v1190, %v1415
        %v1417 = vpop.f32.mrf.mxu0
        %v1418 = vpop.f32.mrf.mxu0
        %v1419 = vpop.f32.mrf.mxu0
        %1420 = vdwg.mxu0
        %1424 = vrot.lane.b32.xlu0 %v1357, 96
        %v1425 = vpop.permute.xlu0 %1424
        %1426 = vrot.lane.b32.xlu0 %v1361, 96
        %v1427 = vpop.permute.xlu0 %1426
        %1428 = vrot.lane.b32.xlu0 %v1367, 96
        %v1429 = vpop.permute.xlu0 %1428
        %1433 = vrot.lane.b32.xlu0 %v1357, 64
        %v1434 = vpop.permute.xlu0 %1433
        %1435 = vrot.lane.b32.xlu0 %v1361, 64
        %v1436 = vpop.permute.xlu0 %1435
        %1437 = vrot.lane.b32.xlu0 %v1367, 64
        %v1438 = vpop.permute.xlu0 %1437
        %1442 = vrot.lane.b32.xlu0 %v1357, 32
        %v1443 = vpop.permute.xlu0 %1442
        %1444 = vrot.lane.b32.xlu0 %v1361, 32
        %v1445 = vpop.permute.xlu0 %1444
        %1446 = vrot.lane.b32.xlu0 %v1367, 32
        %v1447 = vpop.permute.xlu0 %1446
        %v1451 = vcombine.low %v1357, %v1434
        %v1452 = vcombine.high %v1357, %v1434
        %v1454 = vunpack.c.l.s4 1983009808
        %v1455 = vunpack.c.0.s8 %v1454
        %v1456 = vlaneseq
        %v1457 = vshrl.u32 %v1456, 7
        %v1458 = vsub.s32 %v1455, %v1457
        %v1459 = vrot.slane %v1451, %v1458
        %v1461 = vunpack.c.l.s4 1983009808
        %v1462 = vunpack.c.0.s8 %v1461
        %v1463 = vlaneseq
        %v1464 = vshrl.u32 %v1463, 7
        %v1465 = vsub.s32 %v1462, %v1464
        %v1466 = vrot.slane %v1452, %v1465
        %v1467 = vcombine.low %v1425, %v1443
        %v1468 = vcombine.high %v1425, %v1443
        %v1470 = vunpack.c.l.s4 1983009808
        %v1471 = vunpack.c.0.s8 %v1470
        %v1472 = vlaneseq
        %v1473 = vshrl.u32 %v1472, 7
        %v1474 = vsub.s32 %v1471, %v1473
        %v1475 = vrot.slane %v1467, %v1474
        %v1477 = vunpack.c.l.s4 1983009808
        %v1478 = vunpack.c.0.s8 %v1477
        %v1479 = vlaneseq
        %v1480 = vshrl.u32 %v1479, 7
        %v1481 = vsub.s32 %v1478, %v1480
        %v1482 = vrot.slane %v1468, %v1481
        %v1483 = vcombine.low %v1459, %v1475
        %v1484 = vcombine.high %v1459, %v1475
        %v1486 = vunpack.c.l.s4 1934713408
        %v1487 = vunpack.c.0.s8 %v1486
        %v1488 = vlaneseq
        %v1489 = vshrl.u32 %v1488, 7
        %v1490 = vsub.s32 %v1487, %v1489
        %v1491 = vrot.slane %v1483, %v1490
        %v1493 = vunpack.c.l.s4 1934713408
        %v1494 = vunpack.c.0.s8 %v1493
        %v1495 = vlaneseq
        %v1496 = vshrl.u32 %v1495, 7
        %v1497 = vsub.s32 %v1494, %v1496
        %v1498 = vrot.slane %v1484, %v1497
        %v1499 = vcombine.low %v1466, %v1482
        %v1500 = vcombine.high %v1466, %v1482
        %v1502 = vunpack.c.l.s4 1934713408
        %v1503 = vunpack.c.0.s8 %v1502
        %v1504 = vlaneseq
        %v1505 = vshrl.u32 %v1504, 7
        %v1506 = vsub.s32 %v1503, %v1505
        %v1507 = vrot.slane %v1499, %v1506
        %v1509 = vunpack.c.l.s4 1934713408
        %v1510 = vunpack.c.0.s8 %v1509
        %v1511 = vlaneseq
        %v1512 = vshrl.u32 %v1511, 7
        %v1513 = vsub.s32 %v1510, %v1512
        %v1514 = vrot.slane %v1500, %v1513
        %v1515 = vcombine.high %v1491, 0.0
        %v1516 = vcombine.high %v1498, 0.0
        %v1517 = vcombine.high %v1507, 0.0
        %v1518 = vcombine.high %v1514, 0.0
        %v1519 = vcombine.low %v1361, %v1436
        %v1520 = vcombine.high %v1361, %v1436
        %v1522 = vunpack.c.l.s4 1983009808
        %v1523 = vunpack.c.0.s8 %v1522
        %v1524 = vlaneseq
        %v1525 = vshrl.u32 %v1524, 7
        %v1526 = vsub.s32 %v1523, %v1525
        %v1527 = vrot.slane %v1519, %v1526
        %v1529 = vunpack.c.l.s4 1983009808
        %v1530 = vunpack.c.0.s8 %v1529
        %v1531 = vlaneseq
        %v1532 = vshrl.u32 %v1531, 7
        %v1533 = vsub.s32 %v1530, %v1532
        %v1534 = vrot.slane %v1520, %v1533
        %v1535 = vcombine.low %v1427, %v1445
        %v1536 = vcombine.high %v1427, %v1445
        %v1538 = vunpack.c.l.s4 1983009808
        %v1539 = vunpack.c.0.s8 %v1538
        %v1540 = vlaneseq
        %v1541 = vshrl.u32 %v1540, 7
        %v1542 = vsub.s32 %v1539, %v1541
        %v1543 = vrot.slane %v1535, %v1542
        %v1545 = vunpack.c.l.s4 1983009808
        %v1546 = vunpack.c.0.s8 %v1545
        %v1547 = vlaneseq
        %v1548 = vshrl.u32 %v1547, 7
        %v1549 = vsub.s32 %v1546, %v1548
        %v1550 = vrot.slane %v1536, %v1549
        %v1551 = vcombine.low %v1527, %v1543
        %v1552 = vcombine.high %v1527, %v1543
        %v1554 = vunpack.c.l.s4 1934713408
        %v1555 = vunpack.c.0.s8 %v1554
        %v1556 = vlaneseq
        %v1557 = vshrl.u32 %v1556, 7
        %v1558 = vsub.s32 %v1555, %v1557
        %v1559 = vrot.slane %v1551, %v1558
        %v1561 = vunpack.c.l.s4 1934713408
        %v1562 = vunpack.c.0.s8 %v1561
        %v1563 = vlaneseq
        %v1564 = vshrl.u32 %v1563, 7
        %v1565 = vsub.s32 %v1562, %v1564
        %v1566 = vrot.slane %v1552, %v1565
        %v1567 = vcombine.low %v1534, %v1550
        %v1568 = vcombine.high %v1534, %v1550
        %v1570 = vunpack.c.l.s4 1934713408
        %v1571 = vunpack.c.0.s8 %v1570
        %v1572 = vlaneseq
        %v1573 = vshrl.u32 %v1572, 7
        %v1574 = vsub.s32 %v1571, %v1573
        %v1575 = vrot.slane %v1567, %v1574
        %v1577 = vunpack.c.l.s4 1934713408
        %v1578 = vunpack.c.0.s8 %v1577
        %v1579 = vlaneseq
        %v1580 = vshrl.u32 %v1579, 7
        %v1581 = vsub.s32 %v1578, %v1580
        %v1582 = vrot.slane %v1568, %v1581
        %v1583 = vcombine.high %v1559, 0.0
        %v1584 = vcombine.high %v1566, 0.0
        %v1585 = vcombine.high %v1575, 0.0
        %v1586 = vcombine.high %v1582, 0.0
        %v1587 = vcombine.low %v1367, %v1438
        %v1588 = vcombine.high %v1367, %v1438
        %v1590 = vunpack.c.l.s4 1983009808
        %v1591 = vunpack.c.0.s8 %v1590
        %v1592 = vlaneseq
        %v1593 = vshrl.u32 %v1592, 7
        %v1594 = vsub.s32 %v1591, %v1593
        %v1595 = vrot.slane %v1587, %v1594
        %v1597 = vunpack.c.l.s4 1983009808
        %v1598 = vunpack.c.0.s8 %v1597
        %v1599 = vlaneseq
        %v1600 = vshrl.u32 %v1599, 7
        %v1601 = vsub.s32 %v1598, %v1600
        %v1602 = vrot.slane %v1588, %v1601
        %v1603 = vcombine.low %v1429, %v1447
        %v1604 = vcombine.high %v1429, %v1447
        %v1606 = vunpack.c.l.s4 1983009808
        %v1607 = vunpack.c.0.s8 %v1606
        %v1608 = vlaneseq
        %v1609 = vshrl.u32 %v1608, 7
        %v1610 = vsub.s32 %v1607, %v1609
        %v1611 = vrot.slane %v1603, %v1610
        %v1613 = vunpack.c.l.s4 1983009808
        %v1614 = vunpack.c.0.s8 %v1613
        %v1615 = vlaneseq
        %v1616 = vshrl.u32 %v1615, 7
        %v1617 = vsub.s32 %v1614, %v1616
        %v1618 = vrot.slane %v1604, %v1617
        %v1619 = vcombine.low %v1595, %v1611
        %v1620 = vcombine.high %v1595, %v1611
        %v1622 = vunpack.c.l.s4 1934713408
        %v1623 = vunpack.c.0.s8 %v1622
        %v1624 = vlaneseq
        %v1625 = vshrl.u32 %v1624, 7
        %v1626 = vsub.s32 %v1623, %v1625
        %v1627 = vrot.slane %v1619, %v1626
        %v1629 = vunpack.c.l.s4 1934713408
        %v1630 = vunpack.c.0.s8 %v1629
        %v1631 = vlaneseq
        %v1632 = vshrl.u32 %v1631, 7
        %v1633 = vsub.s32 %v1630, %v1632
        %v1634 = vrot.slane %v1620, %v1633
        %v1635 = vcombine.low %v1602, %v1618
        %v1636 = vcombine.high %v1602, %v1618
        %v1638 = vunpack.c.l.s4 1934713408
        %v1639 = vunpack.c.0.s8 %v1638
        %v1640 = vlaneseq
        %v1641 = vshrl.u32 %v1640, 7
        %v1642 = vsub.s32 %v1639, %v1641
        %v1643 = vrot.slane %v1635, %v1642
        %v1645 = vunpack.c.l.s4 1934713408
        %v1646 = vunpack.c.0.s8 %v1645
        %v1647 = vlaneseq
        %v1648 = vshrl.u32 %v1647, 7
        %v1649 = vsub.s32 %v1646, %v1648
        %v1650 = vrot.slane %v1636, %v1649
        %v1651 = vcombine.high %v1627, 0.0
        %v1652 = vcombine.high %v1634, 0.0
        %v1653 = vcombine.high %v1643, 0.0
        %v1654 = vcombine.high %v1650, 0.0
        %v1655 = vcombine.low %v1491, %v1498
        %v1657 = vunpack.c.l.s4 1983009808
        %v1658 = vunpack.c.0.s8 %v1657
        %v1659 = vlaneseq
        %v1660 = vshrl.u32 %v1659, 7
        %v1661 = vsub.s32 %v1658, %v1660
        %v1662 = vrot.slane %v1655, %v1661
        %v1663 = vcombine.low %v1515, %v1516
        %v1665 = vunpack.c.l.s4 1983009808
        %v1666 = vunpack.c.0.s8 %v1665
        %v1667 = vlaneseq
        %v1668 = vshrl.u32 %v1667, 7
        %v1669 = vsub.s32 %v1666, %v1668
        %v1670 = vrot.slane %v1663, %v1669
        %v1671 = vcombine.low %v1507, %v1514
        %v1673 = vunpack.c.l.s4 1983009808
        %v1674 = vunpack.c.0.s8 %v1673
        %v1675 = vlaneseq
        %v1676 = vshrl.u32 %v1675, 7
        %v1677 = vsub.s32 %v1674, %v1676
        %v1678 = vrot.slane %v1671, %v1677
        %v1679 = vcombine.low %v1517, %v1518
        %v1681 = vunpack.c.l.s4 1983009808
        %v1682 = vunpack.c.0.s8 %v1681
        %v1683 = vlaneseq
        %v1684 = vshrl.u32 %v1683, 7
        %v1685 = vsub.s32 %v1682, %v1684
        %v1686 = vrot.slane %v1679, %v1685
        %v1687 = vcombine.low %v1662, %v1670
        %v1688 = vcombine.high %v1662, %v1670
        %v1690 = vunpack.c.l.s4 1934713408
        %v1691 = vunpack.c.0.s8 %v1690
        %v1692 = vlaneseq
        %v1693 = vshrl.u32 %v1692, 7
        %v1694 = vsub.s32 %v1691, %v1693
        %v1695 = vrot.slane %v1687, %v1694
        %v1697 = vunpack.c.l.s4 1934713408
        %v1698 = vunpack.c.0.s8 %v1697
        %v1699 = vlaneseq
        %v1700 = vshrl.u32 %v1699, 7
        %v1701 = vsub.s32 %v1698, %v1700
        %v1702 = vrot.slane %v1688, %v1701
        %v1703 = vcombine.low %v1678, %v1686
        %v1704 = vcombine.high %v1678, %v1686
        %v1706 = vunpack.c.l.s4 1934713408
        %v1707 = vunpack.c.0.s8 %v1706
        %v1708 = vlaneseq
        %v1709 = vshrl.u32 %v1708, 7
        %v1710 = vsub.s32 %v1707, %v1709
        %v1711 = vrot.slane %v1703, %v1710
        %v1713 = vunpack.c.l.s4 1934713408
        %v1714 = vunpack.c.0.s8 %v1713
        %v1715 = vlaneseq
        %v1716 = vshrl.u32 %v1715, 7
        %v1717 = vsub.s32 %v1714, %v1716
        %v1718 = vrot.slane %v1704, %v1717
        %v1719 = vcombine.low %v1695, %v1711
        %v1720 = vcombine.high %v1695, %v1711
        %v1721 = vcombine.low %v1702, %v1718
        %v1722 = vcombine.high %v1702, %v1718
        %v1723 = vcombine.low %v1559, %v1566
        %v1725 = vunpack.c.l.s4 1983009808
        %v1726 = vunpack.c.0.s8 %v1725
        %v1727 = vlaneseq
        %v1728 = vshrl.u32 %v1727, 7
        %v1729 = vsub.s32 %v1726, %v1728
        %v1730 = vrot.slane %v1723, %v1729
        %v1731 = vcombine.low %v1583, %v1584
        %v1733 = vunpack.c.l.s4 1983009808
        %v1734 = vunpack.c.0.s8 %v1733
        %v1735 = vlaneseq
        %v1736 = vshrl.u32 %v1735, 7
        %v1737 = vsub.s32 %v1734, %v1736
        %v1738 = vrot.slane %v1731, %v1737
        %v1739 = vcombine.low %v1575, %v1582
        %v1741 = vunpack.c.l.s4 1983009808
        %v1742 = vunpack.c.0.s8 %v1741
        %v1743 = vlaneseq
        %v1744 = vshrl.u32 %v1743, 7
        %v1745 = vsub.s32 %v1742, %v1744
        %v1746 = vrot.slane %v1739, %v1745
        %v1747 = vcombine.low %v1585, %v1586
        %v1749 = vunpack.c.l.s4 1983009808
        %v1750 = vunpack.c.0.s8 %v1749
        %v1751 = vlaneseq
        %v1752 = vshrl.u32 %v1751, 7
        %v1753 = vsub.s32 %v1750, %v1752
        %v1754 = vrot.slane %v1747, %v1753
        %v1755 = vcombine.low %v1730, %v1738
        %v1756 = vcombine.high %v1730, %v1738
        %v1758 = vunpack.c.l.s4 1934713408
        %v1759 = vunpack.c.0.s8 %v1758
        %v1760 = vlaneseq
        %v1761 = vshrl.u32 %v1760, 7
        %v1762 = vsub.s32 %v1759, %v1761
        %v1763 = vrot.slane %v1755, %v1762
        %v1765 = vunpack.c.l.s4 1934713408
        %v1766 = vunpack.c.0.s8 %v1765
        %v1767 = vlaneseq
        %v1768 = vshrl.u32 %v1767, 7
        %v1769 = vsub.s32 %v1766, %v1768
        %v1770 = vrot.slane %v1756, %v1769
        %v1771 = vcombine.low %v1746, %v1754
        %v1772 = vcombine.high %v1746, %v1754
        %v1774 = vunpack.c.l.s4 1934713408
        %v1775 = vunpack.c.0.s8 %v1774
        %v1776 = vlaneseq
        %v1777 = vshrl.u32 %v1776, 7
        %v1778 = vsub.s32 %v1775, %v1777
        %v1779 = vrot.slane %v1771, %v1778
        %v1781 = vunpack.c.l.s4 1934713408
        %v1782 = vunpack.c.0.s8 %v1781
        %v1783 = vlaneseq
        %v1784 = vshrl.u32 %v1783, 7
        %v1785 = vsub.s32 %v1782, %v1784
        %v1786 = vrot.slane %v1772, %v1785
        %v1787 = vcombine.low %v1763, %v1779
        %v1788 = vcombine.high %v1763, %v1779
        %v1789 = vcombine.low %v1770, %v1786
        %v1790 = vcombine.high %v1770, %v1786
        %v1791 = vcombine.low %v1627, %v1634
        %v1793 = vunpack.c.l.s4 1983009808
        %v1794 = vunpack.c.0.s8 %v1793
        %v1795 = vlaneseq
        %v1796 = vshrl.u32 %v1795, 7
        %v1797 = vsub.s32 %v1794, %v1796
        %v1798 = vrot.slane %v1791, %v1797
        %v1799 = vcombine.low %v1651, %v1652
        %v1801 = vunpack.c.l.s4 1983009808
        %v1802 = vunpack.c.0.s8 %v1801
        %v1803 = vlaneseq
        %v1804 = vshrl.u32 %v1803, 7
        %v1805 = vsub.s32 %v1802, %v1804
        %v1806 = vrot.slane %v1799, %v1805
        %v1807 = vcombine.low %v1643, %v1650
        %v1809 = vunpack.c.l.s4 1983009808
        %v1810 = vunpack.c.0.s8 %v1809
        %v1811 = vlaneseq
        %v1812 = vshrl.u32 %v1811, 7
        %v1813 = vsub.s32 %v1810, %v1812
        %v1814 = vrot.slane %v1807, %v1813
        %v1815 = vcombine.low %v1653, %v1654
        %v1817 = vunpack.c.l.s4 1983009808
        %v1818 = vunpack.c.0.s8 %v1817
        %v1819 = vlaneseq
        %v1820 = vshrl.u32 %v1819, 7
        %v1821 = vsub.s32 %v1818, %v1820
        %v1822 = vrot.slane %v1815, %v1821
        %v1823 = vcombine.low %v1798, %v1806
        %v1824 = vcombine.high %v1798, %v1806
        %v1826 = vunpack.c.l.s4 1934713408
        %v1827 = vunpack.c.0.s8 %v1826
        %v1828 = vlaneseq
        %v1829 = vshrl.u32 %v1828, 7
        %v1830 = vsub.s32 %v1827, %v1829
        %v1831 = vrot.slane %v1823, %v1830
        %v1833 = vunpack.c.l.s4 1934713408
        %v1834 = vunpack.c.0.s8 %v1833
        %v1835 = vlaneseq
        %v1836 = vshrl.u32 %v1835, 7
        %v1837 = vsub.s32 %v1834, %v1836
        %v1838 = vrot.slane %v1824, %v1837
        %v1839 = vcombine.low %v1814, %v1822
        %v1840 = vcombine.high %v1814, %v1822
        %v1842 = vunpack.c.l.s4 1934713408
        %v1843 = vunpack.c.0.s8 %v1842
        %v1844 = vlaneseq
        %v1845 = vshrl.u32 %v1844, 7
        %v1846 = vsub.s32 %v1843, %v1845
        %v1847 = vrot.slane %v1839, %v1846
        %v1849 = vunpack.c.l.s4 1934713408
        %v1850 = vunpack.c.0.s8 %v1849
        %v1851 = vlaneseq
        %v1852 = vshrl.u32 %v1851, 7
        %v1853 = vsub.s32 %v1850, %v1852
        %v1854 = vrot.slane %v1840, %v1853
        %v1855 = vcombine.low %v1831, %v1847
        %v1856 = vcombine.high %v1831, %v1847
        %v1857 = vcombine.low %v1838, %v1854
        %v1858 = vcombine.high %v1838, %v1854
        %v1859 = vpack.c.bf16 %v1787, %v1719
        %v1860 = vpack.c.bf16 %v1855, %v1855
        %v1861 = vpack.c.bf16 %v1788, %v1720
        %v1862 = vpack.c.bf16 %v1856, %v1856
        %v1863 = vpack.c.bf16 %v1789, %v1721
        %v1864 = vpack.c.bf16 %v1857, %v1857
        %v1865 = vpack.c.bf16 %v1790, %v1722
        %v1866 = vpack.c.bf16 %v1858, %v1858
        %1870 = vrot.lane.b32.xlu0 %v1359, 96
        %v1871 = vpop.permute.xlu0 %1870
        %1872 = vrot.lane.b32.xlu0 %v1363, 96
        %v1873 = vpop.permute.xlu0 %1872
        %1874 = vrot.lane.b32.xlu0 %v1369, 96
        %v1875 = vpop.permute.xlu0 %1874
        %1879 = vrot.lane.b32.xlu0 %v1359, 64
        %v1880 = vpop.permute.xlu0 %1879
        %1881 = vrot.lane.b32.xlu0 %v1363, 64
        %v1882 = vpop.permute.xlu0 %1881
        %1883 = vrot.lane.b32.xlu0 %v1369, 64
        %v1884 = vpop.permute.xlu0 %1883
        %1888 = vrot.lane.b32.xlu0 %v1359, 32
        %v1889 = vpop.permute.xlu0 %1888
        %1890 = vrot.lane.b32.xlu0 %v1363, 32
        %v1891 = vpop.permute.xlu0 %1890
        %1892 = vrot.lane.b32.xlu0 %v1369, 32
        %v1893 = vpop.permute.xlu0 %1892
        %v1897 = vcombine.low %v1359, %v1880
        %v1898 = vcombine.high %v1359, %v1880
        %v1900 = vunpack.c.l.s4 1983009808
        %v1901 = vunpack.c.0.s8 %v1900
        %v1902 = vlaneseq
        %v1903 = vshrl.u32 %v1902, 7
        %v1904 = vsub.s32 %v1901, %v1903
        %v1905 = vrot.slane %v1897, %v1904
        %v1907 = vunpack.c.l.s4 1983009808
        %v1908 = vunpack.c.0.s8 %v1907
        %v1909 = vlaneseq
        %v1910 = vshrl.u32 %v1909, 7
        %v1911 = vsub.s32 %v1908, %v1910
        %v1912 = vrot.slane %v1898, %v1911
        %v1913 = vcombine.low %v1871, %v1889
        %v1914 = vcombine.high %v1871, %v1889
        %v1916 = vunpack.c.l.s4 1983009808
        %v1917 = vunpack.c.0.s8 %v1916
        %v1918 = vlaneseq
        %v1919 = vshrl.u32 %v1918, 7
        %v1920 = vsub.s32 %v1917, %v1919
        %v1921 = vrot.slane %v1913, %v1920
        %v1923 = vunpack.c.l.s4 1983009808
        %v1924 = vunpack.c.0.s8 %v1923
        %v1925 = vlaneseq
        %v1926 = vshrl.u32 %v1925, 7
        %v1927 = vsub.s32 %v1924, %v1926
        %v1928 = vrot.slane %v1914, %v1927
        %v1929 = vcombine.low %v1905, %v1921
        %v1930 = vcombine.high %v1905, %v1921
        %v1932 = vunpack.c.l.s4 1934713408
        %v1933 = vunpack.c.0.s8 %v1932
        %v1934 = vlaneseq
        %v1935 = vshrl.u32 %v1934, 7
        %v1936 = vsub.s32 %v1933, %v1935
        %v1937 = vrot.slane %v1929, %v1936
        %v1939 = vunpack.c.l.s4 1934713408
        %v1940 = vunpack.c.0.s8 %v1939
        %v1941 = vlaneseq
        %v1942 = vshrl.u32 %v1941, 7
        %v1943 = vsub.s32 %v1940, %v1942
        %v1944 = vrot.slane %v1930, %v1943
        %v1945 = vcombine.low %v1912, %v1928
        %v1946 = vcombine.high %v1912, %v1928
        %v1948 = vunpack.c.l.s4 1934713408
        %v1949 = vunpack.c.0.s8 %v1948
        %v1950 = vlaneseq
        %v1951 = vshrl.u32 %v1950, 7
        %v1952 = vsub.s32 %v1949, %v1951
        %v1953 = vrot.slane %v1945, %v1952
        %v1955 = vunpack.c.l.s4 1934713408
        %v1956 = vunpack.c.0.s8 %v1955
        %v1957 = vlaneseq
        %v1958 = vshrl.u32 %v1957, 7
        %v1959 = vsub.s32 %v1956, %v1958
        %v1960 = vrot.slane %v1946, %v1959
        %v1961 = vcombine.high %v1937, 0.0
        %v1962 = vcombine.high %v1944, 0.0
        %v1963 = vcombine.high %v1953, 0.0
        %v1964 = vcombine.high %v1960, 0.0
        %v1965 = vcombine.low %v1363, %v1882
        %v1966 = vcombine.high %v1363, %v1882
        %v1968 = vunpack.c.l.s4 1983009808
        %v1969 = vunpack.c.0.s8 %v1968
        %v1970 = vlaneseq
        %v1971 = vshrl.u32 %v1970, 7
        %v1972 = vsub.s32 %v1969, %v1971
        %v1973 = vrot.slane %v1965, %v1972
        %v1975 = vunpack.c.l.s4 1983009808
        %v1976 = vunpack.c.0.s8 %v1975
        %v1977 = vlaneseq
        %v1978 = vshrl.u32 %v1977, 7
        %v1979 = vsub.s32 %v1976, %v1978
        %v1980 = vrot.slane %v1966, %v1979
        %v1981 = vcombine.low %v1873, %v1891
        %v1982 = vcombine.high %v1873, %v1891
        %v1984 = vunpack.c.l.s4 1983009808
        %v1985 = vunpack.c.0.s8 %v1984
        %v1986 = vlaneseq
        %v1987 = vshrl.u32 %v1986, 7
        %v1988 = vsub.s32 %v1985, %v1987
        %v1989 = vrot.slane %v1981, %v1988
        %v1991 = vunpack.c.l.s4 1983009808
        %v1992 = vunpack.c.0.s8 %v1991
        %v1993 = vlaneseq
        %v1994 = vshrl.u32 %v1993, 7
        %v1995 = vsub.s32 %v1992, %v1994
        %v1996 = vrot.slane %v1982, %v1995
        %v1997 = vcombine.low %v1973, %v1989
        %v1998 = vcombine.high %v1973, %v1989
        %v2000 = vunpack.c.l.s4 1934713408
        %v2001 = vunpack.c.0.s8 %v2000
        %v2002 = vlaneseq
        %v2003 = vshrl.u32 %v2002, 7
        %v2004 = vsub.s32 %v2001, %v2003
        %v2005 = vrot.slane %v1997, %v2004
        %v2007 = vunpack.c.l.s4 1934713408
        %v2008 = vunpack.c.0.s8 %v2007
        %v2009 = vlaneseq
        %v2010 = vshrl.u32 %v2009, 7
        %v2011 = vsub.s32 %v2008, %v2010
        %v2012 = vrot.slane %v1998, %v2011
        %v2013 = vcombine.low %v1980, %v1996
        %v2014 = vcombine.high %v1980, %v1996
        %v2016 = vunpack.c.l.s4 1934713408
        %v2017 = vunpack.c.0.s8 %v2016
        %v2018 = vlaneseq
        %v2019 = vshrl.u32 %v2018, 7
        %v2020 = vsub.s32 %v2017, %v2019
        %v2021 = vrot.slane %v2013, %v2020
        %v2023 = vunpack.c.l.s4 1934713408
        %v2024 = vunpack.c.0.s8 %v2023
        %v2025 = vlaneseq
        %v2026 = vshrl.u32 %v2025, 7
        %v2027 = vsub.s32 %v2024, %v2026
        %v2028 = vrot.slane %v2014, %v2027
        %v2029 = vcombine.high %v2005, 0.0
        %v2030 = vcombine.high %v2012, 0.0
        %v2031 = vcombine.high %v2021, 0.0
        %v2032 = vcombine.high %v2028, 0.0
        %v2033 = vcombine.low %v1369, %v1884
        %v2034 = vcombine.high %v1369, %v1884
        %v2036 = vunpack.c.l.s4 1983009808
        %v2037 = vunpack.c.0.s8 %v2036
        %v2038 = vlaneseq
        %v2039 = vshrl.u32 %v2038, 7
        %v2040 = vsub.s32 %v2037, %v2039
        %v2041 = vrot.slane %v2033, %v2040
        %v2043 = vunpack.c.l.s4 1983009808
        %v2044 = vunpack.c.0.s8 %v2043
        %v2045 = vlaneseq
        %v2046 = vshrl.u32 %v2045, 7
        %v2047 = vsub.s32 %v2044, %v2046
        %v2048 = vrot.slane %v2034, %v2047
        %v2049 = vcombine.low %v1875, %v1893
        %v2050 = vcombine.high %v1875, %v1893
        %v2052 = vunpack.c.l.s4 1983009808
        %v2053 = vunpack.c.0.s8 %v2052
        %v2054 = vlaneseq
        %v2055 = vshrl.u32 %v2054, 7
        %v2056 = vsub.s32 %v2053, %v2055
        %v2057 = vrot.slane %v2049, %v2056
        %v2059 = vunpack.c.l.s4 1983009808
        %v2060 = vunpack.c.0.s8 %v2059
        %v2061 = vlaneseq
        %v2062 = vshrl.u32 %v2061, 7
        %v2063 = vsub.s32 %v2060, %v2062
        %v2064 = vrot.slane %v2050, %v2063
        %v2065 = vcombine.low %v2041, %v2057
        %v2066 = vcombine.high %v2041, %v2057
        %v2068 = vunpack.c.l.s4 1934713408
        %v2069 = vunpack.c.0.s8 %v2068
        %v2070 = vlaneseq
        %v2071 = vshrl.u32 %v2070, 7
        %v2072 = vsub.s32 %v2069, %v2071
        %v2073 = vrot.slane %v2065, %v2072
        %v2075 = vunpack.c.l.s4 1934713408
        %v2076 = vunpack.c.0.s8 %v2075
        %v2077 = vlaneseq
        %v2078 = vshrl.u32 %v2077, 7
        %v2079 = vsub.s32 %v2076, %v2078
        %v2080 = vrot.slane %v2066, %v2079
        %v2081 = vcombine.low %v2048, %v2064
        %v2082 = vcombine.high %v2048, %v2064
        %v2084 = vunpack.c.l.s4 1934713408
        %v2085 = vunpack.c.0.s8 %v2084
        %v2086 = vlaneseq
        %v2087 = vshrl.u32 %v2086, 7
        %v2088 = vsub.s32 %v2085, %v2087
        %v2089 = vrot.slane %v2081, %v2088
        %v2091 = vunpack.c.l.s4 1934713408
        %v2092 = vunpack.c.0.s8 %v2091
        %v2093 = vlaneseq
        %v2094 = vshrl.u32 %v2093, 7
        %v2095 = vsub.s32 %v2092, %v2094
        %v2096 = vrot.slane %v2082, %v2095
        %v2097 = vcombine.high %v2073, 0.0
        %v2098 = vcombine.high %v2080, 0.0
        %v2099 = vcombine.high %v2089, 0.0
        %v2100 = vcombine.high %v2096, 0.0
        %v2101 = vcombine.low %v1937, %v1944
        %v2103 = vunpack.c.l.s4 1983009808
        %v2104 = vunpack.c.0.s8 %v2103
        %v2105 = vlaneseq
        %v2106 = vshrl.u32 %v2105, 7
        %v2107 = vsub.s32 %v2104, %v2106
        %v2108 = vrot.slane %v2101, %v2107
        %v2109 = vcombine.low %v1961, %v1962
        %v2111 = vunpack.c.l.s4 1983009808
        %v2112 = vunpack.c.0.s8 %v2111
        %v2113 = vlaneseq
        %v2114 = vshrl.u32 %v2113, 7
        %v2115 = vsub.s32 %v2112, %v2114
        %v2116 = vrot.slane %v2109, %v2115
        %v2117 = vcombine.low %v1953, %v1960
        %v2119 = vunpack.c.l.s4 1983009808
        %v2120 = vunpack.c.0.s8 %v2119
        %v2121 = vlaneseq
        %v2122 = vshrl.u32 %v2121, 7
        %v2123 = vsub.s32 %v2120, %v2122
        %v2124 = vrot.slane %v2117, %v2123
        %v2125 = vcombine.low %v1963, %v1964
        %v2127 = vunpack.c.l.s4 1983009808
        %v2128 = vunpack.c.0.s8 %v2127
        %v2129 = vlaneseq
        %v2130 = vshrl.u32 %v2129, 7
        %v2131 = vsub.s32 %v2128, %v2130
        %v2132 = vrot.slane %v2125, %v2131
        %v2133 = vcombine.low %v2108, %v2116
        %v2134 = vcombine.high %v2108, %v2116
        %v2136 = vunpack.c.l.s4 1934713408
        %v2137 = vunpack.c.0.s8 %v2136
        %v2138 = vlaneseq
        %v2139 = vshrl.u32 %v2138, 7
        %v2140 = vsub.s32 %v2137, %v2139
        %v2141 = vrot.slane %v2133, %v2140
        %v2143 = vunpack.c.l.s4 1934713408
        %v2144 = vunpack.c.0.s8 %v2143
        %v2145 = vlaneseq
        %v2146 = vshrl.u32 %v2145, 7
        %v2147 = vsub.s32 %v2144, %v2146
        %v2148 = vrot.slane %v2134, %v2147
        %v2149 = vcombine.low %v2124, %v2132
        %v2150 = vcombine.high %v2124, %v2132
        %v2152 = vunpack.c.l.s4 1934713408
        %v2153 = vunpack.c.0.s8 %v2152
        %v2154 = vlaneseq
        %v2155 = vshrl.u32 %v2154, 7
        %v2156 = vsub.s32 %v2153, %v2155
        %v2157 = vrot.slane %v2149, %v2156
        %v2159 = vunpack.c.l.s4 1934713408
        %v2160 = vunpack.c.0.s8 %v2159
        %v2161 = vlaneseq
        %v2162 = vshrl.u32 %v2161, 7
        %v2163 = vsub.s32 %v2160, %v2162
        %v2164 = vrot.slane %v2150, %v2163
        %v2165 = vcombine.low %v2141, %v2157
        %v2166 = vcombine.high %v2141, %v2157
        %v2167 = vcombine.low %v2148, %v2164
        %v2168 = vcombine.high %v2148, %v2164
        %v2169 = vcombine.low %v2005, %v2012
        %v2171 = vunpack.c.l.s4 1983009808
        %v2172 = vunpack.c.0.s8 %v2171
        %v2173 = vlaneseq
        %v2174 = vshrl.u32 %v2173, 7
        %v2175 = vsub.s32 %v2172, %v2174
        %v2176 = vrot.slane %v2169, %v2175
        %v2177 = vcombine.low %v2029, %v2030
        %v2179 = vunpack.c.l.s4 1983009808
        %v2180 = vunpack.c.0.s8 %v2179
        %v2181 = vlaneseq
        %v2182 = vshrl.u32 %v2181, 7
        %v2183 = vsub.s32 %v2180, %v2182
        %v2184 = vrot.slane %v2177, %v2183
        %v2185 = vcombine.low %v2021, %v2028
        %v2187 = vunpack.c.l.s4 1983009808
        %v2188 = vunpack.c.0.s8 %v2187
        %v2189 = vlaneseq
        %v2190 = vshrl.u32 %v2189, 7
        %v2191 = vsub.s32 %v2188, %v2190
        %v2192 = vrot.slane %v2185, %v2191
        %v2193 = vcombine.low %v2031, %v2032
        %v2195 = vunpack.c.l.s4 1983009808
        %v2196 = vunpack.c.0.s8 %v2195
        %v2197 = vlaneseq
        %v2198 = vshrl.u32 %v2197, 7
        %v2199 = vsub.s32 %v2196, %v2198
        %v2200 = vrot.slane %v2193, %v2199
        %v2201 = vcombine.low %v2176, %v2184
        %v2202 = vcombine.high %v2176, %v2184
        %v2204 = vunpack.c.l.s4 1934713408
        %v2205 = vunpack.c.0.s8 %v2204
        %v2206 = vlaneseq
        %v2207 = vshrl.u32 %v2206, 7
        %v2208 = vsub.s32 %v2205, %v2207
        %v2209 = vrot.slane %v2201, %v2208
        %v2211 = vunpack.c.l.s4 1934713408
        %v2212 = vunpack.c.0.s8 %v2211
        %v2213 = vlaneseq
        %v2214 = vshrl.u32 %v2213, 7
        %v2215 = vsub.s32 %v2212, %v2214
        %v2216 = vrot.slane %v2202, %v2215
        %v2217 = vcombine.low %v2192, %v2200
        %v2218 = vcombine.high %v2192, %v2200
        %v2220 = vunpack.c.l.s4 1934713408
        %v2221 = vunpack.c.0.s8 %v2220
        %v2222 = vlaneseq
        %v2223 = vshrl.u32 %v2222, 7
        %v2224 = vsub.s32 %v2221, %v2223
        %v2225 = vrot.slane %v2217, %v2224
        %v2227 = vunpack.c.l.s4 1934713408
        %v2228 = vunpack.c.0.s8 %v2227
        %v2229 = vlaneseq
        %v2230 = vshrl.u32 %v2229, 7
        %v2231 = vsub.s32 %v2228, %v2230
        %v2232 = vrot.slane %v2218, %v2231
        %v2233 = vcombine.low %v2209, %v2225
        %v2234 = vcombine.high %v2209, %v2225
        %v2235 = vcombine.low %v2216, %v2232
        %v2236 = vcombine.high %v2216, %v2232
        %v2237 = vcombine.low %v2073, %v2080
        %v2239 = vunpack.c.l.s4 1983009808
        %v2240 = vunpack.c.0.s8 %v2239
        %v2241 = vlaneseq
        %v2242 = vshrl.u32 %v2241, 7
        %v2243 = vsub.s32 %v2240, %v2242
        %v2244 = vrot.slane %v2237, %v2243
        %v2245 = vcombine.low %v2097, %v2098
        %v2247 = vunpack.c.l.s4 1983009808
        %v2248 = vunpack.c.0.s8 %v2247
        %v2249 = vlaneseq
        %v2250 = vshrl.u32 %v2249, 7
        %v2251 = vsub.s32 %v2248, %v2250
        %v2252 = vrot.slane %v2245, %v2251
        %v2253 = vcombine.low %v2089, %v2096
        %v2255 = vunpack.c.l.s4 1983009808
        %v2256 = vunpack.c.0.s8 %v2255
        %v2257 = vlaneseq
        %v2258 = vshrl.u32 %v2257, 7
        %v2259 = vsub.s32 %v2256, %v2258
        %v2260 = vrot.slane %v2253, %v2259
        %v2261 = vcombine.low %v2099, %v2100
        %v2263 = vunpack.c.l.s4 1983009808
        %v2264 = vunpack.c.0.s8 %v2263
        %v2265 = vlaneseq
        %v2266 = vshrl.u32 %v2265, 7
        %v2267 = vsub.s32 %v2264, %v2266
        %v2268 = vrot.slane %v2261, %v2267
        %v2269 = vcombine.low %v2244, %v2252
        %v2270 = vcombine.high %v2244, %v2252
        %v2272 = vunpack.c.l.s4 1934713408
        %v2273 = vunpack.c.0.s8 %v2272
        %v2274 = vlaneseq
        %v2275 = vshrl.u32 %v2274, 7
        %v2276 = vsub.s32 %v2273, %v2275
        %v2277 = vrot.slane %v2269, %v2276
        %v2279 = vunpack.c.l.s4 1934713408
        %v2280 = vunpack.c.0.s8 %v2279
        %v2281 = vlaneseq
        %v2282 = vshrl.u32 %v2281, 7
        %v2283 = vsub.s32 %v2280, %v2282
        %v2284 = vrot.slane %v2270, %v2283
        %v2285 = vcombine.low %v2260, %v2268
        %v2286 = vcombine.high %v2260, %v2268
        %v2288 = vunpack.c.l.s4 1934713408
        %v2289 = vunpack.c.0.s8 %v2288
        %v2290 = vlaneseq
        %v2291 = vshrl.u32 %v2290, 7
        %v2292 = vsub.s32 %v2289, %v2291
        %v2293 = vrot.slane %v2285, %v2292
        %v2295 = vunpack.c.l.s4 1934713408
        %v2296 = vunpack.c.0.s8 %v2295
        %v2297 = vlaneseq
        %v2298 = vshrl.u32 %v2297, 7
        %v2299 = vsub.s32 %v2296, %v2298
        %v2300 = vrot.slane %v2286, %v2299
        %v2301 = vcombine.low %v2277, %v2293
        %v2302 = vcombine.high %v2277, %v2293
        %v2303 = vcombine.low %v2284, %v2300
        %v2304 = vcombine.high %v2284, %v2300
        %v2305 = vpack.c.bf16 %v2233, %v2165
        %v2306 = vpack.c.bf16 %v2301, %v2301
        %v2307 = vpack.c.bf16 %v2234, %v2166
        %v2308 = vpack.c.bf16 %v2302, %v2302
        %v2309 = vpack.c.bf16 %v2235, %v2167
        %v2310 = vpack.c.bf16 %v2303, %v2303
        %v2311 = vpack.c.bf16 %v2236, %v2168
        %v2312 = vpack.c.bf16 %v2304, %v2304
        %2316 = vrot.lane.b32.xlu0 %v1408, 96
        %v2317 = vpop.permute.xlu0 %2316
        %2318 = vrot.lane.b32.xlu0 %v1411, 96
        %v2319 = vpop.permute.xlu0 %2318
        %2320 = vrot.lane.b32.xlu0 %v1416, 96
        %v2321 = vpop.permute.xlu0 %2320
        %2325 = vrot.lane.b32.xlu0 %v1408, 64
        %v2326 = vpop.permute.xlu0 %2325
        %2327 = vrot.lane.b32.xlu0 %v1411, 64
        %v2328 = vpop.permute.xlu0 %2327
        %2329 = vrot.lane.b32.xlu0 %v1416, 64
        %v2330 = vpop.permute.xlu0 %2329
        %2334 = vrot.lane.b32.xlu0 %v1408, 32
        %v2335 = vpop.permute.xlu0 %2334
        %2336 = vrot.lane.b32.xlu0 %v1411, 32
        %v2337 = vpop.permute.xlu0 %2336
        %2338 = vrot.lane.b32.xlu0 %v1416, 32
        %v2339 = vpop.permute.xlu0 %2338
        %v2343 = vcombine.low %v1408, %v2326
        %v2344 = vcombine.high %v1408, %v2326
        %v2346 = vunpack.c.l.s4 1983009808
        %v2347 = vunpack.c.0.s8 %v2346
        %v2348 = vlaneseq
        %v2349 = vshrl.u32 %v2348, 7
        %v2350 = vsub.s32 %v2347, %v2349
        %v2351 = vrot.slane %v2343, %v2350
        %v2353 = vunpack.c.l.s4 1983009808
        %v2354 = vunpack.c.0.s8 %v2353
        %v2355 = vlaneseq
        %v2356 = vshrl.u32 %v2355, 7
        %v2357 = vsub.s32 %v2354, %v2356
        %v2358 = vrot.slane %v2344, %v2357
        %v2359 = vcombine.low %v2317, %v2335
        %v2360 = vcombine.high %v2317, %v2335
        %v2362 = vunpack.c.l.s4 1983009808
        %v2363 = vunpack.c.0.s8 %v2362
        %v2364 = vlaneseq
        %v2365 = vshrl.u32 %v2364, 7
        %v2366 = vsub.s32 %v2363, %v2365
        %v2367 = vrot.slane %v2359, %v2366
        %v2369 = vunpack.c.l.s4 1983009808
        %v2370 = vunpack.c.0.s8 %v2369
        %v2371 = vlaneseq
        %v2372 = vshrl.u32 %v2371, 7
        %v2373 = vsub.s32 %v2370, %v2372
        %v2374 = vrot.slane %v2360, %v2373
        %v2375 = vcombine.low %v2351, %v2367
        %v2376 = vcombine.high %v2351, %v2367
        %v2378 = vunpack.c.l.s4 1934713408
        %v2379 = vunpack.c.0.s8 %v2378
        %v2380 = vlaneseq
        %v2381 = vshrl.u32 %v2380, 7
        %v2382 = vsub.s32 %v2379, %v2381
        %v2383 = vrot.slane %v2375, %v2382
        %v2385 = vunpack.c.l.s4 1934713408
        %v2386 = vunpack.c.0.s8 %v2385
        %v2387 = vlaneseq
        %v2388 = vshrl.u32 %v2387, 7
        %v2389 = vsub.s32 %v2386, %v2388
        %v2390 = vrot.slane %v2376, %v2389
        %v2391 = vcombine.low %v2358, %v2374
        %v2392 = vcombine.high %v2358, %v2374
        %v2394 = vunpack.c.l.s4 1934713408
        %v2395 = vunpack.c.0.s8 %v2394
        %v2396 = vlaneseq
        %v2397 = vshrl.u32 %v2396, 7
        %v2398 = vsub.s32 %v2395, %v2397
        %v2399 = vrot.slane %v2391, %v2398
        %v2401 = vunpack.c.l.s4 1934713408
        %v2402 = vunpack.c.0.s8 %v2401
        %v2403 = vlaneseq
        %v2404 = vshrl.u32 %v2403, 7
        %v2405 = vsub.s32 %v2402, %v2404
        %v2406 = vrot.slane %v2392, %v2405
        %v2407 = vcombine.high %v2383, 0.0
        %v2408 = vcombine.high %v2390, 0.0
        %v2409 = vcombine.high %v2399, 0.0
        %v2410 = vcombine.high %v2406, 0.0
        %v2411 = vcombine.low %v1411, %v2328
        %v2412 = vcombine.high %v1411, %v2328
        %v2414 = vunpack.c.l.s4 1983009808
        %v2415 = vunpack.c.0.s8 %v2414
        %v2416 = vlaneseq
        %v2417 = vshrl.u32 %v2416, 7
        %v2418 = vsub.s32 %v2415, %v2417
        %v2419 = vrot.slane %v2411, %v2418
        %v2421 = vunpack.c.l.s4 1983009808
        %v2422 = vunpack.c.0.s8 %v2421
        %v2423 = vlaneseq
        %v2424 = vshrl.u32 %v2423, 7
        %v2425 = vsub.s32 %v2422, %v2424
        %v2426 = vrot.slane %v2412, %v2425
        %v2427 = vcombine.low %v2319, %v2337
        %v2428 = vcombine.high %v2319, %v2337
        %v2430 = vunpack.c.l.s4 1983009808
        %v2431 = vunpack.c.0.s8 %v2430
        %v2432 = vlaneseq
        %v2433 = vshrl.u32 %v2432, 7
        %v2434 = vsub.s32 %v2431, %v2433
        %v2435 = vrot.slane %v2427, %v2434
        %v2437 = vunpack.c.l.s4 1983009808
        %v2438 = vunpack.c.0.s8 %v2437
        %v2439 = vlaneseq
        %v2440 = vshrl.u32 %v2439, 7
        %v2441 = vsub.s32 %v2438, %v2440
        %v2442 = vrot.slane %v2428, %v2441
        %v2443 = vcombine.low %v2419, %v2435
        %v2444 = vcombine.high %v2419, %v2435
        %v2446 = vunpack.c.l.s4 1934713408
        %v2447 = vunpack.c.0.s8 %v2446
        %v2448 = vlaneseq
        %v2449 = vshrl.u32 %v2448, 7
        %v2450 = vsub.s32 %v2447, %v2449
        %v2451 = vrot.slane %v2443, %v2450
        %v2453 = vunpack.c.l.s4 1934713408
        %v2454 = vunpack.c.0.s8 %v2453
        %v2455 = vlaneseq
        %v2456 = vshrl.u32 %v2455, 7
        %v2457 = vsub.s32 %v2454, %v2456
        %v2458 = vrot.slane %v2444, %v2457
        %v2459 = vcombine.low %v2426, %v2442
        %v2460 = vcombine.high %v2426, %v2442
        %v2462 = vunpack.c.l.s4 1934713408
        %v2463 = vunpack.c.0.s8 %v2462
        %v2464 = vlaneseq
        %v2465 = vshrl.u32 %v2464, 7
        %v2466 = vsub.s32 %v2463, %v2465
        %v2467 = vrot.slane %v2459, %v2466
        %v2469 = vunpack.c.l.s4 1934713408
        %v2470 = vunpack.c.0.s8 %v2469
        %v2471 = vlaneseq
        %v2472 = vshrl.u32 %v2471, 7
        %v2473 = vsub.s32 %v2470, %v2472
        %v2474 = vrot.slane %v2460, %v2473
        %v2475 = vcombine.high %v2451, 0.0
        %v2476 = vcombine.high %v2458, 0.0
        %v2477 = vcombine.high %v2467, 0.0
        %v2478 = vcombine.high %v2474, 0.0
        %v2479 = vcombine.low %v1416, %v2330
        %v2480 = vcombine.high %v1416, %v2330
        %v2482 = vunpack.c.l.s4 1983009808
        %v2483 = vunpack.c.0.s8 %v2482
        %v2484 = vlaneseq
        %v2485 = vshrl.u32 %v2484, 7
        %v2486 = vsub.s32 %v2483, %v2485
        %v2487 = vrot.slane %v2479, %v2486
        %v2489 = vunpack.c.l.s4 1983009808
        %v2490 = vunpack.c.0.s8 %v2489
        %v2491 = vlaneseq
        %v2492 = vshrl.u32 %v2491, 7
        %v2493 = vsub.s32 %v2490, %v2492
        %v2494 = vrot.slane %v2480, %v2493
        %v2495 = vcombine.low %v2321, %v2339
        %v2496 = vcombine.high %v2321, %v2339
        %v2498 = vunpack.c.l.s4 1983009808
        %v2499 = vunpack.c.0.s8 %v2498
        %v2500 = vlaneseq
        %v2501 = vshrl.u32 %v2500, 7
        %v2502 = vsub.s32 %v2499, %v2501
        %v2503 = vrot.slane %v2495, %v2502
        %v2505 = vunpack.c.l.s4 1983009808
        %v2506 = vunpack.c.0.s8 %v2505
        %v2507 = vlaneseq
        %v2508 = vshrl.u32 %v2507, 7
        %v2509 = vsub.s32 %v2506, %v2508
        %v2510 = vrot.slane %v2496, %v2509
        %v2511 = vcombine.low %v2487, %v2503
        %v2512 = vcombine.high %v2487, %v2503
        %v2514 = vunpack.c.l.s4 1934713408
        %v2515 = vunpack.c.0.s8 %v2514
        %v2516 = vlaneseq
        %v2517 = vshrl.u32 %v2516, 7
        %v2518 = vsub.s32 %v2515, %v2517
        %v2519 = vrot.slane %v2511, %v2518
        %v2521 = vunpack.c.l.s4 1934713408
        %v2522 = vunpack.c.0.s8 %v2521
        %v2523 = vlaneseq
        %v2524 = vshrl.u32 %v2523, 7
        %v2525 = vsub.s32 %v2522, %v2524
        %v2526 = vrot.slane %v2512, %v2525
        %v2527 = vcombine.low %v2494, %v2510
        %v2528 = vcombine.high %v2494, %v2510
        %v2530 = vunpack.c.l.s4 1934713408
        %v2531 = vunpack.c.0.s8 %v2530
        %v2532 = vlaneseq
        %v2533 = vshrl.u32 %v2532, 7
        %v2534 = vsub.s32 %v2531, %v2533
        %v2535 = vrot.slane %v2527, %v2534
        %v2537 = vunpack.c.l.s4 1934713408
        %v2538 = vunpack.c.0.s8 %v2537
        %v2539 = vlaneseq
        %v2540 = vshrl.u32 %v2539, 7
        %v2541 = vsub.s32 %v2538, %v2540
        %v2542 = vrot.slane %v2528, %v2541
        %v2543 = vcombine.high %v2519, 0.0
        %v2544 = vcombine.high %v2526, 0.0
        %v2545 = vcombine.high %v2535, 0.0
        %v2546 = vcombine.high %v2542, 0.0
        %v2547 = vcombine.low %v2383, %v2390
        %v2549 = vunpack.c.l.s4 1983009808
        %v2550 = vunpack.c.0.s8 %v2549
        %v2551 = vlaneseq
        %v2552 = vshrl.u32 %v2551, 7
        %v2553 = vsub.s32 %v2550, %v2552
        %v2554 = vrot.slane %v2547, %v2553
        %v2555 = vcombine.low %v2407, %v2408
        %v2557 = vunpack.c.l.s4 1983009808
        %v2558 = vunpack.c.0.s8 %v2557
        %v2559 = vlaneseq
        %v2560 = vshrl.u32 %v2559, 7
        %v2561 = vsub.s32 %v2558, %v2560
        %v2562 = vrot.slane %v2555, %v2561
        %v2563 = vcombine.low %v2399, %v2406
        %v2565 = vunpack.c.l.s4 1983009808
        %v2566 = vunpack.c.0.s8 %v2565
        %v2567 = vlaneseq
        %v2568 = vshrl.u32 %v2567, 7
        %v2569 = vsub.s32 %v2566, %v2568
        %v2570 = vrot.slane %v2563, %v2569
        %v2571 = vcombine.low %v2409, %v2410
        %v2573 = vunpack.c.l.s4 1983009808
        %v2574 = vunpack.c.0.s8 %v2573
        %v2575 = vlaneseq
        %v2576 = vshrl.u32 %v2575, 7
        %v2577 = vsub.s32 %v2574, %v2576
        %v2578 = vrot.slane %v2571, %v2577
        %v2579 = vcombine.low %v2554, %v2562
        %v2580 = vcombine.high %v2554, %v2562
        %v2582 = vunpack.c.l.s4 1934713408
        %v2583 = vunpack.c.0.s8 %v2582
        %v2584 = vlaneseq
        %v2585 = vshrl.u32 %v2584, 7
        %v2586 = vsub.s32 %v2583, %v2585
        %v2587 = vrot.slane %v2579, %v2586
        %v2589 = vunpack.c.l.s4 1934713408
        %v2590 = vunpack.c.0.s8 %v2589
        %v2591 = vlaneseq
        %v2592 = vshrl.u32 %v2591, 7
        %v2593 = vsub.s32 %v2590, %v2592
        %v2594 = vrot.slane %v2580, %v2593
        %v2595 = vcombine.low %v2570, %v2578
        %v2596 = vcombine.high %v2570, %v2578
        %v2598 = vunpack.c.l.s4 1934713408
        %v2599 = vunpack.c.0.s8 %v2598
        %v2600 = vlaneseq
        %v2601 = vshrl.u32 %v2600, 7
        %v2602 = vsub.s32 %v2599, %v2601
        %v2603 = vrot.slane %v2595, %v2602
        %v2605 = vunpack.c.l.s4 1934713408
        %v2606 = vunpack.c.0.s8 %v2605
        %v2607 = vlaneseq
        %v2608 = vshrl.u32 %v2607, 7
        %v2609 = vsub.s32 %v2606, %v2608
        %v2610 = vrot.slane %v2596, %v2609
        %v2611 = vcombine.low %v2587, %v2603
        %v2612 = vcombine.high %v2587, %v2603
        %v2613 = vcombine.low %v2594, %v2610
        %v2614 = vcombine.high %v2594, %v2610
        %v2615 = vcombine.low %v2451, %v2458
        %v2617 = vunpack.c.l.s4 1983009808
        %v2618 = vunpack.c.0.s8 %v2617
        %v2619 = vlaneseq
        %v2620 = vshrl.u32 %v2619, 7
        %v2621 = vsub.s32 %v2618, %v2620
        %v2622 = vrot.slane %v2615, %v2621
        %v2623 = vcombine.low %v2475, %v2476
        %v2625 = vunpack.c.l.s4 1983009808
        %v2626 = vunpack.c.0.s8 %v2625
        %v2627 = vlaneseq
        %v2628 = vshrl.u32 %v2627, 7
        %v2629 = vsub.s32 %v2626, %v2628
        %v2630 = vrot.slane %v2623, %v2629
        %v2631 = vcombine.low %v2467, %v2474
        %v2633 = vunpack.c.l.s4 1983009808
        %v2634 = vunpack.c.0.s8 %v2633
        %v2635 = vlaneseq
        %v2636 = vshrl.u32 %v2635, 7
        %v2637 = vsub.s32 %v2634, %v2636
        %v2638 = vrot.slane %v2631, %v2637
        %v2639 = vcombine.low %v2477, %v2478
        %v2641 = vunpack.c.l.s4 1983009808
        %v2642 = vunpack.c.0.s8 %v2641
        %v2643 = vlaneseq
        %v2644 = vshrl.u32 %v2643, 7
        %v2645 = vsub.s32 %v2642, %v2644
        %v2646 = vrot.slane %v2639, %v2645
        %v2647 = vcombine.low %v2622, %v2630
        %v2648 = vcombine.high %v2622, %v2630
        %v2650 = vunpack.c.l.s4 1934713408
        %v2651 = vunpack.c.0.s8 %v2650
        %v2652 = vlaneseq
        %v2653 = vshrl.u32 %v2652, 7
        %v2654 = vsub.s32 %v2651, %v2653
        %v2655 = vrot.slane %v2647, %v2654
        %v2657 = vunpack.c.l.s4 1934713408
        %v2658 = vunpack.c.0.s8 %v2657
        %v2659 = vlaneseq
        %v2660 = vshrl.u32 %v2659, 7
        %v2661 = vsub.s32 %v2658, %v2660
        %v2662 = vrot.slane %v2648, %v2661
        %v2663 = vcombine.low %v2638, %v2646
        %v2664 = vcombine.high %v2638, %v2646
        %v2666 = vunpack.c.l.s4 1934713408
        %v2667 = vunpack.c.0.s8 %v2666
        %v2668 = vlaneseq
        %v2669 = vshrl.u32 %v2668, 7
        %v2670 = vsub.s32 %v2667, %v2669
        %v2671 = vrot.slane %v2663, %v2670
        %v2673 = vunpack.c.l.s4 1934713408
        %v2674 = vunpack.c.0.s8 %v2673
        %v2675 = vlaneseq
        %v2676 = vshrl.u32 %v2675, 7
        %v2677 = vsub.s32 %v2674, %v2676
        %v2678 = vrot.slane %v2664, %v2677
        %v2679 = vcombine.low %v2655, %v2671
        %v2680 = vcombine.high %v2655, %v2671
        %v2681 = vcombine.low %v2662, %v2678
        %v2682 = vcombine.high %v2662, %v2678
        %v2683 = vcombine.low %v2519, %v2526
        %v2685 = vunpack.c.l.s4 1983009808
        %v2686 = vunpack.c.0.s8 %v2685
        %v2687 = vlaneseq
        %v2688 = vshrl.u32 %v2687, 7
        %v2689 = vsub.s32 %v2686, %v2688
        %v2690 = vrot.slane %v2683, %v2689
        %v2691 = vcombine.low %v2543, %v2544
        %v2693 = vunpack.c.l.s4 1983009808
        %v2694 = vunpack.c.0.s8 %v2693
        %v2695 = vlaneseq
        %v2696 = vshrl.u32 %v2695, 7
        %v2697 = vsub.s32 %v2694, %v2696
        %v2698 = vrot.slane %v2691, %v2697
        %v2699 = vcombine.low %v2535, %v2542
        %v2701 = vunpack.c.l.s4 1983009808
        %v2702 = vunpack.c.0.s8 %v2701
        %v2703 = vlaneseq
        %v2704 = vshrl.u32 %v2703, 7
        %v2705 = vsub.s32 %v2702, %v2704
        %v2706 = vrot.slane %v2699, %v2705
        %v2707 = vcombine.low %v2545, %v2546
        %v2709 = vunpack.c.l.s4 1983009808
        %v2710 = vunpack.c.0.s8 %v2709
        %v2711 = vlaneseq
        %v2712 = vshrl.u32 %v2711, 7
        %v2713 = vsub.s32 %v2710, %v2712
        %v2714 = vrot.slane %v2707, %v2713
        %v2715 = vcombine.low %v2690, %v2698
        %v2716 = vcombine.high %v2690, %v2698
        %v2718 = vunpack.c.l.s4 1934713408
        %v2719 = vunpack.c.0.s8 %v2718
        %v2720 = vlaneseq
        %v2721 = vshrl.u32 %v2720, 7
        %v2722 = vsub.s32 %v2719, %v2721
        %v2723 = vrot.slane %v2715, %v2722
        %v2725 = vunpack.c.l.s4 1934713408
        %v2726 = vunpack.c.0.s8 %v2725
        %v2727 = vlaneseq
        %v2728 = vshrl.u32 %v2727, 7
        %v2729 = vsub.s32 %v2726, %v2728
        %v2730 = vrot.slane %v2716, %v2729
        %v2731 = vcombine.low %v2706, %v2714
        %v2732 = vcombine.high %v2706, %v2714
        %v2734 = vunpack.c.l.s4 1934713408
        %v2735 = vunpack.c.0.s8 %v2734
        %v2736 = vlaneseq
        %v2737 = vshrl.u32 %v2736, 7
        %v2738 = vsub.s32 %v2735, %v2737
        %v2739 = vrot.slane %v2731, %v2738
        %v2741 = vunpack.c.l.s4 1934713408
        %v2742 = vunpack.c.0.s8 %v2741
        %v2743 = vlaneseq
        %v2744 = vshrl.u32 %v2743, 7
        %v2745 = vsub.s32 %v2742, %v2744
        %v2746 = vrot.slane %v2732, %v2745
        %v2747 = vcombine.low %v2723, %v2739
        %v2748 = vcombine.high %v2723, %v2739
        %v2749 = vcombine.low %v2730, %v2746
        %v2750 = vcombine.high %v2730, %v2746
        %v2751 = vpack.c.bf16 %v2679, %v2611
        %v2752 = vpack.c.bf16 %v2747, %v2747
        %v2753 = vpack.c.bf16 %v2680, %v2612
        %v2754 = vpack.c.bf16 %v2748, %v2748
        %v2755 = vpack.c.bf16 %v2681, %v2613
        %v2756 = vpack.c.bf16 %v2749, %v2749
        %v2757 = vpack.c.bf16 %v2682, %v2614
        %v2758 = vpack.c.bf16 %v2750, %v2750
        %vm2759 = vcmask 261120
        %v2761 = vsel %vm2759, %v1859, 0
        %v2764 = vsel %vm2759, %v1860, 0
        %v2767 = vsel %vm2759, %v2305, 0
        %v2770 = vsel %vm2759, %v2306, 0
        %2772 = vmatprep.subr.bf16.mxu0 0
        %2773 = vmatpush1.bf16.xpose.msra.mxu0 0
        %2774 = vmatprep.subr.bf16.mxu0 0
        %2775 = vmatpush1.bf16.xpose.msra.mxu0 0
        %2776 = vmatprep.subr.bf16.mxu0 0
        %2777 = vmatpush1.bf16.xpose.msra.mxu0 0
        %2778 = vmatprep.subr.bf16.mxu0 0
        %2779 = vmatpush1.bf16.xpose.msra.mxu0 0
        %2780 = vmatprep.subr.bf16.mxu0 0
        %2781 = vmatpush1.bf16.xpose.msra.mxu0 0
        %2782 = vmatprep.subr.bf16.mxu0 0
        %2783 = vmatpush1.bf16.xpose.msra.mxu0 0
        %2784 = vmatprep.subr.bf16.mxu0 0
        %2785 = vmatpush1.bf16.xpose.msra.mxu0 %v2770
        %2786 = vmatprep.subr.bf16.mxu0 0
        %2787 = vmatpush1.bf16.xpose.msra.mxu0 %v2767
        %2788 = vmatprep.subr.bf16.mxu0 0
        %2789 = vmatpush2.bf16.xpose.msra.mxu0 0
        %2790 = vmatprep.subr.bf16.mxu0 0
        %2791 = vmatpush2.bf16.xpose.msra.mxu0 0
        %2792 = vmatprep.subr.bf16.mxu0 0
        %2793 = vmatpush2.bf16.xpose.msra.mxu0 0
        %2794 = vmatprep.subr.bf16.mxu0 0
        %2795 = vmatpush2.bf16.xpose.msra.mxu0 0
        %2796 = vmatprep.subr.bf16.mxu0 0
        %2797 = vmatpush2.bf16.xpose.msra.mxu0 0
        %2798 = vmatprep.subr.bf16.mxu0 0
        %2799 = vmatpush2.bf16.xpose.msra.mxu0 0
        %2800 = vmatprep.subr.bf16.mxu0 0
        %2801 = vmatpush2.bf16.xpose.msra.mxu0 0
        %2802 = vmatprep.subr.bf16.mxu0 0
        %2803 = vmatpush2.bf16.xpose.msra.mxu0 0
        %2804 = vmatprep.mubr.bf16.mxu0 0
        %2805 = vmatmul.mubr.bf16.gmra.mxu0 %v2761
        %v2806 = vpop.f32.mrf.mxu0
        %v2807 = vadd.f32 0.0, %v2806
        %v2808 = vpop.f32.mrf.mxu0
        %v2809 = vpop.f32.mrf.mxu0
        %v2810 = vadd.f32 0.0, %v2809
        %v2811 = vpop.f32.mrf.mxu0
        %2812 = vmatprep.mubr.bf16.mxu0 0
        %2813 = vmatmul.mubr.bf16.gmra.mxu0 %v2764
        %v2814 = vpop.f32.mrf.mxu0
        %v2815 = vadd.f32 0.0, %v2814
        %v2816 = vpop.f32.mrf.mxu0
        %v2817 = vpop.f32.mrf.mxu0
        %v2818 = vpop.f32.mrf.mxu0
        %2819 = vdwg.mxu0
        %v2821 = vsel %vm2759, %v1861, 0
        %v2824 = vsel %vm2759, %v1862, 0
        %v2827 = vsel %vm2759, %v2307, 0
        %v2830 = vsel %vm2759, %v2308, 0
        %2832 = vmatprep.subr.bf16.mxu0 0
        %2833 = vmatpush1.bf16.xpose.msra.mxu0 0
        %2834 = vmatprep.subr.bf16.mxu0 0
        %2835 = vmatpush1.bf16.xpose.msra.mxu0 0
        %2836 = vmatprep.subr.bf16.mxu0 0
        %2837 = vmatpush1.bf16.xpose.msra.mxu0 0
        %2838 = vmatprep.subr.bf16.mxu0 0
        %2839 = vmatpush1.bf16.xpose.msra.mxu0 0
        %2840 = vmatprep.subr.bf16.mxu0 0
        %2841 = vmatpush1.bf16.xpose.msra.mxu0 0
        %2842 = vmatprep.subr.bf16.mxu0 0
        %2843 = vmatpush1.bf16.xpose.msra.mxu0 0
        %2844 = vmatprep.subr.bf16.mxu0 0
        %2845 = vmatpush1.bf16.xpose.msra.mxu0 %v2830
        %2846 = vmatprep.subr.bf16.mxu0 0
        %2847 = vmatpush1.bf16.xpose.msra.mxu0 %v2827
        %2848 = vmatprep.subr.bf16.mxu0 0
        %2849 = vmatpush2.bf16.xpose.msra.mxu0 0
        %2850 = vmatprep.subr.bf16.mxu0 0
        %2851 = vmatpush2.bf16.xpose.msra.mxu0 0
        %2852 = vmatprep.subr.bf16.mxu0 0
        %2853 = vmatpush2.bf16.xpose.msra.mxu0 0
        %2854 = vmatprep.subr.bf16.mxu0 0
        %2855 = vmatpush2.bf16.xpose.msra.mxu0 0
        %2856 = vmatprep.subr.bf16.mxu0 0
        %2857 = vmatpush2.bf16.xpose.msra.mxu0 0
        %2858 = vmatprep.subr.bf16.mxu0 0
        %2859 = vmatpush2.bf16.xpose.msra.mxu0 0
        %2860 = vmatprep.subr.bf16.mxu0 0
        %2861 = vmatpush2.bf16.xpose.msra.mxu0 0
        %2862 = vmatprep.subr.bf16.mxu0 0
        %2863 = vmatpush2.bf16.xpose.msra.mxu0 0
        %2864 = vmatprep.mubr.bf16.mxu0 0
        %2865 = vmatmul.mubr.bf16.gmra.mxu0 %v2821
        %v2866 = vpop.f32.mrf.mxu0
        %v2867 = vadd.f32 0.0, %v2866
        %v2868 = vpop.f32.mrf.mxu0
        %v2869 = vpop.f32.mrf.mxu0
        %v2870 = vadd.f32 0.0, %v2869
        %v2871 = vpop.f32.mrf.mxu0
        %2872 = vmatprep.mubr.bf16.mxu0 0
        %2873 = vmatmul.mubr.bf16.gmra.mxu0 %v2824
        %v2874 = vpop.f32.mrf.mxu0
        %v2875 = vadd.f32 0.0, %v2874
        %v2876 = vpop.f32.mrf.mxu0
        %v2877 = vpop.f32.mrf.mxu0
        %v2878 = vpop.f32.mrf.mxu0
        %2879 = vdwg.mxu0
        %v2881 = vsel %vm2759, %v1863, 0
        %v2884 = vsel %vm2759, %v1864, 0
        %v2887 = vsel %vm2759, %v2309, 0
        %v2890 = vsel %vm2759, %v2310, 0
        %2892 = vmatprep.subr.bf16.mxu0 0
        %2893 = vmatpush1.bf16.xpose.msra.mxu0 0
        %2894 = vmatprep.subr.bf16.mxu0 0
        %2895 = vmatpush1.bf16.xpose.msra.mxu0 0
        %2896 = vmatprep.subr.bf16.mxu0 0
        %2897 = vmatpush1.bf16.xpose.msra.mxu0 0
        %2898 = vmatprep.subr.bf16.mxu0 0
        %2899 = vmatpush1.bf16.xpose.msra.mxu0 0
        %2900 = vmatprep.subr.bf16.mxu0 0
        %2901 = vmatpush1.bf16.xpose.msra.mxu0 0
        %2902 = vmatprep.subr.bf16.mxu0 0
        %2903 = vmatpush1.bf16.xpose.msra.mxu0 0
        %2904 = vmatprep.subr.bf16.mxu0 0
        %2905 = vmatpush1.bf16.xpose.msra.mxu0 %v2890
        %2906 = vmatprep.subr.bf16.mxu0 0
        %2907 = vmatpush1.bf16.xpose.msra.mxu0 %v2887
        %2908 = vmatprep.subr.bf16.mxu0 0
        %2909 = vmatpush2.bf16.xpose.msra.mxu0 0
        %2910 = vmatprep.subr.bf16.mxu0 0
        %2911 = vmatpush2.bf16.xpose.msra.mxu0 0
        %2912 = vmatprep.subr.bf16.mxu0 0
        %2913 = vmatpush2.bf16.xpose.msra.mxu0 0
        %2914 = vmatprep.subr.bf16.mxu0 0
        %2915 = vmatpush2.bf16.xpose.msra.mxu0 0
        %2916 = vmatprep.subr.bf16.mxu0 0
        %2917 = vmatpush2.bf16.xpose.msra.mxu0 0
        %2918 = vmatprep.subr.bf16.mxu0 0
        %2919 = vmatpush2.bf16.xpose.msra.mxu0 0
        %2920 = vmatprep.subr.bf16.mxu0 0
        %2921 = vmatpush2.bf16.xpose.msra.mxu0 0
        %2922 = vmatprep.subr.bf16.mxu0 0
        %2923 = vmatpush2.bf16.xpose.msra.mxu0 0
        %2924 = vmatprep.mubr.bf16.mxu0 0
        %2925 = vmatmul.mubr.bf16.gmra.mxu0 %v2881
        %v2926 = vpop.f32.mrf.mxu0
        %v2927 = vadd.f32 0.0, %v2926
        %v2928 = vpop.f32.mrf.mxu0
        %v2929 = vpop.f32.mrf.mxu0
        %v2930 = vadd.f32 0.0, %v2929
        %v2931 = vpop.f32.mrf.mxu0
        %2932 = vmatprep.mubr.bf16.mxu0 0
        %2933 = vmatmul.mubr.bf16.gmra.mxu0 %v2884
        %v2934 = vpop.f32.mrf.mxu0
        %v2935 = vadd.f32 0.0, %v2934
        %v2936 = vpop.f32.mrf.mxu0
        %v2937 = vpop.f32.mrf.mxu0
        %v2938 = vpop.f32.mrf.mxu0
        %2939 = vdwg.mxu0
        %v2941 = vsel %vm2759, %v1865, 0
        %v2944 = vsel %vm2759, %v1866, 0
        %v2947 = vsel %vm2759, %v2311, 0
        %v2950 = vsel %vm2759, %v2312, 0
        %2952 = vmatprep.subr.bf16.mxu0 0
        %2953 = vmatpush1.bf16.xpose.msra.mxu0 0
        %2954 = vmatprep.subr.bf16.mxu0 0
        %2955 = vmatpush1.bf16.xpose.msra.mxu0 0
        %2956 = vmatprep.subr.bf16.mxu0 0
        %2957 = vmatpush1.bf16.xpose.msra.mxu0 0
        %2958 = vmatprep.subr.bf16.mxu0 0
        %2959 = vmatpush1.bf16.xpose.msra.mxu0 0
        %2960 = vmatprep.subr.bf16.mxu0 0
        %2961 = vmatpush1.bf16.xpose.msra.mxu0 0
        %2962 = vmatprep.subr.bf16.mxu0 0
        %2963 = vmatpush1.bf16.xpose.msra.mxu0 0
        %2964 = vmatprep.subr.bf16.mxu0 0
        %2965 = vmatpush1.bf16.xpose.msra.mxu0 %v2950
        %2966 = vmatprep.subr.bf16.mxu0 0
        %2967 = vmatpush1.bf16.xpose.msra.mxu0 %v2947
        %2968 = vmatprep.subr.bf16.mxu0 0
        %2969 = vmatpush2.bf16.xpose.msra.mxu0 0
        %2970 = vmatprep.subr.bf16.mxu0 0
        %2971 = vmatpush2.bf16.xpose.msra.mxu0 0
        %2972 = vmatprep.subr.bf16.mxu0 0
        %2973 = vmatpush2.bf16.xpose.msra.mxu0 0
        %2974 = vmatprep.subr.bf16.mxu0 0
        %2975 = vmatpush2.bf16.xpose.msra.mxu0 0
        %2976 = vmatprep.subr.bf16.mxu0 0
        %2977 = vmatpush2.bf16.xpose.msra.mxu0 0
        %2978 = vmatprep.subr.bf16.mxu0 0
        %2979 = vmatpush2.bf16.xpose.msra.mxu0 0
        %2980 = vmatprep.subr.bf16.mxu0 0
        %2981 = vmatpush2.bf16.xpose.msra.mxu0 0
        %2982 = vmatprep.subr.bf16.mxu0 0
        %2983 = vmatpush2.bf16.xpose.msra.mxu0 0
        %2984 = vmatprep.mubr.bf16.mxu0 0
        %2985 = vmatmul.mubr.bf16.gmra.mxu0 %v2941
        %v2986 = vpop.f32.mrf.mxu0
        %v2987 = vadd.f32 0.0, %v2986
        %v2988 = vpop.f32.mrf.mxu0
        %v2989 = vpop.f32.mrf.mxu0
        %v2990 = vadd.f32 0.0, %v2989
        %v2991 = vpop.f32.mrf.mxu0
        %2992 = vmatprep.mubr.bf16.mxu0 0
        %2993 = vmatmul.mubr.bf16.gmra.mxu0 %v2944
        %v2994 = vpop.f32.mrf.mxu0
        %v2995 = vadd.f32 0.0, %v2994
        %v2996 = vpop.f32.mrf.mxu0
        %v2997 = vpop.f32.mrf.mxu0
        %v2998 = vpop.f32.mrf.mxu0
        %2999 = vdwg.mxu0
        %v3000 = vmul.f32 %v2807, 0.17677669
        %v3001 = vmul.f32 %v2810, 0.17677669
        %v3002 = vmul.f32 %v2815, 0.17677669
        %v3003 = vmul.f32 %v2867, 0.17677669
        %v3004 = vmul.f32 %v2870, 0.17677669
        %v3005 = vmul.f32 %v2875, 0.17677669
        %v3006 = vmul.f32 %v2927, 0.17677669
        %v3007 = vmul.f32 %v2930, 0.17677669
        %v3008 = vmul.f32 %v2935, 0.17677669
        %v3009 = vmul.f32 %v2987, 0.17677669
        %v3010 = vmul.f32 %v2990, 0.17677669
        %v3011 = vmul.f32 %v2995, 0.17677669
        %v3012 = vlaneseq
        %v3013 = vand.u32 %v3012, 127
        %vm3014 = vcmp.lt.s32.totalorder %v3013, 17
        %v3015 = vsel %vm3014, 1, 0
        %vm3016 = vcmp.eq.s32.totalorder %v3015, 1
        %v3017 = vsel %vm3016, %v3000, -1e+30
        %v3018 = vsel %vm3016, %v3001, -1e+30
        %v3019 = vsel %vm3016, %v3002, -1e+30
        %v3020 = vsel %vm3016, %v3003, -1e+30
        %v3021 = vsel %vm3016, %v3004, -1e+30
        %v3022 = vsel %vm3016, %v3005, -1e+30
        %v3023 = vsel %vm3016, %v3006, -1e+30
        %v3024 = vsel %vm3016, %v3007, -1e+30
        %v3025 = vsel %vm3016, %v3008, -1e+30
        %v3026 = vsel %vm3016, %v3009, -1e+30
        %v3027 = vsel %vm3016, %v3010, -1e+30
        %v3028 = vsel %vm3016, %v3011, -1e+30
        %vm3029 = vcmask 195584
        %v3030 = vsel %vm3029, %v3017, -inf
        %3031 = vmax.xlane.f32.xlu0 %v3030
        %v3032 = vpop.xlane.xlu0 %3031
        %v3033 = vsel %vm3029, %v3018, -inf
        %3034 = vmax.xlane.f32.xlu0 %v3033
        %v3035 = vpop.xlane.xlu0 %3034
        %v3036 = vsel %vm3029, %v3019, -inf
        %3037 = vmax.xlane.f32.xlu0 %v3036
        %v3038 = vpop.xlane.xlu0 %3037
        %v3039 = vsel %vm3029, %v3020, -inf
        %3040 = vmax.xlane.f32.xlu0 %v3039
        %v3041 = vpop.xlane.xlu0 %3040
        %v3042 = vsel %vm3029, %v3021, -inf
        %3043 = vmax.xlane.f32.xlu0 %v3042
        %v3044 = vpop.xlane.xlu0 %3043
        %v3045 = vsel %vm3029, %v3022, -inf
        %3046 = vmax.xlane.f32.xlu0 %v3045
        %v3047 = vpop.xlane.xlu0 %3046
        %v3048 = vsel %vm3029, %v3023, -inf
        %3049 = vmax.xlane.f32.xlu0 %v3048
        %v3050 = vpop.xlane.xlu0 %3049
        %v3051 = vsel %vm3029, %v3024, -inf
        %3052 = vmax.xlane.f32.xlu0 %v3051
        %v3053 = vpop.xlane.xlu0 %3052
        %v3054 = vsel %vm3029, %v3025, -inf
        %3055 = vmax.xlane.f32.xlu0 %v3054
        %v3056 = vpop.xlane.xlu0 %3055
        %v3057 = vsel %vm3029, %v3026, -inf
        %3058 = vmax.xlane.f32.xlu0 %v3057
        %v3059 = vpop.xlane.xlu0 %3058
        %v3060 = vsel %vm3029, %v3027, -inf
        %3061 = vmax.xlane.f32.xlu0 %v3060
        %v3062 = vpop.xlane.xlu0 %3061
        %v3063 = vsel %vm3029, %v3028, -inf
        %3064 = vmax.xlane.f32.xlu0 %v3063
        %v3065 = vpop.xlane.xlu0 %3064
        %v3066 = vsub.f32 %v3017, %v3032
        %v3067 = vsub.f32 %v3018, %v3035
        %v3068 = vsub.f32 %v3019, %v3038
        %v3069 = vsub.f32 %v3020, %v3041
        %v3070 = vsub.f32 %v3021, %v3044
        %v3071 = vsub.f32 %v3022, %v3047
        %v3072 = vsub.f32 %v3023, %v3050
        %v3073 = vsub.f32 %v3024, %v3053
        %v3074 = vsub.f32 %v3025, %v3056
        %v3075 = vsub.f32 %v3026, %v3059
        %v3076 = vsub.f32 %v3027, %v3062
        %v3077 = vsub.f32 %v3028, %v3065
        %v3078 = vmul.f32 %v3066, 1.442695
        %v3079 = vpow.pop %v3078
        %v3080 = vmul.f32 %v3067, 1.442695
        %v3081 = vpow.pop %v3080
        %v3082 = vmul.f32 %v3068, 1.442695
        %v3083 = vpow.pop %v3082
        %v3084 = vmul.f32 %v3069, 1.442695
        %v3085 = vpow.pop %v3084
        %v3086 = vmul.f32 %v3070, 1.442695
        %v3087 = vpow.pop %v3086
        %v3088 = vmul.f32 %v3071, 1.442695
        %v3089 = vpow.pop %v3088
        %v3090 = vmul.f32 %v3072, 1.442695
        %v3091 = vpow.pop %v3090
        %v3092 = vmul.f32 %v3073, 1.442695
        %v3093 = vpow.pop %v3092
        %v3094 = vmul.f32 %v3074, 1.442695
        %v3095 = vpow.pop %v3094
        %v3096 = vmul.f32 %v3075, 1.442695
        %v3097 = vpow.pop %v3096
        %v3098 = vmul.f32 %v3076, 1.442695
        %v3099 = vpow.pop %v3098
        %v3100 = vmul.f32 %v3077, 1.442695
        %v3101 = vpow.pop %v3100
        %v3102 = vsel %vm3029, %v3079, 0.0
        %3103 = vadd.xlane.f32.xlu0 %v3102
        %v3104 = vpop.xlane.xlu0 %3103
        %v3105 = vsel %vm3029, %v3081, 0.0
        %3106 = vadd.xlane.f32.xlu0 %v3105
        %v3107 = vpop.xlane.xlu0 %3106
        %v3108 = vsel %vm3029, %v3083, 0.0
        %3109 = vadd.xlane.f32.xlu0 %v3108
        %v3110 = vpop.xlane.xlu0 %3109
        %v3111 = vsel %vm3029, %v3085, 0.0
        %3112 = vadd.xlane.f32.xlu0 %v3111
        %v3113 = vpop.xlane.xlu0 %3112
        %v3114 = vsel %vm3029, %v3087, 0.0
        %3115 = vadd.xlane.f32.xlu0 %v3114
        %v3116 = vpop.xlane.xlu0 %3115
        %v3117 = vsel %vm3029, %v3089, 0.0
        %3118 = vadd.xlane.f32.xlu0 %v3117
        %v3119 = vpop.xlane.xlu0 %3118
        %v3120 = vsel %vm3029, %v3091, 0.0
        %3121 = vadd.xlane.f32.xlu0 %v3120
        %v3122 = vpop.xlane.xlu0 %3121
        %v3123 = vsel %vm3029, %v3093, 0.0
        %3124 = vadd.xlane.f32.xlu0 %v3123
        %v3125 = vpop.xlane.xlu0 %3124
        %v3126 = vsel %vm3029, %v3095, 0.0
        %3127 = vadd.xlane.f32.xlu0 %v3126
        %v3128 = vpop.xlane.xlu0 %3127
        %v3129 = vsel %vm3029, %v3097, 0.0
        %3130 = vadd.xlane.f32.xlu0 %v3129
        %v3131 = vpop.xlane.xlu0 %3130
        %v3132 = vsel %vm3029, %v3099, 0.0
        %3133 = vadd.xlane.f32.xlu0 %v3132
        %v3134 = vpop.xlane.xlu0 %3133
        %v3135 = vsel %vm3029, %v3101, 0.0
        %3136 = vadd.xlane.f32.xlu0 %v3135
        %v3137 = vpop.xlane.xlu0 %3136
        %v3138 = vrcp.pop %v3104
        %v3139 = vrcp.pop %v3107
        %v3140 = vrcp.pop %v3110
        %v3141 = vrcp.pop %v3113
        %v3142 = vrcp.pop %v3116
        %v3143 = vrcp.pop %v3119
        %v3144 = vrcp.pop %v3122
        %v3145 = vrcp.pop %v3125
        %v3146 = vrcp.pop %v3128
        %v3147 = vrcp.pop %v3131
        %v3148 = vrcp.pop %v3134
        %v3149 = vrcp.pop %v3137
        %v3150 = vmul.f32 %v3079, %v3138
        %v3151 = vmul.f32 %v3081, %v3139
        %v3152 = vmul.f32 %v3083, %v3140
        %v3153 = vmul.f32 %v3085, %v3141
        %v3154 = vmul.f32 %v3087, %v3142
        %v3155 = vmul.f32 %v3089, %v3143
        %v3156 = vmul.f32 %v3091, %v3144
        %v3157 = vmul.f32 %v3093, %v3145
        %v3158 = vmul.f32 %v3095, %v3146
        %v3159 = vmul.f32 %v3097, %v3147
        %v3160 = vmul.f32 %v3099, %v3148
        %v3161 = vmul.f32 %v3101, %v3149
        %v3162 = vpack.c.bf16 %v3151, %v3150
        %v3163 = vpack.c.bf16 %v3152, %v3152
        %v3164 = vpack.c.bf16 %v3154, %v3153
        %v3165 = vpack.c.bf16 %v3155, %v3155
        %v3166 = vpack.c.bf16 %v3157, %v3156
        %v3167 = vpack.c.bf16 %v3158, %v3158
        %v3168 = vpack.c.bf16 %v3160, %v3159
        %v3169 = vpack.c.bf16 %v3161, %v3161
        %v3171 = vsel %vm3029, %v3162, 0
        %v3174 = vsel %vm3029, %v3163, 0
        %vm3176 = vcmask 1043456
        %v3178 = vsel %vm3176, %v2752, 0
        %3180 = vmatprep.subr.bf16.mxu0 0
        %3181 = vmatpush1.bf16.msra.mxu0 0
        %3182 = vmatprep.subr.bf16.mxu0 0
        %3183 = vmatpush1.bf16.msra.mxu0 0
        %3184 = vmatprep.subr.bf16.mxu0 0
        %3185 = vmatpush1.bf16.msra.mxu0 0
        %3186 = vmatprep.subr.bf16.mxu0 0
        %3187 = vmatpush1.bf16.msra.mxu0 0
        %3188 = vmatprep.subr.bf16.mxu0 0
        %3189 = vmatpush1.bf16.msra.mxu0 0
        %3190 = vmatprep.subr.bf16.mxu0 0
        %3191 = vmatpush1.bf16.msra.mxu0 0
        %3192 = vmatprep.subr.bf16.mxu0 0
        %3193 = vmatpush1.bf16.msra.mxu0 %v3178
        %3194 = vmatprep.subr.bf16.mxu0 0
        %3195 = vmatpush1.bf16.msra.mxu0 %v2751
        %3196 = vmatprep.subr.bf16.mxu0 0
        %3197 = vmatpush2.bf16.msra.mxu0 0
        %3198 = vmatprep.subr.bf16.mxu0 0
        %3199 = vmatpush2.bf16.msra.mxu0 0
        %3200 = vmatprep.subr.bf16.mxu0 0
        %3201 = vmatpush2.bf16.msra.mxu0 0
        %3202 = vmatprep.subr.bf16.mxu0 0
        %3203 = vmatpush2.bf16.msra.mxu0 0
        %3204 = vmatprep.subr.bf16.mxu0 0
        %3205 = vmatpush2.bf16.msra.mxu0 0
        %3206 = vmatprep.subr.bf16.mxu0 0
        %3207 = vmatpush2.bf16.msra.mxu0 0
        %3208 = vmatprep.subr.bf16.mxu0 0
        %3209 = vmatpush2.bf16.msra.mxu0 0
        %3210 = vmatprep.subr.bf16.mxu0 0
        %3211 = vmatpush2.bf16.msra.mxu0 0
        %3212 = vmatprep.mubr.bf16.mxu0 0
        %3213 = vmatmul.mubr.bf16.gmra.mxu0 %v3171
        %v3214 = vpop.f32.mrf.mxu0
        %v3215 = vadd.f32 0.0, %v3214
        %v3216 = vpop.f32.mrf.mxu0
        %v3217 = vpop.f32.mrf.mxu0
        %v3218 = vadd.f32 0.0, %v3217
        %v3219 = vpop.f32.mrf.mxu0
        %3220 = vmatprep.mubr.bf16.mxu0 0
        %3221 = vmatmul.mubr.bf16.gmra.mxu0 %v3174
        %v3222 = vpop.f32.mrf.mxu0
        %v3223 = vadd.f32 0.0, %v3222
        %v3224 = vpop.f32.mrf.mxu0
        %v3225 = vpop.f32.mrf.mxu0
        %v3226 = vpop.f32.mrf.mxu0
        %3227 = vdwg.mxu0
        %v3229 = vsel %vm3029, %v3164, 0
        %v3232 = vsel %vm3029, %v3165, 0
        %v3235 = vsel %vm3176, %v2754, 0
        %3237 = vmatprep.subr.bf16.mxu0 0
        %3238 = vmatpush1.bf16.msra.mxu0 0
        %3239 = vmatprep.subr.bf16.mxu0 0
        %3240 = vmatpush1.bf16.msra.mxu0 0
        %3241 = vmatprep.subr.bf16.mxu0 0
        %3242 = vmatpush1.bf16.msra.mxu0 0
        %3243 = vmatprep.subr.bf16.mxu0 0
        %3244 = vmatpush1.bf16.msra.mxu0 0
        %3245 = vmatprep.subr.bf16.mxu0 0
        %3246 = vmatpush1.bf16.msra.mxu0 0
        %3247 = vmatprep.subr.bf16.mxu0 0
        %3248 = vmatpush1.bf16.msra.mxu0 0
        %3249 = vmatprep.subr.bf16.mxu0 0
        %3250 = vmatpush1.bf16.msra.mxu0 %v3235
        %3251 = vmatprep.subr.bf16.mxu0 0
        %3252 = vmatpush1.bf16.msra.mxu0 %v2753
        %3253 = vmatprep.subr.bf16.mxu0 0
        %3254 = vmatpush2.bf16.msra.mxu0 0
        %3255 = vmatprep.subr.bf16.mxu0 0
        %3256 = vmatpush2.bf16.msra.mxu0 0
        %3257 = vmatprep.subr.bf16.mxu0 0
        %3258 = vmatpush2.bf16.msra.mxu0 0
        %3259 = vmatprep.subr.bf16.mxu0 0
        %3260 = vmatpush2.bf16.msra.mxu0 0
        %3261 = vmatprep.subr.bf16.mxu0 0
        %3262 = vmatpush2.bf16.msra.mxu0 0
        %3263 = vmatprep.subr.bf16.mxu0 0
        %3264 = vmatpush2.bf16.msra.mxu0 0
        %3265 = vmatprep.subr.bf16.mxu0 0
        %3266 = vmatpush2.bf16.msra.mxu0 0
        %3267 = vmatprep.subr.bf16.mxu0 0
        %3268 = vmatpush2.bf16.msra.mxu0 0
        %3269 = vmatprep.mubr.bf16.mxu0 0
        %3270 = vmatmul.mubr.bf16.gmra.mxu0 %v3229
        %v3271 = vpop.f32.mrf.mxu0
        %v3272 = vadd.f32 0.0, %v3271
        %v3273 = vpop.f32.mrf.mxu0
        %v3274 = vpop.f32.mrf.mxu0
        %v3275 = vadd.f32 0.0, %v3274
        %v3276 = vpop.f32.mrf.mxu0
        %3277 = vmatprep.mubr.bf16.mxu0 0
        %3278 = vmatmul.mubr.bf16.gmra.mxu0 %v3232
        %v3279 = vpop.f32.mrf.mxu0
        %v3280 = vadd.f32 0.0, %v3279
        %v3281 = vpop.f32.mrf.mxu0
        %v3282 = vpop.f32.mrf.mxu0
        %v3283 = vpop.f32.mrf.mxu0
        %3284 = vdwg.mxu0
        %v3286 = vsel %vm3029, %v3166, 0
        %v3289 = vsel %vm3029, %v3167, 0
        %v3292 = vsel %vm3176, %v2756, 0
        %3294 = vmatprep.subr.bf16.mxu0 0
        %3295 = vmatpush1.bf16.msra.mxu0 0
        %3296 = vmatprep.subr.bf16.mxu0 0
        %3297 = vmatpush1.bf16.msra.mxu0 0
        %3298 = vmatprep.subr.bf16.mxu0 0
        %3299 = vmatpush1.bf16.msra.mxu0 0
        %3300 = vmatprep.subr.bf16.mxu0 0
        %3301 = vmatpush1.bf16.msra.mxu0 0
        %3302 = vmatprep.subr.bf16.mxu0 0
        %3303 = vmatpush1.bf16.msra.mxu0 0
        %3304 = vmatprep.subr.bf16.mxu0 0
        %3305 = vmatpush1.bf16.msra.mxu0 0
        %3306 = vmatprep.subr.bf16.mxu0 0
        %3307 = vmatpush1.bf16.msra.mxu0 %v3292
        %3308 = vmatprep.subr.bf16.mxu0 0
        %3309 = vmatpush1.bf16.msra.mxu0 %v2755
        %3310 = vmatprep.subr.bf16.mxu0 0
        %3311 = vmatpush2.bf16.msra.mxu0 0
        %3312 = vmatprep.subr.bf16.mxu0 0
        %3313 = vmatpush2.bf16.msra.mxu0 0
        %3314 = vmatprep.subr.bf16.mxu0 0
        %3315 = vmatpush2.bf16.msra.mxu0 0
        %3316 = vmatprep.subr.bf16.mxu0 0
        %3317 = vmatpush2.bf16.msra.mxu0 0
        %3318 = vmatprep.subr.bf16.mxu0 0
        %3319 = vmatpush2.bf16.msra.mxu0 0
        %3320 = vmatprep.subr.bf16.mxu0 0
        %3321 = vmatpush2.bf16.msra.mxu0 0
        %3322 = vmatprep.subr.bf16.mxu0 0
        %3323 = vmatpush2.bf16.msra.mxu0 0
        %3324 = vmatprep.subr.bf16.mxu0 0
        %3325 = vmatpush2.bf16.msra.mxu0 0
        %3326 = vmatprep.mubr.bf16.mxu0 0
        %3327 = vmatmul.mubr.bf16.gmra.mxu0 %v3286
        %v3328 = vpop.f32.mrf.mxu0
        %v3329 = vadd.f32 0.0, %v3328
        %v3330 = vpop.f32.mrf.mxu0
        %v3331 = vpop.f32.mrf.mxu0
        %v3332 = vadd.f32 0.0, %v3331
        %v3333 = vpop.f32.mrf.mxu0
        %3334 = vmatprep.mubr.bf16.mxu0 0
        %3335 = vmatmul.mubr.bf16.gmra.mxu0 %v3289
        %v3336 = vpop.f32.mrf.mxu0
        %v3337 = vadd.f32 0.0, %v3336
        %v3338 = vpop.f32.mrf.mxu0
        %v3339 = vpop.f32.mrf.mxu0
        %v3340 = vpop.f32.mrf.mxu0
        %3341 = vdwg.mxu0
        %v3343 = vsel %vm3029, %v3168, 0
        %v3346 = vsel %vm3029, %v3169, 0
        %v3349 = vsel %vm3176, %v2758, 0
        %3351 = vmatprep.subr.bf16.mxu0 0
        %3352 = vmatpush1.bf16.msra.mxu0 0
        %3353 = vmatprep.subr.bf16.mxu0 0
        %3354 = vmatpush1.bf16.msra.mxu0 0
        %3355 = vmatprep.subr.bf16.mxu0 0
        %3356 = vmatpush1.bf16.msra.mxu0 0
        %3357 = vmatprep.subr.bf16.mxu0 0
        %3358 = vmatpush1.bf16.msra.mxu0 0
        %3359 = vmatprep.subr.bf16.mxu0 0
        %3360 = vmatpush1.bf16.msra.mxu0 0
        %3361 = vmatprep.subr.bf16.mxu0 0
        %3362 = vmatpush1.bf16.msra.mxu0 0
        %3363 = vmatprep.subr.bf16.mxu0 0
        %3364 = vmatpush1.bf16.msra.mxu0 %v3349
        %3365 = vmatprep.subr.bf16.mxu0 0
        %3366 = vmatpush1.bf16.msra.mxu0 %v2757
        %3367 = vmatprep.subr.bf16.mxu0 0
        %3368 = vmatpush2.bf16.msra.mxu0 0
        %3369 = vmatprep.subr.bf16.mxu0 0
        %3370 = vmatpush2.bf16.msra.mxu0 0
        %3371 = vmatprep.subr.bf16.mxu0 0
        %3372 = vmatpush2.bf16.msra.mxu0 0
        %3373 = vmatprep.subr.bf16.mxu0 0
        %3374 = vmatpush2.bf16.msra.mxu0 0
        %3375 = vmatprep.subr.bf16.mxu0 0
        %3376 = vmatpush2.bf16.msra.mxu0 0
        %3377 = vmatprep.subr.bf16.mxu0 0
        %3378 = vmatpush2.bf16.msra.mxu0 0
        %3379 = vmatprep.subr.bf16.mxu0 0
        %3380 = vmatpush2.bf16.msra.mxu0 0
        %3381 = vmatprep.subr.bf16.mxu0 0
        %3382 = vmatpush2.bf16.msra.mxu0 0
        %3383 = vmatprep.mubr.bf16.mxu0 0
        %3384 = vmatmul.mubr.bf16.gmra.mxu0 %v3343
        %v3385 = vpop.f32.mrf.mxu0
        %v3386 = vadd.f32 0.0, %v3385
        %v3387 = vpop.f32.mrf.mxu0
        %v3388 = vpop.f32.mrf.mxu0
        %v3389 = vadd.f32 0.0, %v3388
        %v3390 = vpop.f32.mrf.mxu0
        %3391 = vmatprep.mubr.bf16.mxu0 0
        %3392 = vmatmul.mubr.bf16.gmra.mxu0 %v3346
        %v3393 = vpop.f32.mrf.mxu0
        %v3394 = vadd.f32 0.0, %v3393
        %v3395 = vpop.f32.mrf.mxu0
        %v3396 = vpop.f32.mrf.mxu0
        %v3397 = vpop.f32.mrf.mxu0
        %3398 = vdwg.mxu0
        %v3399 = vcombine.low %v3215, %v3329
        %v3400 = vcombine.high %v3215, %v3329
        %v3402 = vunpack.c.l.s4 1983009808
        %v3403 = vunpack.c.0.s8 %v3402
        %v3404 = vlaneseq
        %v3405 = vshrl.u32 %v3404, 7
        %v3406 = vsub.s32 %v3403, %v3405
        %v3407 = vrot.slane %v3399, %v3406
        %v3409 = vunpack.c.l.s4 1983009808
        %v3410 = vunpack.c.0.s8 %v3409
        %v3411 = vlaneseq
        %v3412 = vshrl.u32 %v3411, 7
        %v3413 = vsub.s32 %v3410, %v3412
        %v3414 = vrot.slane %v3400, %v3413
        %v3415 = vcombine.low %v3272, %v3386
        %v3416 = vcombine.high %v3272, %v3386
        %v3418 = vunpack.c.l.s4 1983009808
        %v3419 = vunpack.c.0.s8 %v3418
        %v3420 = vlaneseq
        %v3421 = vshrl.u32 %v3420, 7
        %v3422 = vsub.s32 %v3419, %v3421
        %v3423 = vrot.slane %v3415, %v3422
        %v3425 = vunpack.c.l.s4 1983009808
        %v3426 = vunpack.c.0.s8 %v3425
        %v3427 = vlaneseq
        %v3428 = vshrl.u32 %v3427, 7
        %v3429 = vsub.s32 %v3426, %v3428
        %v3430 = vrot.slane %v3416, %v3429
        %v3431 = vcombine.low %v3407, %v3423
        %v3432 = vcombine.high %v3407, %v3423
        %v3434 = vunpack.c.l.s4 1934713408
        %v3435 = vunpack.c.0.s8 %v3434
        %v3436 = vlaneseq
        %v3437 = vshrl.u32 %v3436, 7
        %v3438 = vsub.s32 %v3435, %v3437
        %v3439 = vrot.slane %v3431, %v3438
        %v3441 = vunpack.c.l.s4 1934713408
        %v3442 = vunpack.c.0.s8 %v3441
        %v3443 = vlaneseq
        %v3444 = vshrl.u32 %v3443, 7
        %v3445 = vsub.s32 %v3442, %v3444
        %v3446 = vrot.slane %v3432, %v3445
        %v3447 = vcombine.low %v3414, %v3430
        %v3448 = vcombine.high %v3414, %v3430
        %v3450 = vunpack.c.l.s4 1934713408
        %v3451 = vunpack.c.0.s8 %v3450
        %v3452 = vlaneseq
        %v3453 = vshrl.u32 %v3452, 7
        %v3454 = vsub.s32 %v3451, %v3453
        %v3455 = vrot.slane %v3447, %v3454
        %v3457 = vunpack.c.l.s4 1934713408
        %v3458 = vunpack.c.0.s8 %v3457
        %v3459 = vlaneseq
        %v3460 = vshrl.u32 %v3459, 7
        %v3461 = vsub.s32 %v3458, %v3460
        %v3462 = vrot.slane %v3448, %v3461
        %v3463 = vcombine.high %v3439, 0.0
        %v3464 = vcombine.high %v3446, 0.0
        %v3465 = vcombine.high %v3455, 0.0
        %v3466 = vcombine.high %v3462, 0.0
        %v3467 = vcombine.low %v3218, %v3332
        %v3468 = vcombine.high %v3218, %v3332
        %v3470 = vunpack.c.l.s4 1983009808
        %v3471 = vunpack.c.0.s8 %v3470
        %v3472 = vlaneseq
        %v3473 = vshrl.u32 %v3472, 7
        %v3474 = vsub.s32 %v3471, %v3473
        %v3475 = vrot.slane %v3467, %v3474
        %v3477 = vunpack.c.l.s4 1983009808
        %v3478 = vunpack.c.0.s8 %v3477
        %v3479 = vlaneseq
        %v3480 = vshrl.u32 %v3479, 7
        %v3481 = vsub.s32 %v3478, %v3480
        %v3482 = vrot.slane %v3468, %v3481
        %v3483 = vcombine.low %v3275, %v3389
        %v3484 = vcombine.high %v3275, %v3389
        %v3486 = vunpack.c.l.s4 1983009808
        %v3487 = vunpack.c.0.s8 %v3486
        %v3488 = vlaneseq
        %v3489 = vshrl.u32 %v3488, 7
        %v3490 = vsub.s32 %v3487, %v3489
        %v3491 = vrot.slane %v3483, %v3490
        %v3493 = vunpack.c.l.s4 1983009808
        %v3494 = vunpack.c.0.s8 %v3493
        %v3495 = vlaneseq
        %v3496 = vshrl.u32 %v3495, 7
        %v3497 = vsub.s32 %v3494, %v3496
        %v3498 = vrot.slane %v3484, %v3497
        %v3499 = vcombine.low %v3475, %v3491
        %v3500 = vcombine.high %v3475, %v3491
        %v3502 = vunpack.c.l.s4 1934713408
        %v3503 = vunpack.c.0.s8 %v3502
        %v3504 = vlaneseq
        %v3505 = vshrl.u32 %v3504, 7
        %v3506 = vsub.s32 %v3503, %v3505
        %v3507 = vrot.slane %v3499, %v3506
        %v3509 = vunpack.c.l.s4 1934713408
        %v3510 = vunpack.c.0.s8 %v3509
        %v3511 = vlaneseq
        %v3512 = vshrl.u32 %v3511, 7
        %v3513 = vsub.s32 %v3510, %v3512
        %v3514 = vrot.slane %v3500, %v3513
        %v3515 = vcombine.low %v3482, %v3498
        %v3516 = vcombine.high %v3482, %v3498
        %v3518 = vunpack.c.l.s4 1934713408
        %v3519 = vunpack.c.0.s8 %v3518
        %v3520 = vlaneseq
        %v3521 = vshrl.u32 %v3520, 7
        %v3522 = vsub.s32 %v3519, %v3521
        %v3523 = vrot.slane %v3515, %v3522
        %v3525 = vunpack.c.l.s4 1934713408
        %v3526 = vunpack.c.0.s8 %v3525
        %v3527 = vlaneseq
        %v3528 = vshrl.u32 %v3527, 7
        %v3529 = vsub.s32 %v3526, %v3528
        %v3530 = vrot.slane %v3516, %v3529
        %v3531 = vcombine.high %v3507, 0.0
        %v3532 = vcombine.high %v3514, 0.0
        %v3533 = vcombine.high %v3523, 0.0
        %v3534 = vcombine.high %v3530, 0.0
        %v3535 = vcombine.low %v3223, %v3337
        %v3536 = vcombine.high %v3223, %v3337
        %v3538 = vunpack.c.l.s4 1983009808
        %v3539 = vunpack.c.0.s8 %v3538
        %v3540 = vlaneseq
        %v3541 = vshrl.u32 %v3540, 7
        %v3542 = vsub.s32 %v3539, %v3541
        %v3543 = vrot.slane %v3535, %v3542
        %v3545 = vunpack.c.l.s4 1983009808
        %v3546 = vunpack.c.0.s8 %v3545
        %v3547 = vlaneseq
        %v3548 = vshrl.u32 %v3547, 7
        %v3549 = vsub.s32 %v3546, %v3548
        %v3550 = vrot.slane %v3536, %v3549
        %v3551 = vcombine.low %v3280, %v3394
        %v3552 = vcombine.high %v3280, %v3394
        %v3554 = vunpack.c.l.s4 1983009808
        %v3555 = vunpack.c.0.s8 %v3554
        %v3556 = vlaneseq
        %v3557 = vshrl.u32 %v3556, 7
        %v3558 = vsub.s32 %v3555, %v3557
        %v3559 = vrot.slane %v3551, %v3558
        %v3561 = vunpack.c.l.s4 1983009808
        %v3562 = vunpack.c.0.s8 %v3561
        %v3563 = vlaneseq
        %v3564 = vshrl.u32 %v3563, 7
        %v3565 = vsub.s32 %v3562, %v3564
        %v3566 = vrot.slane %v3552, %v3565
        %v3567 = vcombine.low %v3543, %v3559
        %v3568 = vcombine.high %v3543, %v3559
        %v3570 = vunpack.c.l.s4 1934713408
        %v3571 = vunpack.c.0.s8 %v3570
        %v3572 = vlaneseq
        %v3573 = vshrl.u32 %v3572, 7
        %v3574 = vsub.s32 %v3571, %v3573
        %v3575 = vrot.slane %v3567, %v3574
        %v3577 = vunpack.c.l.s4 1934713408
        %v3578 = vunpack.c.0.s8 %v3577
        %v3579 = vlaneseq
        %v3580 = vshrl.u32 %v3579, 7
        %v3581 = vsub.s32 %v3578, %v3580
        %v3582 = vrot.slane %v3568, %v3581
        %v3583 = vcombine.low %v3550, %v3566
        %v3584 = vcombine.high %v3550, %v3566
        %v3586 = vunpack.c.l.s4 1934713408
        %v3587 = vunpack.c.0.s8 %v3586
        %v3588 = vlaneseq
        %v3589 = vshrl.u32 %v3588, 7
        %v3590 = vsub.s32 %v3587, %v3589
        %v3591 = vrot.slane %v3583, %v3590
        %v3593 = vunpack.c.l.s4 1934713408
        %v3594 = vunpack.c.0.s8 %v3593
        %v3595 = vlaneseq
        %v3596 = vshrl.u32 %v3595, 7
        %v3597 = vsub.s32 %v3594, %v3596
        %v3598 = vrot.slane %v3584, %v3597
        %v3599 = vcombine.high %v3575, 0.0
        %v3600 = vcombine.high %v3582, 0.0
        %v3601 = vcombine.high %v3591, 0.0
        %v3602 = vcombine.high %v3598, 0.0
        %v3603 = vcombine.low %v3439, %v3446
        %v3605 = vunpack.c.l.s4 1983009808
        %v3606 = vunpack.c.0.s8 %v3605
        %v3607 = vlaneseq
        %v3608 = vshrl.u32 %v3607, 7
        %v3609 = vsub.s32 %v3606, %v3608
        %v3610 = vrot.slane %v3603, %v3609
        %v3611 = vcombine.low %v3463, %v3464
        %v3613 = vunpack.c.l.s4 1983009808
        %v3614 = vunpack.c.0.s8 %v3613
        %v3615 = vlaneseq
        %v3616 = vshrl.u32 %v3615, 7
        %v3617 = vsub.s32 %v3614, %v3616
        %v3618 = vrot.slane %v3611, %v3617
        %v3619 = vcombine.low %v3455, %v3462
        %v3621 = vunpack.c.l.s4 1983009808
        %v3622 = vunpack.c.0.s8 %v3621
        %v3623 = vlaneseq
        %v3624 = vshrl.u32 %v3623, 7
        %v3625 = vsub.s32 %v3622, %v3624
        %v3626 = vrot.slane %v3619, %v3625
        %v3627 = vcombine.low %v3465, %v3466
        %v3629 = vunpack.c.l.s4 1983009808
        %v3630 = vunpack.c.0.s8 %v3629
        %v3631 = vlaneseq
        %v3632 = vshrl.u32 %v3631, 7
        %v3633 = vsub.s32 %v3630, %v3632
        %v3634 = vrot.slane %v3627, %v3633
        %v3635 = vcombine.low %v3610, %v3618
        %v3636 = vcombine.high %v3610, %v3618
        %v3638 = vunpack.c.l.s4 1934713408
        %v3639 = vunpack.c.0.s8 %v3638
        %v3640 = vlaneseq
        %v3641 = vshrl.u32 %v3640, 7
        %v3642 = vsub.s32 %v3639, %v3641
        %v3643 = vrot.slane %v3635, %v3642
        %v3645 = vunpack.c.l.s4 1934713408
        %v3646 = vunpack.c.0.s8 %v3645
        %v3647 = vlaneseq
        %v3648 = vshrl.u32 %v3647, 7
        %v3649 = vsub.s32 %v3646, %v3648
        %v3650 = vrot.slane %v3636, %v3649
        %v3651 = vcombine.low %v3626, %v3634
        %v3652 = vcombine.high %v3626, %v3634
        %v3654 = vunpack.c.l.s4 1934713408
        %v3655 = vunpack.c.0.s8 %v3654
        %v3656 = vlaneseq
        %v3657 = vshrl.u32 %v3656, 7
        %v3658 = vsub.s32 %v3655, %v3657
        %v3659 = vrot.slane %v3651, %v3658
        %v3661 = vunpack.c.l.s4 1934713408
        %v3662 = vunpack.c.0.s8 %v3661
        %v3663 = vlaneseq
        %v3664 = vshrl.u32 %v3663, 7
        %v3665 = vsub.s32 %v3662, %v3664
        %v3666 = vrot.slane %v3652, %v3665
        %v3667 = vcombine.low %v3643, %v3659
        %v3668 = vcombine.high %v3643, %v3659
        %v3669 = vcombine.low %v3650, %v3666
        %v3670 = vcombine.high %v3650, %v3666
        %v3671 = vcombine.low %v3507, %v3514
        %v3673 = vunpack.c.l.s4 1983009808
        %v3674 = vunpack.c.0.s8 %v3673
        %v3675 = vlaneseq
        %v3676 = vshrl.u32 %v3675, 7
        %v3677 = vsub.s32 %v3674, %v3676
        %v3678 = vrot.slane %v3671, %v3677
        %v3679 = vcombine.low %v3531, %v3532
        %v3681 = vunpack.c.l.s4 1983009808
        %v3682 = vunpack.c.0.s8 %v3681
        %v3683 = vlaneseq
        %v3684 = vshrl.u32 %v3683, 7
        %v3685 = vsub.s32 %v3682, %v3684
        %v3686 = vrot.slane %v3679, %v3685
        %v3687 = vcombine.low %v3523, %v3530
        %v3689 = vunpack.c.l.s4 1983009808
        %v3690 = vunpack.c.0.s8 %v3689
        %v3691 = vlaneseq
        %v3692 = vshrl.u32 %v3691, 7
        %v3693 = vsub.s32 %v3690, %v3692
        %v3694 = vrot.slane %v3687, %v3693
        %v3695 = vcombine.low %v3533, %v3534
        %v3697 = vunpack.c.l.s4 1983009808
        %v3698 = vunpack.c.0.s8 %v3697
        %v3699 = vlaneseq
        %v3700 = vshrl.u32 %v3699, 7
        %v3701 = vsub.s32 %v3698, %v3700
        %v3702 = vrot.slane %v3695, %v3701
        %v3703 = vcombine.low %v3678, %v3686
        %v3704 = vcombine.high %v3678, %v3686
        %v3706 = vunpack.c.l.s4 1934713408
        %v3707 = vunpack.c.0.s8 %v3706
        %v3708 = vlaneseq
        %v3709 = vshrl.u32 %v3708, 7
        %v3710 = vsub.s32 %v3707, %v3709
        %v3711 = vrot.slane %v3703, %v3710
        %v3713 = vunpack.c.l.s4 1934713408
        %v3714 = vunpack.c.0.s8 %v3713
        %v3715 = vlaneseq
        %v3716 = vshrl.u32 %v3715, 7
        %v3717 = vsub.s32 %v3714, %v3716
        %v3718 = vrot.slane %v3704, %v3717
        %v3719 = vcombine.low %v3694, %v3702
        %v3720 = vcombine.high %v3694, %v3702
        %v3722 = vunpack.c.l.s4 1934713408
        %v3723 = vunpack.c.0.s8 %v3722
        %v3724 = vlaneseq
        %v3725 = vshrl.u32 %v3724, 7
        %v3726 = vsub.s32 %v3723, %v3725
        %v3727 = vrot.slane %v3719, %v3726
        %v3729 = vunpack.c.l.s4 1934713408
        %v3730 = vunpack.c.0.s8 %v3729
        %v3731 = vlaneseq
        %v3732 = vshrl.u32 %v3731, 7
        %v3733 = vsub.s32 %v3730, %v3732
        %v3734 = vrot.slane %v3720, %v3733
        %v3735 = vcombine.low %v3711, %v3727
        %v3736 = vcombine.high %v3711, %v3727
        %v3737 = vcombine.low %v3718, %v3734
        %v3738 = vcombine.high %v3718, %v3734
        %v3739 = vcombine.low %v3575, %v3582
        %v3741 = vunpack.c.l.s4 1983009808
        %v3742 = vunpack.c.0.s8 %v3741
        %v3743 = vlaneseq
        %v3744 = vshrl.u32 %v3743, 7
        %v3745 = vsub.s32 %v3742, %v3744
        %v3746 = vrot.slane %v3739, %v3745
        %v3747 = vcombine.low %v3599, %v3600
        %v3749 = vunpack.c.l.s4 1983009808
        %v3750 = vunpack.c.0.s8 %v3749
        %v3751 = vlaneseq
        %v3752 = vshrl.u32 %v3751, 7
        %v3753 = vsub.s32 %v3750, %v3752
        %v3754 = vrot.slane %v3747, %v3753
        %v3755 = vcombine.low %v3591, %v3598
        %v3757 = vunpack.c.l.s4 1983009808
        %v3758 = vunpack.c.0.s8 %v3757
        %v3759 = vlaneseq
        %v3760 = vshrl.u32 %v3759, 7
        %v3761 = vsub.s32 %v3758, %v3760
        %v3762 = vrot.slane %v3755, %v3761
        %v3763 = vcombine.low %v3601, %v3602
        %v3765 = vunpack.c.l.s4 1983009808
        %v3766 = vunpack.c.0.s8 %v3765
        %v3767 = vlaneseq
        %v3768 = vshrl.u32 %v3767, 7
        %v3769 = vsub.s32 %v3766, %v3768
        %v3770 = vrot.slane %v3763, %v3769
        %v3771 = vcombine.low %v3746, %v3754
        %v3772 = vcombine.high %v3746, %v3754
        %v3774 = vunpack.c.l.s4 1934713408
        %v3775 = vunpack.c.0.s8 %v3774
        %v3776 = vlaneseq
        %v3777 = vshrl.u32 %v3776, 7
        %v3778 = vsub.s32 %v3775, %v3777
        %v3779 = vrot.slane %v3771, %v3778
        %v3781 = vunpack.c.l.s4 1934713408
        %v3782 = vunpack.c.0.s8 %v3781
        %v3783 = vlaneseq
        %v3784 = vshrl.u32 %v3783, 7
        %v3785 = vsub.s32 %v3782, %v3784
        %v3786 = vrot.slane %v3772, %v3785
        %v3787 = vcombine.low %v3762, %v3770
        %v3788 = vcombine.high %v3762, %v3770
        %v3790 = vunpack.c.l.s4 1934713408
        %v3791 = vunpack.c.0.s8 %v3790
        %v3792 = vlaneseq
        %v3793 = vshrl.u32 %v3792, 7
        %v3794 = vsub.s32 %v3791, %v3793
        %v3795 = vrot.slane %v3787, %v3794
        %v3797 = vunpack.c.l.s4 1934713408
        %v3798 = vunpack.c.0.s8 %v3797
        %v3799 = vlaneseq
        %v3800 = vshrl.u32 %v3799, 7
        %v3801 = vsub.s32 %v3798, %v3800
        %v3802 = vrot.slane %v3788, %v3801
        %v3803 = vcombine.low %v3779, %v3795
        %v3804 = vcombine.high %v3779, %v3795
        %v3805 = vcombine.low %v3786, %v3802
        %v3806 = vcombine.high %v3786, %v3802
        %3810 = vrot.lane.b32.xlu0 %v3668, 32
        %v3811 = vpop.permute.xlu0 %3810
        %3812 = vrot.lane.b32.xlu0 %v3736, 32
        %v3813 = vpop.permute.xlu0 %3812
        %3814 = vrot.lane.b32.xlu0 %v3804, 32
        %v3815 = vpop.permute.xlu0 %3814
        %3822 = vrot.lane.b32.xlu0 %v3669, 64
        %v3823 = vpop.permute.xlu0 %3822
        %3824 = vrot.lane.b32.xlu0 %v3737, 64
        %v3825 = vpop.permute.xlu0 %3824
        %3826 = vrot.lane.b32.xlu0 %v3805, 64
        %v3827 = vpop.permute.xlu0 %3826
        %3834 = vrot.lane.b32.xlu0 %v3670, 96
        %v3835 = vpop.permute.xlu0 %3834
        %3836 = vrot.lane.b32.xlu0 %v3738, 96
        %v3837 = vpop.permute.xlu0 %3836
        %3838 = vrot.lane.b32.xlu0 %v3806, 96
        %v3839 = vpop.permute.xlu0 %3838
        %v3843 = vsel %vm2759, %v3667, %v3811
        %v3844 = vsel %vm2759, %v3735, %v3813
        %v3845 = vsel %vm2759, %v3803, %v3815
        %vm3846 = vcmask 523264
        %v3847 = vsel %vm3846, %v3843, %v3823
        %v3848 = vsel %vm3846, %v3844, %v3825
        %v3849 = vsel %vm3846, %v3845, %v3827
        %vm3850 = vcmask 785408
        %v3851 = vsel %vm3850, %v3847, %v3835
        %v3852 = vsel %vm3850, %v3848, %v3837
        %v3853 = vsel %vm3850, %v3849, %v3839
        %v3854 = vpack.c.bf16 %v3852, %v3851
        %v3855 = vpack.c.bf16 %v3853, %v3853
        %v3856 = vld [vmem:[%s841] sm:$0xf]
        %v3857 = vld [vmem:[%s841 + $0x4] sm:$0xf]
        %v3858 = vld [vmem:[%s841 + $0x8] sm:$0xf]
        %v3859 = vld [vmem:[%s841 + $0xc] sm:$0xf]
        %v3860 = vld [vmem:[%s841 + $0x10] sm:$0xf]
        %v3861 = vld [vmem:[%s841 + $0x14] sm:$0xf]
        %v3862 = vld [vmem:[%s841 + $0x18] sm:$0xf]
        %v3863 = vld [vmem:[%s841 + $0x1c] sm:$0xf]
        %v3864 = vld [vmem:[%s841 + $0x20] sm:$0xf]
        %v3865 = vld [vmem:[%s841 + $0x24] sm:$0xf]
        %v3866 = vld [vmem:[%s841 + $0x28] sm:$0xf]
        %v3867 = vld [vmem:[%s841 + $0x2c] sm:$0xf]
        %v3868 = vld [vmem:[%s841 + $0x30] sm:$0xf]
        %v3869 = vld [vmem:[%s841 + $0x34] sm:$0xf]
        %v3870 = vld [vmem:[%s841 + $0x38] sm:$0xf]
        %v3871 = vld [vmem:[%s841 + $0x3c] sm:$0xf]
        %v3872 = vld [vmem:[%s971] sm:$0x1]
        %v3874 = vlaneseq
        %v3875 = vshrl.u32 %v3874, 7
        %v3876 = vsub.s32 0, %v3875
        %v3877 = vrot.slane %v3872, %v3876
        %v3895 = vunpack.c.l.b16 %v3856
        %v3896 = vunpack.c.l.b16 %v3857
        %v3897 = vunpack.c.l.b16 %v3858
        %v3898 = vunpack.c.l.b16 %v3859
        %v3899 = vunpack.c.l.b16 %v3860
        %v3900 = vunpack.c.l.b16 %v3861
        %v3901 = vunpack.c.l.b16 %v3862
        %v3902 = vunpack.c.l.b16 %v3863
        %v3903 = vunpack.c.l.b16 %v3864
        %v3904 = vunpack.c.l.b16 %v3865
        %v3905 = vunpack.c.l.b16 %v3866
        %v3906 = vunpack.c.l.b16 %v3867
        %v3907 = vunpack.c.l.b16 %v3868
        %v3908 = vunpack.c.l.b16 %v3869
        %v3909 = vunpack.c.l.b16 %v3870
        %v3910 = vunpack.c.l.b16 %v3871
        %v3911 = vpack.c.b16 %v3896, %v3895
        %v3912 = vpack.c.b16 %v3898, %v3897
        %v3913 = vpack.c.b16 %v3900, %v3899
        %v3914 = vpack.c.b16 %v3902, %v3901
        %v3915 = vpack.c.b16 %v3904, %v3903
        %v3916 = vpack.c.b16 %v3906, %v3905
        %v3917 = vpack.c.b16 %v3908, %v3907
        %v3918 = vpack.c.b16 %v3910, %v3909
        %3927 = vmatprep.subr.bf16.mxu0 0
        %3928 = vmatpush1.bf16.msra.mxu0 %v3918
        %3929 = vmatprep.subr.bf16.mxu0 0
        %3930 = vmatpush1.bf16.msra.mxu0 %v3917
        %3931 = vmatprep.subr.bf16.mxu0 0
        %3932 = vmatpush1.bf16.msra.mxu0 %v3916
        %3933 = vmatprep.subr.bf16.mxu0 0
        %3934 = vmatpush1.bf16.msra.mxu0 %v3915
        %3935 = vmatprep.subr.bf16.mxu0 0
        %3936 = vmatpush1.bf16.msra.mxu0 %v3914
        %3937 = vmatprep.subr.bf16.mxu0 0
        %3938 = vmatpush1.bf16.msra.mxu0 %v3913
        %3939 = vmatprep.subr.bf16.mxu0 0
        %3940 = vmatpush1.bf16.msra.mxu0 %v3912
        %3941 = vmatprep.subr.bf16.mxu0 0
        %3942 = vmatpush1.bf16.msra.mxu0 %v3911
        %3943 = vmatprep.subr.bf16.mxu0 0
        %3944 = vmatpush2.bf16.msra.mxu0 0
        %3945 = vmatprep.subr.bf16.mxu0 0
        %3946 = vmatpush2.bf16.msra.mxu0 0
        %3947 = vmatprep.subr.bf16.mxu0 0
        %3948 = vmatpush2.bf16.msra.mxu0 0
        %3949 = vmatprep.subr.bf16.mxu0 0
        %3950 = vmatpush2.bf16.msra.mxu0 0
        %3951 = vmatprep.subr.bf16.mxu0 0
        %3952 = vmatpush2.bf16.msra.mxu0 0
        %3953 = vmatprep.subr.bf16.mxu0 0
        %3954 = vmatpush2.bf16.msra.mxu0 0
        %3955 = vmatprep.subr.bf16.mxu0 0
        %3956 = vmatpush2.bf16.msra.mxu0 0
        %3957 = vmatprep.subr.bf16.mxu0 0
        %3958 = vmatpush2.bf16.msra.mxu0 0
        %3959 = vmatprep.mubr.bf16.mxu0 0
        %3960 = vmatmul.mubr.bf16.gmra.mxu0 %v3854
        %v3961 = vpop.f32.mrf.mxu0
        %v3962 = vadd.f32 %v3877, %v3961
        %v3963 = vpop.f32.mrf.mxu0
        %v3964 = vpop.f32.mrf.mxu0
        %v3965 = vadd.f32 %v3877, %v3964
        %v3966 = vpop.f32.mrf.mxu0
        %3967 = vmatprep.mubr.bf16.mxu0 0
        %3968 = vmatmul.mubr.bf16.gmra.mxu0 %v3855
        %v3969 = vpop.f32.mrf.mxu0
        %v3970 = vadd.f32 %v3877, %v3969
        %v3971 = vpop.f32.mrf.mxu0
        %v3972 = vpop.f32.mrf.mxu0
        %v3973 = vpop.f32.mrf.mxu0
        %3974 = vdwg.mxu0
        %v3975 = vadd.f32 %v1086, %v3962
        %v3976 = vadd.f32 %v1087, %v3965
        %v3977 = vadd.f32 %v1088, %v3970
        %v3978 = vld [vmem:[%s974] sm:$0x1]
        %v3979 = vld [vmem:[%s977] sm:$0x1]
        %3980 = vadd.xlane.f32.xlu0 %v3975
        %v3981 = vpop.xlane.xlu0 %3980
        %3982 = vadd.xlane.f32.xlu0 %v3976
        %v3983 = vpop.xlane.xlu0 %3982
        %3984 = vadd.xlane.f32.xlu0 %v3977
        %v3985 = vpop.xlane.xlu0 %3984
        %v3986 = vmul.f32 %v3981, %v1097
        %v3987 = vmul.f32 %v3983, %v1097
        %v3988 = vmul.f32 %v3985, %v1097
        %v3989 = vsub.f32 %v3975, %v3986
        %v3990 = vsub.f32 %v3976, %v3987
        %v3991 = vsub.f32 %v3977, %v3988
        %v3992 = vmul.f32 %v3989, %v3989
        %v3993 = vmul.f32 %v3990, %v3990
        %v3994 = vmul.f32 %v3991, %v3991
        %3995 = vadd.xlane.f32.xlu0 %v3992
        %v3996 = vpop.xlane.xlu0 %3995
        %3997 = vadd.xlane.f32.xlu0 %v3993
        %v3998 = vpop.xlane.xlu0 %3997
        %3999 = vadd.xlane.f32.xlu0 %v3994
        %v4000 = vpop.xlane.xlu0 %3999
        %v4001 = vmul.f32 %v3996, %v1097
        %v4002 = vmul.f32 %v3998, %v1097
        %v4003 = vmul.f32 %v4000, %v1097
        %v4004 = vadd.f32 %v4001, 1e-05
        %v4005 = vadd.f32 %v4002, 1e-05
        %v4006 = vadd.f32 %v4003, 1e-05
        %v4007 = vrsqrt.pop %v4004
        %v4008 = vrsqrt.pop %v4005
        %v4009 = vrsqrt.pop %v4006
        %v4010 = vmul.f32 %v3989, %v4007
        %v4011 = vmul.f32 %v3990, %v4008
        %v4012 = vmul.f32 %v3991, %v4009
        %v4014 = vlaneseq
        %v4015 = vshrl.u32 %v4014, 7
        %v4016 = vsub.s32 0, %v4015
        %v4017 = vrot.slane %v3978, %v4016
        %v4019 = vmul.f32 %v4010, %v4017
        %v4020 = vmul.f32 %v4011, %v4017
        %v4021 = vmul.f32 %v4012, %v4017
        %v4023 = vlaneseq
        %v4024 = vshrl.u32 %v4023, 7
        %v4025 = vsub.s32 0, %v4024
        %v4026 = vrot.slane %v3979, %v4025
        %v4028 = vadd.f32 %v4019, %v4026
        %v4029 = vadd.f32 %v4020, %v4026
        %v4030 = vadd.f32 %v4021, %v4026
        %v4031 = vpack.c.bf16 %v4029, %v4028
        %v4032 = vpack.c.bf16 %v4030, %v4030
        %v4033 = vld [vmem:[%s850] sm:$0xff]
        %v4034 = vld [vmem:[%s850 + $0x8] sm:$0xff]
        %v4035 = vld [vmem:[%s850 + $0x10] sm:$0xff]
        %v4036 = vld [vmem:[%s850 + $0x18] sm:$0xff]
        %v4037 = vld [vmem:[%s850 + $0x20] sm:$0xff]
        %v4038 = vld [vmem:[%s850 + $0x28] sm:$0xff]
        %v4039 = vld [vmem:[%s850 + $0x30] sm:$0xff]
        %v4040 = vld [vmem:[%s850 + $0x38] sm:$0xff]
        %v4041 = vld [vmem:[%s850 + $0x40] sm:$0xff]
        %v4042 = vld [vmem:[%s850 + $0x48] sm:$0xff]
        %v4043 = vld [vmem:[%s850 + $0x50] sm:$0xff]
        %v4044 = vld [vmem:[%s850 + $0x58] sm:$0xff]
        %v4045 = vld [vmem:[%s850 + $0x60] sm:$0xff]
        %v4046 = vld [vmem:[%s850 + $0x68] sm:$0xff]
        %v4047 = vld [vmem:[%s850 + $0x70] sm:$0xff]
        %v4048 = vld [vmem:[%s850 + $0x78] sm:$0xff]
        %v4049 = vld [vmem:[%s981] sm:$0x3]
        %v4051 = vlaneseq
        %v4052 = vshrl.u32 %v4051, 7
        %v4053 = vsub.s32 0, %v4052
        %v4054 = vrot.slane %v4049, %v4053
        %v4055 = vlaneseq
        %v4056 = vshrl.u32 %v4055, 7
        %v4057 = vsub.s32 1, %v4056
        %v4058 = vrot.slane %v4049, %v4057
        %v4077 = vunpack.c.l.b16 %v4033
        %v4078 = vunpack.c.h.b16 %v4033
        %v4079 = vunpack.c.l.b16 %v4034
        %v4080 = vunpack.c.h.b16 %v4034
        %v4081 = vunpack.c.l.b16 %v4035
        %v4082 = vunpack.c.h.b16 %v4035
        %v4083 = vunpack.c.l.b16 %v4036
        %v4084 = vunpack.c.h.b16 %v4036
        %v4085 = vunpack.c.l.b16 %v4037
        %v4086 = vunpack.c.h.b16 %v4037
        %v4087 = vunpack.c.l.b16 %v4038
        %v4088 = vunpack.c.h.b16 %v4038
        %v4089 = vunpack.c.l.b16 %v4039
        %v4090 = vunpack.c.h.b16 %v4039
        %v4091 = vunpack.c.l.b16 %v4040
        %v4092 = vunpack.c.h.b16 %v4040
        %v4093 = vunpack.c.l.b16 %v4041
        %v4094 = vunpack.c.h.b16 %v4041
        %v4095 = vunpack.c.l.b16 %v4042
        %v4096 = vunpack.c.h.b16 %v4042
        %v4097 = vunpack.c.l.b16 %v4043
        %v4098 = vunpack.c.h.b16 %v4043
        %v4099 = vunpack.c.l.b16 %v4044
        %v4100 = vunpack.c.h.b16 %v4044
        %v4101 = vunpack.c.l.b16 %v4045
        %v4102 = vunpack.c.h.b16 %v4045
        %v4103 = vunpack.c.l.b16 %v4046
        %v4104 = vunpack.c.h.b16 %v4046
        %v4105 = vunpack.c.l.b16 %v4047
        %v4106 = vunpack.c.h.b16 %v4047
        %v4107 = vunpack.c.l.b16 %v4048
        %v4108 = vunpack.c.h.b16 %v4048
        %v4109 = vpack.c.b16 %v4079, %v4077
        %v4110 = vpack.c.b16 %v4080, %v4078
        %v4111 = vpack.c.b16 %v4083, %v4081
        %v4112 = vpack.c.b16 %v4084, %v4082
        %v4113 = vpack.c.b16 %v4087, %v4085
        %v4114 = vpack.c.b16 %v4088, %v4086
        %v4115 = vpack.c.b16 %v4091, %v4089
        %v4116 = vpack.c.b16 %v4092, %v4090
        %v4117 = vpack.c.b16 %v4095, %v4093
        %v4118 = vpack.c.b16 %v4096, %v4094
        %v4119 = vpack.c.b16 %v4099, %v4097
        %v4120 = vpack.c.b16 %v4100, %v4098
        %v4121 = vpack.c.b16 %v4103, %v4101
        %v4122 = vpack.c.b16 %v4104, %v4102
        %v4123 = vpack.c.b16 %v4107, %v4105
        %v4124 = vpack.c.b16 %v4108, %v4106
        %4141 = vmatprep.subr.bf16.mxu0 %v4124
        %4142 = vmatpush1.bf16.msra.mxu0 %v4123
        %4143 = vmatprep.subr.bf16.mxu0 %v4122
        %4144 = vmatpush1.bf16.msra.mxu0 %v4121
        %4145 = vmatprep.subr.bf16.mxu0 %v4120
        %4146 = vmatpush1.bf16.msra.mxu0 %v4119
        %4147 = vmatprep.subr.bf16.mxu0 %v4118
        %4148 = vmatpush1.bf16.msra.mxu0 %v4117
        %4149 = vmatprep.subr.bf16.mxu0 %v4116
        %4150 = vmatpush1.bf16.msra.mxu0 %v4115
        %4151 = vmatprep.subr.bf16.mxu0 %v4114
        %4152 = vmatpush1.bf16.msra.mxu0 %v4113
        %4153 = vmatprep.subr.bf16.mxu0 %v4112
        %4154 = vmatpush1.bf16.msra.mxu0 %v4111
        %4155 = vmatprep.subr.bf16.mxu0 %v4110
        %4156 = vmatpush1.bf16.msra.mxu0 %v4109
        %4157 = vmatprep.subr.bf16.mxu0 0
        %4158 = vmatpush2.bf16.msra.mxu0 0
        %4159 = vmatprep.subr.bf16.mxu0 0
        %4160 = vmatpush2.bf16.msra.mxu0 0
        %4161 = vmatprep.subr.bf16.mxu0 0
        %4162 = vmatpush2.bf16.msra.mxu0 0
        %4163 = vmatprep.subr.bf16.mxu0 0
        %4164 = vmatpush2.bf16.msra.mxu0 0
        %4165 = vmatprep.subr.bf16.mxu0 0
        %4166 = vmatpush2.bf16.msra.mxu0 0
        %4167 = vmatprep.subr.bf16.mxu0 0
        %4168 = vmatpush2.bf16.msra.mxu0 0
        %4169 = vmatprep.subr.bf16.mxu0 0
        %4170 = vmatpush2.bf16.msra.mxu0 0
        %4171 = vmatprep.subr.bf16.mxu0 0
        %4172 = vmatpush2.bf16.msra.mxu0 0
        %4173 = vmatprep.mubr.bf16.mxu0 0
        %4174 = vmatmul.mubr.bf16.gmra.mxu0 %v4031
        %v4175 = vpop.f32.mrf.mxu0
        %v4176 = vadd.f32 %v4054, %v4175
        %v4177 = vpop.f32.mrf.mxu0
        %v4178 = vadd.f32 %v4058, %v4177
        %v4179 = vpop.f32.mrf.mxu0
        %v4180 = vadd.f32 %v4054, %v4179
        %v4181 = vpop.f32.mrf.mxu0
        %v4182 = vadd.f32 %v4058, %v4181
        %4183 = vmatprep.mubr.bf16.mxu0 0
        %4184 = vmatmul.mubr.bf16.gmra.mxu0 %v4032
        %v4185 = vpop.f32.mrf.mxu0
        %v4186 = vadd.f32 %v4054, %v4185
        %v4187 = vpop.f32.mrf.mxu0
        %v4188 = vadd.f32 %v4058, %v4187
        %v4189 = vpop.f32.mrf.mxu0
        %v4190 = vpop.f32.mrf.mxu0
        %4191 = vdwg.mxu0
        %v4192 = vmul.f32 %v4176, %v4176
        %v4193 = vmul.f32 %v4178, %v4178
        %v4194 = vmul.f32 %v4180, %v4180
        %v4195 = vmul.f32 %v4182, %v4182
        %v4196 = vmul.f32 %v4186, %v4186
        %v4197 = vmul.f32 %v4188, %v4188
        %v4198 = vmul.f32 %v4176, %v4192
        %v4199 = vmul.f32 %v4178, %v4193
        %v4200 = vmul.f32 %v4180, %v4194
        %v4201 = vmul.f32 %v4182, %v4195
        %v4202 = vmul.f32 %v4186, %v4196
        %v4203 = vmul.f32 %v4188, %v4197
        %v4204 = vmul.f32 %v4198, 0.044715
        %v4205 = vmul.f32 %v4199, 0.044715
        %v4206 = vmul.f32 %v4200, 0.044715
        %v4207 = vmul.f32 %v4201, 0.044715
        %v4208 = vmul.f32 %v4202, 0.044715
        %v4209 = vmul.f32 %v4203, 0.044715
        %v4210 = vadd.f32 %v4176, %v4204
        %v4211 = vadd.f32 %v4178, %v4205
        %v4212 = vadd.f32 %v4180, %v4206
        %v4213 = vadd.f32 %v4182, %v4207
        %v4214 = vadd.f32 %v4186, %v4208
        %v4215 = vadd.f32 %v4188, %v4209
        %v4216 = vmul.f32 %v4210, 0.7978846
        %v4217 = vmul.f32 %v4211, 0.7978846
        %v4218 = vmul.f32 %v4212, 0.7978846
        %v4219 = vmul.f32 %v4213, 0.7978846
        %v4220 = vmul.f32 %v4214, 0.7978846
        %v4221 = vmul.f32 %v4215, 0.7978846
        %v4222 = vtanh.pop %v4216
        %v4223 = vtanh.pop %v4217
        %v4224 = vtanh.pop %v4218
        %v4225 = vtanh.pop %v4219
        %v4226 = vtanh.pop %v4220
        %v4227 = vtanh.pop %v4221
        %v4228 = vadd.f32 %v4222, 1.0
        %v4229 = vadd.f32 %v4223, 1.0
        %v4230 = vadd.f32 %v4224, 1.0
        %v4231 = vadd.f32 %v4225, 1.0
        %v4232 = vadd.f32 %v4226, 1.0
        %v4233 = vadd.f32 %v4227, 1.0
        %v4234 = vmul.f32 %v4228, 0.5
        %v4235 = vmul.f32 %v4229, 0.5
        %v4236 = vmul.f32 %v4230, 0.5
        %v4237 = vmul.f32 %v4231, 0.5
        %v4238 = vmul.f32 %v4232, 0.5
        %v4239 = vmul.f32 %v4233, 0.5
        %v4240 = vmul.f32 %v4176, %v4234
        %v4241 = vmul.f32 %v4178, %v4235
        %v4242 = vmul.f32 %v4180, %v4236
        %v4243 = vmul.f32 %v4182, %v4237
        %v4244 = vmul.f32 %v4186, %v4238
        %v4245 = vmul.f32 %v4188, %v4239
        %v4246 = vpack.c.bf16 %v4242, %v4240
        %v4247 = vpack.c.bf16 %v4243, %v4241
        %v4248 = vpack.c.bf16 %v4244, %v4244
        %v4249 = vpack.c.bf16 %v4245, %v4245
        %v4250 = vld [vmem:[%s859] sm:$0xf]
        %v4251 = vld [vmem:[%s859 + $0x4] sm:$0xf]
        %v4252 = vld [vmem:[%s859 + $0x8] sm:$0xf]
        %v4253 = vld [vmem:[%s859 + $0xc] sm:$0xf]
        %v4254 = vld [vmem:[%s859 + $0x10] sm:$0xf]
        %v4255 = vld [vmem:[%s859 + $0x14] sm:$0xf]
        %v4256 = vld [vmem:[%s859 + $0x18] sm:$0xf]
        %v4257 = vld [vmem:[%s859 + $0x1c] sm:$0xf]
        %v4258 = vld [vmem:[%s859 + $0x20] sm:$0xf]
        %v4259 = vld [vmem:[%s859 + $0x24] sm:$0xf]
        %v4260 = vld [vmem:[%s859 + $0x28] sm:$0xf]
        %v4261 = vld [vmem:[%s859 + $0x2c] sm:$0xf]
        %v4262 = vld [vmem:[%s859 + $0x30] sm:$0xf]
        %v4263 = vld [vmem:[%s859 + $0x34] sm:$0xf]
        %v4264 = vld [vmem:[%s859 + $0x38] sm:$0xf]
        %v4265 = vld [vmem:[%s859 + $0x3c] sm:$0xf]
        %v4266 = vld [vmem:[%s859 + $0x40] sm:$0xf]
        %v4267 = vld [vmem:[%s859 + $0x44] sm:$0xf]
        %v4268 = vld [vmem:[%s859 + $0x48] sm:$0xf]
        %v4269 = vld [vmem:[%s859 + $0x4c] sm:$0xf]
        %v4270 = vld [vmem:[%s859 + $0x50] sm:$0xf]
        %v4271 = vld [vmem:[%s859 + $0x54] sm:$0xf]
        %v4272 = vld [vmem:[%s859 + $0x58] sm:$0xf]
        %v4273 = vld [vmem:[%s859 + $0x5c] sm:$0xf]
        %v4274 = vld [vmem:[%s859 + $0x60] sm:$0xf]
        %v4275 = vld [vmem:[%s859 + $0x64] sm:$0xf]
        %v4276 = vld [vmem:[%s859 + $0x68] sm:$0xf]
        %v4277 = vld [vmem:[%s859 + $0x6c] sm:$0xf]
        %v4278 = vld [vmem:[%s859 + $0x70] sm:$0xf]
        %v4279 = vld [vmem:[%s859 + $0x74] sm:$0xf]
        %v4280 = vld [vmem:[%s859 + $0x78] sm:$0xf]
        %v4281 = vld [vmem:[%s859 + $0x7c] sm:$0xf]
        %v4282 = vld [vmem:[%s984] sm:$0x1]
        %v4284 = vlaneseq
        %v4285 = vshrl.u32 %v4284, 7
        %v4286 = vsub.s32 0, %v4285
        %v4287 = vrot.slane %v4282, %v4286
        %v4321 = vunpack.c.l.b16 %v4250
        %v4322 = vunpack.c.l.b16 %v4251
        %v4323 = vunpack.c.l.b16 %v4252
        %v4324 = vunpack.c.l.b16 %v4253
        %v4325 = vunpack.c.l.b16 %v4254
        %v4326 = vunpack.c.l.b16 %v4255
        %v4327 = vunpack.c.l.b16 %v4256
        %v4328 = vunpack.c.l.b16 %v4257
        %v4329 = vunpack.c.l.b16 %v4258
        %v4330 = vunpack.c.l.b16 %v4259
        %v4331 = vunpack.c.l.b16 %v4260
        %v4332 = vunpack.c.l.b16 %v4261
        %v4333 = vunpack.c.l.b16 %v4262
        %v4334 = vunpack.c.l.b16 %v4263
        %v4335 = vunpack.c.l.b16 %v4264
        %v4336 = vunpack.c.l.b16 %v4265
        %v4337 = vunpack.c.l.b16 %v4266
        %v4338 = vunpack.c.l.b16 %v4267
        %v4339 = vunpack.c.l.b16 %v4268
        %v4340 = vunpack.c.l.b16 %v4269
        %v4341 = vunpack.c.l.b16 %v4270
        %v4342 = vunpack.c.l.b16 %v4271
        %v4343 = vunpack.c.l.b16 %v4272
        %v4344 = vunpack.c.l.b16 %v4273
        %v4345 = vunpack.c.l.b16 %v4274
        %v4346 = vunpack.c.l.b16 %v4275
        %v4347 = vunpack.c.l.b16 %v4276
        %v4348 = vunpack.c.l.b16 %v4277
        %v4349 = vunpack.c.l.b16 %v4278
        %v4350 = vunpack.c.l.b16 %v4279
        %v4351 = vunpack.c.l.b16 %v4280
        %v4352 = vunpack.c.l.b16 %v4281
        %v4353 = vpack.c.b16 %v4322, %v4321
        %v4354 = vpack.c.b16 %v4324, %v4323
        %v4355 = vpack.c.b16 %v4326, %v4325
        %v4356 = vpack.c.b16 %v4328, %v4327
        %v4357 = vpack.c.b16 %v4330, %v4329
        %v4358 = vpack.c.b16 %v4332, %v4331
        %v4359 = vpack.c.b16 %v4334, %v4333
        %v4360 = vpack.c.b16 %v4336, %v4335
        %v4361 = vpack.c.b16 %v4338, %v4337
        %v4362 = vpack.c.b16 %v4340, %v4339
        %v4363 = vpack.c.b16 %v4342, %v4341
        %v4364 = vpack.c.b16 %v4344, %v4343
        %v4365 = vpack.c.b16 %v4346, %v4345
        %v4366 = vpack.c.b16 %v4348, %v4347
        %v4367 = vpack.c.b16 %v4350, %v4349
        %v4368 = vpack.c.b16 %v4352, %v4351
        %4385 = vmatprep.subr.bf16.mxu0 0
        %4386 = vmatpush1.bf16.msra.mxu0 %v4360
        %4387 = vmatprep.subr.bf16.mxu0 0
        %4388 = vmatpush1.bf16.msra.mxu0 %v4359
        %4389 = vmatprep.subr.bf16.mxu0 0
        %4390 = vmatpush1.bf16.msra.mxu0 %v4358
        %4391 = vmatprep.subr.bf16.mxu0 0
        %4392 = vmatpush1.bf16.msra.mxu0 %v4357
        %4393 = vmatprep.subr.bf16.mxu0 0
        %4394 = vmatpush1.bf16.msra.mxu0 %v4356
        %4395 = vmatprep.subr.bf16.mxu0 0
        %4396 = vmatpush1.bf16.msra.mxu0 %v4355
        %4397 = vmatprep.subr.bf16.mxu0 0
        %4398 = vmatpush1.bf16.msra.mxu0 %v4354
        %4399 = vmatprep.subr.bf16.mxu0 0
        %4400 = vmatpush1.bf16.msra.mxu0 %v4353
        %4401 = vmatprep.subr.bf16.mxu0 0
        %4402 = vmatpush2.bf16.msra.mxu0 %v4368
        %4403 = vmatprep.subr.bf16.mxu0 0
        %4404 = vmatpush2.bf16.msra.mxu0 %v4367
        %4405 = vmatprep.subr.bf16.mxu0 0
        %4406 = vmatpush2.bf16.msra.mxu0 %v4366
        %4407 = vmatprep.subr.bf16.mxu0 0
        %4408 = vmatpush2.bf16.msra.mxu0 %v4365
        %4409 = vmatprep.subr.bf16.mxu0 0
        %4410 = vmatpush2.bf16.msra.mxu0 %v4364
        %4411 = vmatprep.subr.bf16.mxu0 0
        %4412 = vmatpush2.bf16.msra.mxu0 %v4363
        %4413 = vmatprep.subr.bf16.mxu0 0
        %4414 = vmatpush2.bf16.msra.mxu0 %v4362
        %4415 = vmatprep.subr.bf16.mxu0 0
        %4416 = vmatpush2.bf16.msra.mxu0 %v4361
        %4417 = vmatprep.mubr.bf16.mxu0 %v4247
        %4418 = vmatmul.mubr.bf16.gmra.mxu0 %v4246
        %v4419 = vpop.f32.mrf.mxu0
        %v4420 = vadd.f32 %v4287, %v4419
        %v4421 = vpop.f32.mrf.mxu0
        %v4422 = vpop.f32.mrf.mxu0
        %v4423 = vadd.f32 %v4287, %v4422
        %v4424 = vpop.f32.mrf.mxu0
        %4425 = vmatprep.mubr.bf16.mxu0 %v4249
        %4426 = vmatmul.mubr.bf16.gmra.mxu0 %v4248
        %v4427 = vpop.f32.mrf.mxu0
        %v4428 = vadd.f32 %v4287, %v4427
        %v4429 = vpop.f32.mrf.mxu0
        %v4430 = vpop.f32.mrf.mxu0
        %v4431 = vpop.f32.mrf.mxu0
        %4432 = vdwg.mxu0
        %v4433 = vadd.f32 %v3975, %v4420
        %v4434 = vadd.f32 %v3976, %v4423
        %v4435 = vadd.f32 %v3977, %v4428
        %4436 = vst [vmem:[#allocation2] sm:$0xff] %v4433
        %4437 = vst [vmem:[#allocation2 + $0x8] sm:$0xff] %v4434
        %4438 = vst [vmem:[#allocation2 + $0x10] sm:$0xff] %v4435
        %p4439 = scmp.eq.s32.totalorder %s52, 1
        // Predicated region
        $region141: #{tpu_custom_call.1} parent=95 // pred_check
          %p4440 = pneg %p4439
        $region142: #{tpu_custom_call.1} parent=95 // pred_check_branch
          %4442 = sbr.rel (%p4440) target = $region144
        $region143: #{tpu_custom_call.1} parent=95 // pred_region
          %v4443 = vld [vmem:[%s15] sm:$0x1]
          %v4444 = vld [vmem:[%s16] sm:$0x1]
          %vm4445 = vcmask 1040384
          %v4446 = vsel %vm4445, %v4433, 0.0
          %4447 = vadd.xlane.f32.xlu0 %v4446
          %v4448 = vpop.xlane.xlu0 %4447
          %v4449 = vmul.f32 %v4448, %v1097
          %v4450 = vsub.f32 %v4433, %v4449
          %v4451 = vmul.f32 %v4450, %v4450
          %v4452 = vsel %vm4445, %v4451, 0.0
          %4453 = vadd.xlane.f32.xlu0 %v4452
          %v4454 = vpop.xlane.xlu0 %4453
          %v4455 = vmul.f32 %v4454, %v1097
          %v4456 = vadd.f32 %v4455, 1e-05
          %v4457 = vrsqrt.pop %v4456
          %v4458 = vmul.f32 %v4450, %v4457
          %v4459 = vmul.f32 %v4458, %v4443
          %v4460 = vadd.f32 %v4459, %v4444
          %v4461 = vpack.c.bf16 %v4460, %v4460
          %v4462 = vld [vmem:[#allocation18] sm:$0xf]
          %v4463 = vld [vmem:[#allocation18 + $0x4] sm:$0xf]
          %v4464 = vld [vmem:[#allocation18 + $0x8] sm:$0xf]
          %v4465 = vld [vmem:[#allocation18 + $0xc] sm:$0xf]
          %v4466 = vld [vmem:[#allocation18 + $0x10] sm:$0xf]
          %v4467 = vld [vmem:[#allocation18 + $0x14] sm:$0xf]
          %v4468 = vld [vmem:[#allocation18 + $0x18] sm:$0xf]
          %v4469 = vld [vmem:[#allocation18 + $0x1c] sm:$0xf]
          %v4470 = vld [vmem:[#allocation18 + $0x20] sm:$0xf]
          %v4471 = vld [vmem:[#allocation18 + $0x24] sm:$0xf]
          %v4472 = vld [vmem:[#allocation18 + $0x28] sm:$0xf]
          %v4473 = vld [vmem:[#allocation18 + $0x2c] sm:$0xf]
          %v4474 = vld [vmem:[#allocation18 + $0x30] sm:$0xf]
          %v4475 = vld [vmem:[#allocation18 + $0x34] sm:$0xf]
          %v4476 = vld [vmem:[#allocation18 + $0x38] sm:$0xf]
          %v4477 = vld [vmem:[#allocation18 + $0x3c] sm:$0xf]
          %v4478 = vld [vmem:[%s18] sm:$0x1]
          %v4495 = vunpack.c.l.b16 %v4462
          %v4496 = vunpack.c.l.b16 %v4463
          %v4497 = vunpack.c.l.b16 %v4464
          %v4498 = vunpack.c.l.b16 %v4465
          %v4499 = vunpack.c.l.b16 %v4466
          %v4500 = vunpack.c.l.b16 %v4467
          %v4501 = vunpack.c.l.b16 %v4468
          %v4502 = vunpack.c.l.b16 %v4469
          %v4503 = vunpack.c.l.b16 %v4470
          %v4504 = vunpack.c.l.b16 %v4471
          %v4505 = vunpack.c.l.b16 %v4472
          %v4506 = vunpack.c.l.b16 %v4473
          %v4507 = vunpack.c.l.b16 %v4474
          %v4508 = vunpack.c.l.b16 %v4475
          %v4509 = vunpack.c.l.b16 %v4476
          %v4510 = vunpack.c.l.b16 %v4477
          %v4511 = vpack.c.b16 %v4496, %v4495
          %v4512 = vpack.c.b16 %v4498, %v4497
          %v4513 = vpack.c.b16 %v4500, %v4499
          %v4514 = vpack.c.b16 %v4502, %v4501
          %v4515 = vpack.c.b16 %v4504, %v4503
          %v4516 = vpack.c.b16 %v4506, %v4505
          %v4517 = vpack.c.b16 %v4508, %v4507
          %v4518 = vpack.c.b16 %v4510, %v4509
          %4527 = vmatprep.subr.bf16.mxu0 0
          %4528 = vmatpush1.bf16.msra.mxu0 %v4518
          %4529 = vmatprep.subr.bf16.mxu0 0
          %4530 = vmatpush1.bf16.msra.mxu0 %v4517
          %4531 = vmatprep.subr.bf16.mxu0 0
          %4532 = vmatpush1.bf16.msra.mxu0 %v4516
          %4533 = vmatprep.subr.bf16.mxu0 0
          %4534 = vmatpush1.bf16.msra.mxu0 %v4515
          %4535 = vmatprep.subr.bf16.mxu0 0
          %4536 = vmatpush1.bf16.msra.mxu0 %v4514
          %4537 = vmatprep.subr.bf16.mxu0 0
          %4538 = vmatpush1.bf16.msra.mxu0 %v4513
          %4539 = vmatprep.subr.bf16.mxu0 0
          %4540 = vmatpush1.bf16.msra.mxu0 %v4512
          %4541 = vmatprep.subr.bf16.mxu0 0
          %4542 = vmatpush1.bf16.msra.mxu0 %v4511
          %4543 = vmatprep.subr.bf16.mxu0 0
          %4544 = vmatpush2.bf16.msra.mxu0 0
          %4545 = vmatprep.subr.bf16.mxu0 0
          %4546 = vmatpush2.bf16.msra.mxu0 0
          %4547 = vmatprep.subr.bf16.mxu0 0
          %4548 = vmatpush2.bf16.msra.mxu0 0
          %4549 = vmatprep.subr.bf16.mxu0 0
          %4550 = vmatpush2.bf16.msra.mxu0 0
          %4551 = vmatprep.subr.bf16.mxu0 0
          %4552 = vmatpush2.bf16.msra.mxu0 0
          %4553 = vmatprep.subr.bf16.mxu0 0
          %4554 = vmatpush2.bf16.msra.mxu0 0
          %4555 = vmatprep.subr.bf16.mxu0 0
          %4556 = vmatpush2.bf16.msra.mxu0 0
          %4557 = vmatprep.subr.bf16.mxu0 0
          %4558 = vmatpush2.bf16.msra.mxu0 0
          %4559 = vmatprep.mubr.bf16.mxu0 0
          %4560 = vmatmul.mubr.bf16.gmra.mxu0 %v4461
          %v4561 = vpop.f32.mrf.mxu0
          %v4562 = vadd.f32 %v4478, %v4561
          %v4563 = vpop.f32.mrf.mxu0
          %v4564 = vpop.f32.mrf.mxu0
          %v4565 = vpop.f32.mrf.mxu0
          %4566 = vdwg.mxu0
          %4567 = vst [vmem:[%s964] sm:$0x1] %v4562
        $region144: #{tpu_custom_call.1} parent=95 // pred_fallthru
          _
        %s4568 = sand.u32 %s531, 1
        %s4569 = scalar_lea.sflag [#allocation5], %s4568
        %s4570 = sand.u32 %s531, 1
        %s4571 = scalar_lea.vmem [#allocation20], %s4570
        // Predicated region
        $region145: #{tpu_custom_call.1} parent=95 // pred_check
          %p4572 = pneg %p541
        $region146: #{tpu_custom_call.1} parent=95 // pred_check_branch
          %4574 = sbr.rel (%p4572) target = $region148
        $region147: #{tpu_custom_call.1} parent=95 // pred_region
          %s4576 = ssub.s32 16, 16
          %4577 = vsyncadd %s4569, %s4576
          %s4578 = smul.addr %s51, 16
          %s4579 = scalar_lea.hbm %s19, %s4578
          %s4581 = sshll.u32 %s4571, 4
          %s4582 = int_to_ptr.vmem [resolvable:$true] %s4581
          %4584 = dma.vmem_to_hbm [thread:$0]  %s4582, 16, %s4579, %s4569
        $region148: #{tpu_custom_call.1} parent=95 // pred_fallthru
          _
      $region96: #{tpu_custom_call.1} parent=5 // pred_fallthru
        _
      %p4585 = scmp.le.s32.totalorder 2, %s42
      // Predicated region
      $region149: #{tpu_custom_call.1} parent=5 // pred_check
        %p4586 = pneg %p4585
      $region150: #{tpu_custom_call.1} parent=5 // pred_check_branch
        %4588 = sbr.rel (%p4586) target = $region152
      $region151: #{tpu_custom_call.1} parent=5 // pred_region
        %s4589 = ssub.s32 %s42, 2
        // Predicated region
        $region153: #{tpu_custom_call.1} parent=151 // pred_check
          %p4590 = pneg %p547
        $region154: #{tpu_custom_call.1} parent=151 // pred_check_branch
          %4592 = sbr.rel (%p4590) target = $region156
        $region155: #{tpu_custom_call.1} parent=151 // pred_region
          %s4593 = sand.u32 %s532, 1
          %s4594 = scalar_lea.sflag [#allocation5], %s4593
          %s4595 = sand.u32 %s532, 1
          %s4596 = scalar_lea.vmem [#allocation20], %s4595
          %4597 = dma.done %s4594, 16
        $region156: #{tpu_custom_call.1} parent=151 // pred_fallthru
          _
      $region152: #{tpu_custom_call.1} parent=5 // pred_fallthru
        _
    $region6: #{tpu_custom_call.1} parent=1 // loop_footer
      %s46 = sadd.s32 1, %s42
    $region7: #{tpu_custom_call.1} parent=1 // loop_footer_branch
      %41 = sbr.rel target = $region3
    $region8: #{tpu_custom_call.1} parent=1 // loop_exit
      _
    %4598 = vsyncpa [#allocation4], 1
    %s4599 = scalar_lea.sflag [#allocation4], 1
    %4600 = vsyncpa %s4599, 1
    %4601 = vsyncpa [#allocation7], 1
    %4602 = vsyncpa [#allocation10], 1
    %s4603 = scalar_lea.sflag [#allocation10], 1
    %4604 = vsyncpa %s4603, 1
    %4605 = vsyncpa [#allocation13], 1
    %s4606 = scalar_lea.sflag [#allocation13], 1
    %4607 = vsyncpa %s4606, 1
    %4608 = vsyncpa [#allocation16], 1
    %s4609 = scalar_lea.sflag [#allocation16], 1
    %4610 = vsyncpa %s4609, 1
    %4611 = vsyncpa [#allocation19], 1
    %4612 = vsyncpa [#allocation5], 1
    %s4613 = scalar_lea.sflag [#allocation5], 1
    %4614 = vsyncpa %s4613, 1

</llo_original>
